<compile_context>
chip_gen: v7x
topology: tpu7x:2x2x1
jax: 0.10.0
libtpu: 0.0.40
codegen_flags: <defaults>
</compile_context>

<pallas_src>
import math
import jax
import jax.numpy as jnp
from jax.experimental import pallas as pl
from jax.experimental.pallas import tpu as pltpu

# ---------------- synthetic tiny-RoBERTa config ----------------
B = 2          # batch
S = 8          # sequence length
H = 32         # hidden size
NH = 4         # num attention heads
HD = H // NH   # head dim
I = 64         # intermediate (FFN) size
LAYERS = 2
VOCAB = 100
MAX_POS = 32
TYPE_VOCAB = 2
EMB_ROWS = VOCAB + MAX_POS + TYPE_VOCAB   # rows of the fused embedding table
PAD_IDX = 1
LN_EPS = 1e-5


def _ln(v, g, b, eps=LN_EPS):
    mu = jnp.mean(v, axis=-1, keepdims=True)
    var = jnp.mean(jnp.square(v - mu), axis=-1, keepdims=True)
    return (v - mu) * jax.lax.rsqrt(var + eps) * g + b


# ---------------- fused Pallas kernel: whole forward (all batch elems) in one call ----------------
def roberta_fused_kernel(
        ids_ref, mask_ref,
        emb_ref, embg_ref, embb_ref,
        wqkv_ref, bqkv_ref, wo_ref, bo_ref, g1_ref, b1_ref,
        wi_ref, bi_ref, wo2_ref, bo2_ref, g2_ref, b2_ref,
        wp_ref, bp_ref, out_ref):

    # ---- embeddings: ONE fused multi-hot matmul (word + position + token_type) ----
    # ids_ref holds pre-offset ids: [word_id, VOCAB+pos_id, VOCAB+MAX_POS+seg_id]
    ids = ids_ref[...]                                                   # (B, S, 3) int32
    iota = jax.lax.broadcasted_iota(jnp.int32, (B, S, EMB_ROWS), 2)
    oh = ((iota == ids[..., 0:1]) | (iota == ids[..., 1:2]) |
          (iota == ids[..., 2:3])).astype(jnp.float32)                   # (B, S, EMB_ROWS)
    emb = jnp.einsum('bsv,vh->bsh', oh, emb_ref[...],
                     preferred_element_type=jnp.float32)                 # (B, S, H)
    h = _ln(emb, embg_ref[...], embb_ref[...])                           # (B, S, H)

    # additive key mask, hoisted out of the layer loop
    neg = (1.0 - mask_ref[...]) * -1e9                                   # (B, 1, S), f32
    scale = 1.0 / math.sqrt(HD)

    for l in range(LAYERS):                                              # static unroll
        # ---- fused wide QKV projection: one matmul, M=B*S, K=H, N=3H ----
        qkv = jnp.einsum('bsh,he->bse', h, wqkv_ref[l],
                         preferred_element_type=jnp.float32) + bqkv_ref[l]   # (B, S, 3H)

        # ---- per-head attention via static lane slices (no activation reshapes) ----
        ctx_heads = []
        for n in range(NH):                                              # static, NH=4
            qn = qkv[..., n * HD:(n + 1) * HD] * scale                   # (B, S, HD)
            kn = qkv[..., H + n * HD:H + (n + 1) * HD]
            vn = qkv[..., 2 * H + n * HD:2 * H + (n + 1) * HD]
            sc = jnp.einsum('bsd,btd->bst', qn, kn,
                            preferred_element_type=jnp.float32) + neg    # (B, S, S)
            sc = sc - jnp.max(sc, axis=-1, keepdims=True)
            p = jnp.exp(sc)
            p = p * pl.reciprocal(jnp.sum(p, axis=-1, keepdims=True), approx=True)
            ctx_heads.append(jnp.einsum('bst,btd->bsd', p, vn,
                                        preferred_element_type=jnp.float32))
        ctx = jnp.concatenate(ctx_heads, axis=-1)                        # (B, S, H)

        # ---- attention output projection: single K=H matmul (head-sum folded in) ----
        attn = jnp.einsum('bsh,hk->bsk', ctx, wo_ref[l],
                          preferred_element_type=jnp.float32) + bo_ref[l]
        h = _ln(attn + h, g1_ref[l], b1_ref[l])

        # ---- feed forward ----
        ff = jnp.einsum('bsh,hi->bsi', h, wi_ref[l],
                        preferred_element_type=jnp.float32) + bi_ref[l]
        # TODO(synk): HF RoBERTa uses exact (erf) GELU; tanh approximation used here.
        ff = jax.nn.gelu(ff, approximate=True)
        ff = jnp.einsum('bsi,ih->bsh', ff, wo2_ref[l],
                        preferred_element_type=jnp.float32) + bo2_ref[l]
        h = _ln(ff + h, g2_ref[l], b2_ref[l])

    # ---- pooler on CLS token ----
    cls = h[:, 0:1, :]                                                   # (B, 1, H)
    pooled = jnp.tanh(jnp.einsum('bsh,hk->bsk', cls, wp_ref[...],
                                 preferred_element_type=jnp.float32) + bp_ref[...])
    out_ref[...] = pooled.astype(out_ref.dtype)


# ---------------- parameter init (deterministic, synthetic) ----------------
def init_params(key):
    def nrm(k, shape, scale=0.02):
        return (scale * jax.random.normal(k, shape)).astype(jnp.float32)

    keys = jax.random.split(key, 8 + LAYERS)
    params = {
        "word_emb": nrm(keys[0], (VOCAB, H)),
        "pos_emb": nrm(keys[1], (MAX_POS, H)),
        "type_emb": nrm(keys[2], (TYPE_VOCAB, H)),
        "emb_ln_g": jnp.ones((1, H), jnp.float32),
        "emb_ln_b": jnp.zeros((1, H), jnp.float32),
        "pooler_w": nrm(keys[3], (H, H)),
        "pooler_b": jnp.zeros((1, H), jnp.float32),
        "layers": [],
    }
    for li in range(LAYERS):
        ks = jax.random.split(keys[8 + li], 8)
        params["layers"].append({
            "wq": nrm(ks[0], (H, H)), "bq": jnp.zeros((1, H), jnp.float32),
            "wk": nrm(ks[1], (H, H)), "bk": jnp.zeros((1, H), jnp.float32),
            "wv": nrm(ks[2], (H, H)), "bv": jnp.zeros((1, H), jnp.float32),
            "wo": nrm(ks[3], (H, H)), "bo": jnp.zeros((1, H), jnp.float32),
            "ln1_g": jnp.ones((1, H), jnp.float32),
            "ln1_b": jnp.zeros((1, H), jnp.float32),
            "wi": nrm(ks[4], (H, I)), "bi": jnp.zeros((1, I), jnp.float32),
            "wo2": nrm(ks[5], (I, H)), "bo2": jnp.zeros((1, H), jnp.float32),
            "ln2_g": jnp.ones((1, H), jnp.float32),
            "ln2_b": jnp.zeros((1, H), jnp.float32),
        })
    params["stacked"] = stack_params_for_kernel(params)
    return params


def stack_params_for_kernel(params):
    """Re-layout weights for the fused kernel:
       * one concatenated (EMB_ROWS, H) embedding table (word | pos | type),
       * per-layer weights stacked along a leading layer axis,
       * Q/K/V concatenated into one wide (H, 3H) projection per layer."""
    layers = params["layers"]
    wqkv = jnp.stack([jnp.concatenate([l["wq"], l["wk"], l["wv"]], axis=1)
                      for l in layers])                                  # (L, H, 3H)
    bqkv = jnp.stack([jnp.concatenate([l["bq"], l["bk"], l["bv"]], axis=1)
                      for l in layers])                                  # (L, 1, 3H)
    return {
        "emb_table": jnp.concatenate(
            [params["word_emb"], params["pos_emb"], params["type_emb"]], axis=0),
        "wqkv": wqkv, "bqkv": bqkv,
        "wo": jnp.stack([l["wo"] for l in layers]),
        "bo": jnp.stack([l["bo"] for l in layers]),
        "ln1_g": jnp.stack([l["ln1_g"] for l in layers]),
        "ln1_b": jnp.stack([l["ln1_b"] for l in layers]),
        "wi": jnp.stack([l["wi"] for l in layers]),
        "bi": jnp.stack([l["bi"] for l in layers]),
        "wo2": jnp.stack([l["wo2"] for l in layers]),
        "bo2": jnp.stack([l["bo2"] for l in layers]),
        "ln2_g": jnp.stack([l["ln2_g"] for l in layers]),
        "ln2_b": jnp.stack([l["ln2_b"] for l in layers]),
    }


# ---------------- forward: RoBERTaEncoder.forward(txt, mask, segment) ----------------
def roberta_encoder_forward(params, txt, mask, segment):
    # HF RoBERTa position ids: cumsum over non-pad tokens, offset by padding_idx.
    is_real = (txt != PAD_IDX).astype(jnp.int32)
    pos_ids = jnp.cumsum(is_real, axis=1) * is_real + PAD_IDX

    # ids pre-offset into the fused (word | pos | type) embedding table.
    ids3 = jnp.stack(
        [txt.astype(jnp.int32),
         pos_ids.astype(jnp.int32) + VOCAB,
         segment.astype(jnp.int32) + VOCAB + MAX_POS], axis=-1)          # (B, S, 3)
    mask3 = mask.astype(jnp.float32)[:, None, :]                         # (B, 1, S)

    st = params["stacked"]
    weights = [
        st["emb_table"], params["emb_ln_g"], params["emb_ln_b"],
        st["wqkv"], st["bqkv"], st["wo"], st["bo"], st["ln1_g"], st["ln1_b"],
        st["wi"], st["bi"], st["wo2"], st["bo2"], st["ln2_g"], st["ln2_b"],
        params["pooler_w"], params["pooler_b"],
    ]
    inputs = [ids3, mask3] + weights

    # advisory cost estimate for the XLA scheduler around the fused custom call
    flops = int(
        2 * B * S * EMB_ROWS * H                                   # fused embedding gather
        + LAYERS * (2 * B * S * H * 3 * H                          # QKV
                    + 2 * B * NH * S * S * HD * 2                  # scores + ctx
                    + 2 * B * S * H * H                            # attn out proj
                    + 4 * B * S * H * I)                           # FFN up + down
        + 2 * B * H * H)                                           # pooler
    transcendentals = int(LAYERS * (B * NH * S * S + B * S * I) + B * H)
    bytes_accessed = int(sum(int(a.size) * a.dtype.itemsize for a in inputs)
                         + B * H * 4)

    # Single kernel invocation (no grid): whole batch + all weights VMEM-resident.
    pooled = pl.pallas_call(
        roberta_fused_kernel,
        out_shape=jax.ShapeDtypeStruct((B, 1, H), jnp.float32),
        in_specs=[pl.BlockSpec(memory_space=pltpu.MemorySpace.VMEM)] * len(inputs),
        out_specs=pl.BlockSpec(memory_space=pltpu.MemorySpace.VMEM),
        cost_estimate=pl.CostEstimate(flops=flops,
                                      transcendentals=transcendentals,
                                      bytes_accessed=bytes_accessed),
    )(*inputs)
    return pooled[:, 0, :]                                               # (B, H) pooler_output


# ---------------- pure-JAX reference (same math, original weight layout) ----------------
def roberta_reference(params, txt, mask, segment):
    is_real = (txt != PAD_IDX).astype(jnp.int32)
    pos_ids = jnp.cumsum(is_real, axis=1) * is_real + PAD_IDX
    emb = (params["word_emb"][txt] + params["pos_emb"][pos_ids]
           + params["type_emb"][segment])
    h = _ln(emb, params["emb_ln_g"], params["emb_ln_b"])
    neg = (1.0 - mask.astype(jnp.float32))[:, None, None, :] * -1e9
    for lyr in params["layers"]:
        q = h @ lyr["wq"] + lyr["bq"]
        k = h @ lyr["wk"] + lyr["bk"]
        v = h @ lyr["wv"] + lyr["bv"]
        split = lambda t: t.reshape(B, S, NH, HD).transpose(0, 2, 1, 3)
        qh, kh, vh = split(q), split(k), split(v)
        sc = jnp.einsum('bnsd,bntd->bnst', qh, kh) / math.sqrt(HD) + neg
        p = jax.nn.softmax(sc, axis=-1)
        ctx = jnp.einsum('bnst,bntd->bnsd', p, vh).transpose(0, 2, 1, 3).reshape(B, S, H)
        attn = ctx @ lyr["wo"] + lyr["bo"]
        h = _ln(attn + h, lyr["ln1_g"], lyr["ln1_b"])
        ff = jax.nn.gelu(h @ lyr["wi"] + lyr["bi"], approximate=True)
        ff = ff @ lyr["wo2"] + lyr["bo2"]
        h = _ln(ff + h, lyr["ln2_g"], lyr["ln2_b"])
    cls = h[:, 0, :]
    return jnp.tanh(cls @ params["pooler_w"] + params["pooler_b"])


if __name__ == "__main__":
    key = jax.random.PRNGKey(0)
    kp, kt, ks = jax.random.split(key, 3)

    params = init_params(kp)

    txt = jax.random.randint(kt, (B, S), 2, VOCAB, dtype=jnp.int32)   # token ids
    mask = jnp.ones((B, S), jnp.int32).at[1, S - 2:].set(0)           # pad last 2 of batch 1
    segment = jax.random.randint(ks, (B, S), 0, TYPE_VOCAB, dtype=jnp.int32)

    pooled = roberta_encoder_forward(params, txt, mask, segment)
    pooled = jax.block_until_ready(pooled)

    ref = roberta_reference(params, txt, mask, segment)

    assert pooled.shape == (B, H)
    assert bool(jnp.all(jnp.isfinite(pooled)))
    assert bool(jnp.allclose(pooled, ref, atol=2e-2, rtol=2e-2)), \
        "fused Pallas kernel disagrees with pure-JAX reference"
    print("KERNEL_OK")
</pallas_src>

<mosaic_0001>
module attributes {stable_mosaic.version = 11 : i64} {
  func.func @roberta_fused_kernel(%arg0: memref<2x8x3xi32, #tpu.memory_space<vmem>>, %arg1: memref<2x1x8xf32, #tpu.memory_space<vmem>>, %arg2: memref<134x32xf32, #tpu.memory_space<vmem>>, %arg3: memref<1x32xf32, #tpu.memory_space<vmem>>, %arg4: memref<1x32xf32, #tpu.memory_space<vmem>>, %arg5: memref<2x32x96xf32, #tpu.memory_space<vmem>>, %arg6: memref<2x1x96xf32, #tpu.memory_space<vmem>>, %arg7: memref<2x32x32xf32, #tpu.memory_space<vmem>>, %arg8: memref<2x1x32xf32, #tpu.memory_space<vmem>>, %arg9: memref<2x1x32xf32, #tpu.memory_space<vmem>>, %arg10: memref<2x1x32xf32, #tpu.memory_space<vmem>>, %arg11: memref<2x32x64xf32, #tpu.memory_space<vmem>>, %arg12: memref<2x1x64xf32, #tpu.memory_space<vmem>>, %arg13: memref<2x64x32xf32, #tpu.memory_space<vmem>>, %arg14: memref<2x1x32xf32, #tpu.memory_space<vmem>>, %arg15: memref<2x1x32xf32, #tpu.memory_space<vmem>>, %arg16: memref<2x1x32xf32, #tpu.memory_space<vmem>>, %arg17: memref<32x32xf32, #tpu.memory_space<vmem>>, %arg18: memref<1x32xf32, #tpu.memory_space<vmem>>, %arg19: memref<2x1x32xf32, #tpu.memory_space<vmem>>) attributes {dimension_semantics = [], scalar_prefetch = 0 : i64, scratch_operands = 0 : i64, tpu.core_type = #tpu.core_type<tc>} {
    %c0 = arith.constant 0 : index
    %c0_0 = arith.constant 0 : index
    %c0_1 = arith.constant 0 : index
    %0 = vector.load %arg0[%c0, %c0_0, %c0_1] : memref<2x8x3xi32, #tpu.memory_space<vmem>>, vector<2x8x3xi32>
    %1 = tpu.iota {dimensions = array<i32: 2>} : vector<2x8x134xi32>
    %2 = vector.extract_strided_slice %0 {offsets = [0, 0, 0], sizes = [2, 8, 1], strides = [1, 1, 1]} : vector<2x8x3xi32> to vector<2x8x1xi32>
    %3 = vector.broadcast %2 : vector<2x8x1xi32> to vector<2x8x134xi32>
    %4 = arith.cmpi eq, %1, %3 : vector<2x8x134xi32>
    %5 = vector.extract_strided_slice %0 {offsets = [0, 0, 1], sizes = [2, 8, 1], strides = [1, 1, 1]} : vector<2x8x3xi32> to vector<2x8x1xi32>
    %6 = vector.broadcast %5 : vector<2x8x1xi32> to vector<2x8x134xi32>
    %7 = arith.cmpi eq, %1, %6 : vector<2x8x134xi32>
    %8 = arith.ori %4, %7 : vector<2x8x134xi1>
    %9 = vector.extract_strided_slice %0 {offsets = [0, 0, 2], sizes = [2, 8, 1], strides = [1, 1, 1]} : vector<2x8x3xi32> to vector<2x8x1xi32>
    %10 = vector.broadcast %9 : vector<2x8x1xi32> to vector<2x8x134xi32>
    %11 = arith.cmpi eq, %1, %10 : vector<2x8x134xi32>
    %12 = arith.ori %8, %11 : vector<2x8x134xi1>
    %13 = arith.extui %12 : vector<2x8x134xi1> to vector<2x8x134xi32>
    %14 = arith.sitofp %13 : vector<2x8x134xi32> to vector<2x8x134xf32>
    %c0_2 = arith.constant 0 : index
    %c0_3 = arith.constant 0 : index
    %15 = vector.load %arg2[%c0_2, %c0_3] : memref<134x32xf32, #tpu.memory_space<vmem>>, vector<134x32xf32>
    "tpu.trace_start"() <{level = 10 : i32, message = "bsv,vh->bsh"}> : () -> ()
    %cst = arith.constant dense<0.000000e+00> : vector<2x8x32xf32>
    %16 = tpu.matmul %14, %15, %cst {dimension_numbers = #tpu.dot_dimension_numbers<[2], [0], [0, 1], [1], [0, 0, 0, 1, 1, 1], [], []>} : vector<2x8x134xf32>, vector<134x32xf32>, vector<2x8x32xf32> -> vector<2x8x32xf32>
    "tpu.trace_stop"() : () -> ()
    %c0_4 = arith.constant 0 : index
    %c0_5 = arith.constant 0 : index
    %17 = vector.load %arg3[%c0_4, %c0_5] : memref<1x32xf32, #tpu.memory_space<vmem>>, vector<1x32xf32>
    %c0_6 = arith.constant 0 : index
    %c0_7 = arith.constant 0 : index
    %18 = vector.load %arg4[%c0_6, %c0_7] : memref<1x32xf32, #tpu.memory_space<vmem>>, vector<1x32xf32>
    %cst_8 = arith.constant dense<0.000000e+00> : vector<2x8xf32>
    %19 = vector.multi_reduction <add>, %16, %cst_8 [2] : vector<2x8x32xf32> to vector<2x8xf32>
    %20 = vector.shape_cast %19 : vector<2x8xf32> to vector<2x8x1xf32>
    %cst_9 = arith.constant 3.200000e+01 : f32
    %21 = vector.broadcast %cst_9 : f32 to vector<2x8x1xf32>
    %22 = arith.divf %20, %21 : vector<2x8x1xf32>
    %23 = vector.broadcast %22 : vector<2x8x1xf32> to vector<2x8x32xf32>
    %24 = arith.subf %16, %23 : vector<2x8x32xf32>
    %25 = arith.mulf %24, %24 : vector<2x8x32xf32>
    %cst_10 = arith.constant dense<0.000000e+00> : vector<2x8xf32>
    %26 = vector.multi_reduction <add>, %25, %cst_10 [2] : vector<2x8x32xf32> to vector<2x8xf32>
    %27 = vector.shape_cast %26 : vector<2x8xf32> to vector<2x8x1xf32>
    %cst_11 = arith.constant 3.200000e+01 : f32
    %28 = vector.broadcast %cst_11 : f32 to vector<2x8x1xf32>
    %29 = arith.divf %27, %28 : vector<2x8x1xf32>
    %30 = vector.broadcast %22 : vector<2x8x1xf32> to vector<2x8x32xf32>
    %31 = arith.subf %16, %30 : vector<2x8x32xf32>
    %cst_12 = arith.constant 9.99999974E-6 : f32
    %32 = vector.broadcast %cst_12 : f32 to vector<2x8x1xf32>
    %33 = arith.addf %29, %32 : vector<2x8x1xf32>
    %34 = math.rsqrt %33 : vector<2x8x1xf32>
    %35 = vector.broadcast %34 : vector<2x8x1xf32> to vector<2x8x32xf32>
    %36 = arith.mulf %31, %35 : vector<2x8x32xf32>
    %37 = vector.shape_cast %17 : vector<1x32xf32> to vector<1x1x32xf32>
    %38 = vector.broadcast %37 : vector<1x1x32xf32> to vector<2x8x32xf32>
    %39 = arith.mulf %36, %38 : vector<2x8x32xf32>
    %40 = vector.shape_cast %18 : vector<1x32xf32> to vector<1x1x32xf32>
    %41 = vector.broadcast %40 : vector<1x1x32xf32> to vector<2x8x32xf32>
    %42 = arith.addf %39, %41 : vector<2x8x32xf32>
    %c0_13 = arith.constant 0 : index
    %c0_14 = arith.constant 0 : index
    %c0_15 = arith.constant 0 : index
    %43 = vector.load %arg1[%c0_13, %c0_14, %c0_15] : memref<2x1x8xf32, #tpu.memory_space<vmem>>, vector<2x1x8xf32>
    %cst_16 = arith.constant 1.000000e+00 : f32
    %44 = vector.broadcast %cst_16 : f32 to vector<2x1x8xf32>
    %45 = arith.subf %44, %43 : vector<2x1x8xf32>
    %cst_17 = arith.constant -1.000000e+09 : f32
    %46 = vector.broadcast %cst_17 : f32 to vector<2x1x8xf32>
    %47 = arith.mulf %45, %46 : vector<2x1x8xf32>
    %c0_18 = arith.constant 0 : index
    %c0_19 = arith.constant 0 : index
    %c0_20 = arith.constant 0 : index
    %48 = vector.load %arg5[%c0_18, %c0_19, %c0_20] : memref<2x32x96xf32, #tpu.memory_space<vmem>>, vector<1x32x96xf32>
    %49 = vector.shape_cast %48 : vector<1x32x96xf32> to vector<32x96xf32>
    "tpu.trace_start"() <{level = 10 : i32, message = "bsh,he->bse"}> : () -> ()
    %cst_21 = arith.constant dense<0.000000e+00> : vector<2x8x96xf32>
    %50 = tpu.matmul %42, %49, %cst_21 {dimension_numbers = #tpu.dot_dimension_numbers<[2], [0], [0, 1], [1], [0, 0, 0, 1, 1, 1], [], []>} : vector<2x8x32xf32>, vector<32x96xf32>, vector<2x8x96xf32> -> vector<2x8x96xf32>
    "tpu.trace_stop"() : () -> ()
    %c0_22 = arith.constant 0 : index
    %c0_23 = arith.constant 0 : index
    %c0_24 = arith.constant 0 : index
    %51 = vector.load %arg6[%c0_22, %c0_23, %c0_24] : memref<2x1x96xf32, #tpu.memory_space<vmem>>, vector<1x1x96xf32>
    %52 = vector.shape_cast %51 : vector<1x1x96xf32> to vector<1x96xf32>
    %53 = vector.shape_cast %52 : vector<1x96xf32> to vector<1x1x96xf32>
    %54 = vector.broadcast %53 : vector<1x1x96xf32> to vector<2x8x96xf32>
    %55 = arith.addf %50, %54 : vector<2x8x96xf32>
    %56 = vector.extract_strided_slice %55 {offsets = [0, 0, 0], sizes = [2, 8, 8], strides = [1, 1, 1]} : vector<2x8x96xf32> to vector<2x8x8xf32>
    %cst_25 = arith.constant 0.353553385 : f32
    %57 = vector.broadcast %cst_25 : f32 to vector<2x8x8xf32>
    %58 = arith.mulf %56, %57 : vector<2x8x8xf32>
    %59 = vector.extract_strided_slice %55 {offsets = [0, 0, 32], sizes = [2, 8, 8], strides = [1, 1, 1]} : vector<2x8x96xf32> to vector<2x8x8xf32>
    %60 = vector.extract_strided_slice %55 {offsets = [0, 0, 64], sizes = [2, 8, 8], strides = [1, 1, 1]} : vector<2x8x96xf32> to vector<2x8x8xf32>
    "tpu.trace_start"() <{level = 10 : i32, message = "bsd,btd->bst"}> : () -> ()
    %cst_26 = arith.constant dense<0.000000e+00> : vector<2x8x8xf32>
    %61 = tpu.matmul %58, %59, %cst_26 {dimension_numbers = #tpu.dot_dimension_numbers<[2], [2], [1], [1], [0, 0, 0, 1, 1, 1], [0], [0]>} : vector<2x8x8xf32>, vector<2x8x8xf32>, vector<2x8x8xf32> -> vector<2x8x8xf32>
    "tpu.trace_stop"() : () -> ()
    %62 = vector.broadcast %47 : vector<2x1x8xf32> to vector<2x8x8xf32>
    %63 = arith.addf %61, %62 : vector<2x8x8xf32>
    %cst_27 = arith.constant dense<0xFF800000> : vector<2x8xf32>
    %64 = vector.multi_reduction <maximumf>, %63, %cst_27 [2] : vector<2x8x8xf32> to vector<2x8xf32>
    %65 = vector.shape_cast %64 : vector<2x8xf32> to vector<2x8x1xf32>
    %66 = vector.broadcast %65 : vector<2x8x1xf32> to vector<2x8x8xf32>
    %67 = arith.subf %63, %66 : vector<2x8x8xf32>
    %68 = math.exp %67 : vector<2x8x8xf32>
    %cst_28 = arith.constant dense<0.000000e+00> : vector<2x8xf32>
    %69 = vector.multi_reduction <add>, %68, %cst_28 [2] : vector<2x8x8xf32> to vector<2x8xf32>
    %70 = vector.shape_cast %69 : vector<2x8xf32> to vector<2x8x1xf32>
    %71 = tpu.reciprocal %70 {approx = true} : vector<2x8x1xf32> -> vector<2x8x1xf32>
    %72 = vector.broadcast %71 : vector<2x8x1xf32> to vector<2x8x8xf32>
    %73 = arith.mulf %68, %72 : vector<2x8x8xf32>
    "tpu.trace_start"() <{level = 10 : i32, message = "bst,btd->bsd"}> : () -> ()
    %cst_29 = arith.constant dense<0.000000e+00> : vector<2x8x8xf32>
    %74 = tpu.matmul %73, %60, %cst_29 {dimension_numbers = #tpu.dot_dimension_numbers<[2], [1], [1], [2], [0, 0, 0, 1, 1, 2], [0], [0]>} : vector<2x8x8xf32>, vector<2x8x8xf32>, vector<2x8x8xf32> -> vector<2x8x8xf32>
    "tpu.trace_stop"() : () -> ()
    %75 = vector.extract_strided_slice %55 {offsets = [0, 0, 8], sizes = [2, 8, 8], strides = [1, 1, 1]} : vector<2x8x96xf32> to vector<2x8x8xf32>
    %cst_30 = arith.constant 0.353553385 : f32
    %76 = vector.broadcast %cst_30 : f32 to vector<2x8x8xf32>
    %77 = arith.mulf %75, %76 : vector<2x8x8xf32>
    %78 = vector.extract_strided_slice %55 {offsets = [0, 0, 40], sizes = [2, 8, 8], strides = [1, 1, 1]} : vector<2x8x96xf32> to vector<2x8x8xf32>
    %79 = vector.extract_strided_slice %55 {offsets = [0, 0, 72], sizes = [2, 8, 8], strides = [1, 1, 1]} : vector<2x8x96xf32> to vector<2x8x8xf32>
    "tpu.trace_start"() <{level = 10 : i32, message = "bsd,btd->bst"}> : () -> ()
    %cst_31 = arith.constant dense<0.000000e+00> : vector<2x8x8xf32>
    %80 = tpu.matmul %77, %78, %cst_31 {dimension_numbers = #tpu.dot_dimension_numbers<[2], [2], [1], [1], [0, 0, 0, 1, 1, 1], [0], [0]>} : vector<2x8x8xf32>, vector<2x8x8xf32>, vector<2x8x8xf32> -> vector<2x8x8xf32>
    "tpu.trace_stop"() : () -> ()
    %81 = vector.broadcast %47 : vector<2x1x8xf32> to vector<2x8x8xf32>
    %82 = arith.addf %80, %81 : vector<2x8x8xf32>
    %cst_32 = arith.constant dense<0xFF800000> : vector<2x8xf32>
    %83 = vector.multi_reduction <maximumf>, %82, %cst_32 [2] : vector<2x8x8xf32> to vector<2x8xf32>
    %84 = vector.shape_cast %83 : vector<2x8xf32> to vector<2x8x1xf32>
    %85 = vector.broadcast %84 : vector<2x8x1xf32> to vector<2x8x8xf32>
    %86 = arith.subf %82, %85 : vector<2x8x8xf32>
    %87 = math.exp %86 : vector<2x8x8xf32>
    %cst_33 = arith.constant dense<0.000000e+00> : vector<2x8xf32>
    %88 = vector.multi_reduction <add>, %87, %cst_33 [2] : vector<2x8x8xf32> to vector<2x8xf32>
    %89 = vector.shape_cast %88 : vector<2x8xf32> to vector<2x8x1xf32>
    %90 = tpu.reciprocal %89 {approx = true} : vector<2x8x1xf32> -> vector<2x8x1xf32>
    %91 = vector.broadcast %90 : vector<2x8x1xf32> to vector<2x8x8xf32>
    %92 = arith.mulf %87, %91 : vector<2x8x8xf32>
    "tpu.trace_start"() <{level = 10 : i32, message = "bst,btd->bsd"}> : () -> ()
    %cst_34 = arith.constant dense<0.000000e+00> : vector<2x8x8xf32>
    %93 = tpu.matmul %92, %79, %cst_34 {dimension_numbers = #tpu.dot_dimension_numbers<[2], [1], [1], [2], [0, 0, 0, 1, 1, 2], [0], [0]>} : vector<2x8x8xf32>, vector<2x8x8xf32>, vector<2x8x8xf32> -> vector<2x8x8xf32>
    "tpu.trace_stop"() : () -> ()
    %94 = vector.extract_strided_slice %55 {offsets = [0, 0, 16], sizes = [2, 8, 8], strides = [1, 1, 1]} : vector<2x8x96xf32> to vector<2x8x8xf32>
    %cst_35 = arith.constant 0.353553385 : f32
    %95 = vector.broadcast %cst_35 : f32 to vector<2x8x8xf32>
    %96 = arith.mulf %94, %95 : vector<2x8x8xf32>
    %97 = vector.extract_strided_slice %55 {offsets = [0, 0, 48], sizes = [2, 8, 8], strides = [1, 1, 1]} : vector<2x8x96xf32> to vector<2x8x8xf32>
    %98 = vector.extract_strided_slice %55 {offsets = [0, 0, 80], sizes = [2, 8, 8], strides = [1, 1, 1]} : vector<2x8x96xf32> to vector<2x8x8xf32>
    "tpu.trace_start"() <{level = 10 : i32, message = "bsd,btd->bst"}> : () -> ()
    %cst_36 = arith.constant dense<0.000000e+00> : vector<2x8x8xf32>
    %99 = tpu.matmul %96, %97, %cst_36 {dimension_numbers = #tpu.dot_dimension_numbers<[2], [2], [1], [1], [0, 0, 0, 1, 1, 1], [0], [0]>} : vector<2x8x8xf32>, vector<2x8x8xf32>, vector<2x8x8xf32> -> vector<2x8x8xf32>
    "tpu.trace_stop"() : () -> ()
    %100 = vector.broadcast %47 : vector<2x1x8xf32> to vector<2x8x8xf32>
    %101 = arith.addf %99, %100 : vector<2x8x8xf32>
    %cst_37 = arith.constant dense<0xFF800000> : vector<2x8xf32>
    %102 = vector.multi_reduction <maximumf>, %101, %cst_37 [2] : vector<2x8x8xf32> to vector<2x8xf32>
    %103 = vector.shape_cast %102 : vector<2x8xf32> to vector<2x8x1xf32>
    %104 = vector.broadcast %103 : vector<2x8x1xf32> to vector<2x8x8xf32>
    %105 = arith.subf %101, %104 : vector<2x8x8xf32>
    %106 = math.exp %105 : vector<2x8x8xf32>
    %cst_38 = arith.constant dense<0.000000e+00> : vector<2x8xf32>
    %107 = vector.multi_reduction <add>, %106, %cst_38 [2] : vector<2x8x8xf32> to vector<2x8xf32>
    %108 = vector.shape_cast %107 : vector<2x8xf32> to vector<2x8x1xf32>
    %109 = tpu.reciprocal %108 {approx = true} : vector<2x8x1xf32> -> vector<2x8x1xf32>
    %110 = vector.broadcast %109 : vector<2x8x1xf32> to vector<2x8x8xf32>
    %111 = arith.mulf %106, %110 : vector<2x8x8xf32>
    "tpu.trace_start"() <{level = 10 : i32, message = "bst,btd->bsd"}> : () -> ()
    %cst_39 = arith.constant dense<0.000000e+00> : vector<2x8x8xf32>
    %112 = tpu.matmul %111, %98, %cst_39 {dimension_numbers = #tpu.dot_dimension_numbers<[2], [1], [1], [2], [0, 0, 0, 1, 1, 2], [0], [0]>} : vector<2x8x8xf32>, vector<2x8x8xf32>, vector<2x8x8xf32> -> vector<2x8x8xf32>
    "tpu.trace_stop"() : () -> ()
    %113 = vector.extract_strided_slice %55 {offsets = [0, 0, 24], sizes = [2, 8, 8], strides = [1, 1, 1]} : vector<2x8x96xf32> to vector<2x8x8xf32>
    %cst_40 = arith.constant 0.353553385 : f32
    %114 = vector.broadcast %cst_40 : f32 to vector<2x8x8xf32>
    %115 = arith.mulf %113, %114 : vector<2x8x8xf32>
    %116 = vector.extract_strided_slice %55 {offsets = [0, 0, 56], sizes = [2, 8, 8], strides = [1, 1, 1]} : vector<2x8x96xf32> to vector<2x8x8xf32>
    %117 = vector.extract_strided_slice %55 {offsets = [0, 0, 88], sizes = [2, 8, 8], strides = [1, 1, 1]} : vector<2x8x96xf32> to vector<2x8x8xf32>
    "tpu.trace_start"() <{level = 10 : i32, message = "bsd,btd->bst"}> : () -> ()
    %cst_41 = arith.constant dense<0.000000e+00> : vector<2x8x8xf32>
    %118 = tpu.matmul %115, %116, %cst_41 {dimension_numbers = #tpu.dot_dimension_numbers<[2], [2], [1], [1], [0, 0, 0, 1, 1, 1], [0], [0]>} : vector<2x8x8xf32>, vector<2x8x8xf32>, vector<2x8x8xf32> -> vector<2x8x8xf32>
    "tpu.trace_stop"() : () -> ()
    %119 = vector.broadcast %47 : vector<2x1x8xf32> to vector<2x8x8xf32>
    %120 = arith.addf %118, %119 : vector<2x8x8xf32>
    %cst_42 = arith.constant dense<0xFF800000> : vector<2x8xf32>
    %121 = vector.multi_reduction <maximumf>, %120, %cst_42 [2] : vector<2x8x8xf32> to vector<2x8xf32>
    %122 = vector.shape_cast %121 : vector<2x8xf32> to vector<2x8x1xf32>
    %123 = vector.broadcast %122 : vector<2x8x1xf32> to vector<2x8x8xf32>
    %124 = arith.subf %120, %123 : vector<2x8x8xf32>
    %125 = math.exp %124 : vector<2x8x8xf32>
    %cst_43 = arith.constant dense<0.000000e+00> : vector<2x8xf32>
    %126 = vector.multi_reduction <add>, %125, %cst_43 [2] : vector<2x8x8xf32> to vector<2x8xf32>
    %127 = vector.shape_cast %126 : vector<2x8xf32> to vector<2x8x1xf32>
    %128 = tpu.reciprocal %127 {approx = true} : vector<2x8x1xf32> -> vector<2x8x1xf32>
    %129 = vector.broadcast %128 : vector<2x8x1xf32> to vector<2x8x8xf32>
    %130 = arith.mulf %125, %129 : vector<2x8x8xf32>
    "tpu.trace_start"() <{level = 10 : i32, message = "bst,btd->bsd"}> : () -> ()
    %cst_44 = arith.constant dense<0.000000e+00> : vector<2x8x8xf32>
    %131 = tpu.matmul %130, %117, %cst_44 {dimension_numbers = #tpu.dot_dimension_numbers<[2], [1], [1], [2], [0, 0, 0, 1, 1, 2], [0], [0]>} : vector<2x8x8xf32>, vector<2x8x8xf32>, vector<2x8x8xf32> -> vector<2x8x8xf32>
    "tpu.trace_stop"() : () -> ()
    %132 = tpu.concatenate %74, %93, %112, %131 in 2 : vector<2x8x8xf32>, vector<2x8x8xf32>, vector<2x8x8xf32>, vector<2x8x8xf32> -> vector<2x8x32xf32>
    %c0_45 = arith.constant 0 : index
    %c0_46 = arith.constant 0 : index
    %c0_47 = arith.constant 0 : index
    %133 = vector.load %arg7[%c0_45, %c0_46, %c0_47] : memref<2x32x32xf32, #tpu.memory_space<vmem>>, vector<1x32x32xf32>
    %134 = vector.shape_cast %133 : vector<1x32x32xf32> to vector<32x32xf32>
    "tpu.trace_start"() <{level = 10 : i32, message = "bsh,hk->bsk"}> : () -> ()
    %cst_48 = arith.constant dense<0.000000e+00> : vector<2x8x32xf32>
    %135 = tpu.matmul %132, %134, %cst_48 {dimension_numbers = #tpu.dot_dimension_numbers<[2], [0], [0, 1], [1], [0, 0, 0, 1, 1, 1], [], []>} : vector<2x8x32xf32>, vector<32x32xf32>, vector<2x8x32xf32> -> vector<2x8x32xf32>
    "tpu.trace_stop"() : () -> ()
    %c0_49 = arith.constant 0 : index
    %c0_50 = arith.constant 0 : index
    %c0_51 = arith.constant 0 : index
    %136 = vector.load %arg8[%c0_49, %c0_50, %c0_51] : memref<2x1x32xf32, #tpu.memory_space<vmem>>, vector<1x1x32xf32>
    %137 = vector.shape_cast %136 : vector<1x1x32xf32> to vector<1x32xf32>
    %138 = vector.shape_cast %137 : vector<1x32xf32> to vector<1x1x32xf32>
    %139 = vector.broadcast %138 : vector<1x1x32xf32> to vector<2x8x32xf32>
    %140 = arith.addf %135, %139 : vector<2x8x32xf32>
    %141 = arith.addf %140, %42 : vector<2x8x32xf32>
    %c0_52 = arith.constant 0 : index
    %c0_53 = arith.constant 0 : index
    %c0_54 = arith.constant 0 : index
    %142 = vector.load %arg9[%c0_52, %c0_53, %c0_54] : memref<2x1x32xf32, #tpu.memory_space<vmem>>, vector<1x1x32xf32>
    %143 = vector.shape_cast %142 : vector<1x1x32xf32> to vector<1x32xf32>
    %c0_55 = arith.constant 0 : index
    %c0_56 = arith.constant 0 : index
    %c0_57 = arith.constant 0 : index
    %144 = vector.load %arg10[%c0_55, %c0_56, %c0_57] : memref<2x1x32xf32, #tpu.memory_space<vmem>>, vector<1x1x32xf32>
    %145 = vector.shape_cast %144 : vector<1x1x32xf32> to vector<1x32xf32>
    %cst_58 = arith.constant dense<0.000000e+00> : vector<2x8xf32>
    %146 = vector.multi_reduction <add>, %141, %cst_58 [2] : vector<2x8x32xf32> to vector<2x8xf32>
    %147 = vector.shape_cast %146 : vector<2x8xf32> to vector<2x8x1xf32>
    %cst_59 = arith.constant 3.200000e+01 : f32
    %148 = vector.broadcast %cst_59 : f32 to vector<2x8x1xf32>
    %149 = arith.divf %147, %148 : vector<2x8x1xf32>
    %150 = vector.broadcast %149 : vector<2x8x1xf32> to vector<2x8x32xf32>
    %151 = arith.subf %141, %150 : vector<2x8x32xf32>
    %152 = arith.mulf %151, %151 : vector<2x8x32xf32>
    %cst_60 = arith.constant dense<0.000000e+00> : vector<2x8xf32>
    %153 = vector.multi_reduction <add>, %152, %cst_60 [2] : vector<2x8x32xf32> to vector<2x8xf32>
    %154 = vector.shape_cast %153 : vector<2x8xf32> to vector<2x8x1xf32>
    %cst_61 = arith.constant 3.200000e+01 : f32
    %155 = vector.broadcast %cst_61 : f32 to vector<2x8x1xf32>
    %156 = arith.divf %154, %155 : vector<2x8x1xf32>
    %157 = vector.broadcast %149 : vector<2x8x1xf32> to vector<2x8x32xf32>
    %158 = arith.subf %141, %157 : vector<2x8x32xf32>
    %cst_62 = arith.constant 9.99999974E-6 : f32
    %159 = vector.broadcast %cst_62 : f32 to vector<2x8x1xf32>
    %160 = arith.addf %156, %159 : vector<2x8x1xf32>
    %161 = math.rsqrt %160 : vector<2x8x1xf32>
    %162 = vector.broadcast %161 : vector<2x8x1xf32> to vector<2x8x32xf32>
    %163 = arith.mulf %158, %162 : vector<2x8x32xf32>
    %164 = vector.shape_cast %143 : vector<1x32xf32> to vector<1x1x32xf32>
    %165 = vector.broadcast %164 : vector<1x1x32xf32> to vector<2x8x32xf32>
    %166 = arith.mulf %163, %165 : vector<2x8x32xf32>
    %167 = vector.shape_cast %145 : vector<1x32xf32> to vector<1x1x32xf32>
    %168 = vector.broadcast %167 : vector<1x1x32xf32> to vector<2x8x32xf32>
    %169 = arith.addf %166, %168 : vector<2x8x32xf32>
    %c0_63 = arith.constant 0 : index
    %c0_64 = arith.constant 0 : index
    %c0_65 = arith.constant 0 : index
    %170 = vector.load %arg11[%c0_63, %c0_64, %c0_65] : memref<2x32x64xf32, #tpu.memory_space<vmem>>, vector<1x32x64xf32>
    %171 = vector.shape_cast %170 : vector<1x32x64xf32> to vector<32x64xf32>
    "tpu.trace_start"() <{level = 10 : i32, message = "bsh,hi->bsi"}> : () -> ()
    %cst_66 = arith.constant dense<0.000000e+00> : vector<2x8x64xf32>
    %172 = tpu.matmul %169, %171, %cst_66 {dimension_numbers = #tpu.dot_dimension_numbers<[2], [0], [0, 1], [1], [0, 0, 0, 1, 1, 1], [], []>} : vector<2x8x32xf32>, vector<32x64xf32>, vector<2x8x64xf32> -> vector<2x8x64xf32>
    "tpu.trace_stop"() : () -> ()
    %c0_67 = arith.constant 0 : index
    %c0_68 = arith.constant 0 : index
    %c0_69 = arith.constant 0 : index
    %173 = vector.load %arg12[%c0_67, %c0_68, %c0_69] : memref<2x1x64xf32, #tpu.memory_space<vmem>>, vector<1x1x64xf32>
    %174 = vector.shape_cast %173 : vector<1x1x64xf32> to vector<1x64xf32>
    %175 = vector.shape_cast %174 : vector<1x64xf32> to vector<1x1x64xf32>
    %176 = vector.broadcast %175 : vector<1x1x64xf32> to vector<2x8x64xf32>
    %177 = arith.addf %172, %176 : vector<2x8x64xf32>
    %178 = arith.mulf %177, %177 : vector<2x8x64xf32>
    %179 = arith.mulf %177, %178 : vector<2x8x64xf32>
    %cst_70 = arith.constant 4.471500e-02 : f32
    %180 = vector.broadcast %cst_70 : f32 to vector<2x8x64xf32>
    %181 = arith.mulf %180, %179 : vector<2x8x64xf32>
    %182 = arith.addf %177, %181 : vector<2x8x64xf32>
    %cst_71 = arith.constant 0.797884583 : f32
    %183 = vector.broadcast %cst_71 : f32 to vector<2x8x64xf32>
    %184 = arith.mulf %183, %182 : vector<2x8x64xf32>
    %185 = math.tanh %184 : vector<2x8x64xf32>
    %cst_72 = arith.constant 1.000000e+00 : f32
    %186 = vector.broadcast %cst_72 : f32 to vector<2x8x64xf32>
    %187 = arith.addf %186, %185 : vector<2x8x64xf32>
    %cst_73 = arith.constant 5.000000e-01 : f32
    %188 = vector.broadcast %cst_73 : f32 to vector<2x8x64xf32>
    %189 = arith.mulf %188, %187 : vector<2x8x64xf32>
    %190 = arith.mulf %177, %189 : vector<2x8x64xf32>
    %c0_74 = arith.constant 0 : index
    %c0_75 = arith.constant 0 : index
    %c0_76 = arith.constant 0 : index
    %191 = vector.load %arg13[%c0_74, %c0_75, %c0_76] : memref<2x64x32xf32, #tpu.memory_space<vmem>>, vector<1x64x32xf32>
    %192 = vector.shape_cast %191 : vector<1x64x32xf32> to vector<64x32xf32>
    "tpu.trace_start"() <{level = 10 : i32, message = "bsi,ih->bsh"}> : () -> ()
    %cst_77 = arith.constant dense<0.000000e+00> : vector<2x8x32xf32>
    %193 = tpu.matmul %190, %192, %cst_77 {dimension_numbers = #tpu.dot_dimension_numbers<[2], [0], [0, 1], [1], [0, 0, 0, 1, 1, 1], [], []>} : vector<2x8x64xf32>, vector<64x32xf32>, vector<2x8x32xf32> -> vector<2x8x32xf32>
    "tpu.trace_stop"() : () -> ()
    %c0_78 = arith.constant 0 : index
    %c0_79 = arith.constant 0 : index
    %c0_80 = arith.constant 0 : index
    %194 = vector.load %arg14[%c0_78, %c0_79, %c0_80] : memref<2x1x32xf32, #tpu.memory_space<vmem>>, vector<1x1x32xf32>
    %195 = vector.shape_cast %194 : vector<1x1x32xf32> to vector<1x32xf32>
    %196 = vector.shape_cast %195 : vector<1x32xf32> to vector<1x1x32xf32>
    %197 = vector.broadcast %196 : vector<1x1x32xf32> to vector<2x8x32xf32>
    %198 = arith.addf %193, %197 : vector<2x8x32xf32>
    %199 = arith.addf %198, %169 : vector<2x8x32xf32>
    %c0_81 = arith.constant 0 : index
    %c0_82 = arith.constant 0 : index
    %c0_83 = arith.constant 0 : index
    %200 = vector.load %arg15[%c0_81, %c0_82, %c0_83] : memref<2x1x32xf32, #tpu.memory_space<vmem>>, vector<1x1x32xf32>
    %201 = vector.shape_cast %200 : vector<1x1x32xf32> to vector<1x32xf32>
    %c0_84 = arith.constant 0 : index
    %c0_85 = arith.constant 0 : index
    %c0_86 = arith.constant 0 : index
    %202 = vector.load %arg16[%c0_84, %c0_85, %c0_86] : memref<2x1x32xf32, #tpu.memory_space<vmem>>, vector<1x1x32xf32>
    %203 = vector.shape_cast %202 : vector<1x1x32xf32> to vector<1x32xf32>
    %cst_87 = arith.constant dense<0.000000e+00> : vector<2x8xf32>
    %204 = vector.multi_reduction <add>, %199, %cst_87 [2] : vector<2x8x32xf32> to vector<2x8xf32>
    %205 = vector.shape_cast %204 : vector<2x8xf32> to vector<2x8x1xf32>
    %cst_88 = arith.constant 3.200000e+01 : f32
    %206 = vector.broadcast %cst_88 : f32 to vector<2x8x1xf32>
    %207 = arith.divf %205, %206 : vector<2x8x1xf32>
    %208 = vector.broadcast %207 : vector<2x8x1xf32> to vector<2x8x32xf32>
    %209 = arith.subf %199, %208 : vector<2x8x32xf32>
    %210 = arith.mulf %209, %209 : vector<2x8x32xf32>
    %cst_89 = arith.constant dense<0.000000e+00> : vector<2x8xf32>
    %211 = vector.multi_reduction <add>, %210, %cst_89 [2] : vector<2x8x32xf32> to vector<2x8xf32>
    %212 = vector.shape_cast %211 : vector<2x8xf32> to vector<2x8x1xf32>
    %cst_90 = arith.constant 3.200000e+01 : f32
    %213 = vector.broadcast %cst_90 : f32 to vector<2x8x1xf32>
    %214 = arith.divf %212, %213 : vector<2x8x1xf32>
    %215 = vector.broadcast %207 : vector<2x8x1xf32> to vector<2x8x32xf32>
    %216 = arith.subf %199, %215 : vector<2x8x32xf32>
    %cst_91 = arith.constant 9.99999974E-6 : f32
    %217 = vector.broadcast %cst_91 : f32 to vector<2x8x1xf32>
    %218 = arith.addf %214, %217 : vector<2x8x1xf32>
    %219 = math.rsqrt %218 : vector<2x8x1xf32>
    %220 = vector.broadcast %219 : vector<2x8x1xf32> to vector<2x8x32xf32>
    %221 = arith.mulf %216, %220 : vector<2x8x32xf32>
    %222 = vector.shape_cast %201 : vector<1x32xf32> to vector<1x1x32xf32>
    %223 = vector.broadcast %222 : vector<1x1x32xf32> to vector<2x8x32xf32>
    %224 = arith.mulf %221, %223 : vector<2x8x32xf32>
    %225 = vector.shape_cast %203 : vector<1x32xf32> to vector<1x1x32xf32>
    %226 = vector.broadcast %225 : vector<1x1x32xf32> to vector<2x8x32xf32>
    %227 = arith.addf %224, %226 : vector<2x8x32xf32>
    %c1 = arith.constant 1 : index
    %c0_92 = arith.constant 0 : index
    %c0_93 = arith.constant 0 : index
    %228 = vector.load %arg5[%c1, %c0_92, %c0_93] : memref<2x32x96xf32, #tpu.memory_space<vmem>>, vector<1x32x96xf32>
    %229 = vector.shape_cast %228 : vector<1x32x96xf32> to vector<32x96xf32>
    "tpu.trace_start"() <{level = 10 : i32, message = "bsh,he->bse"}> : () -> ()
    %cst_94 = arith.constant dense<0.000000e+00> : vector<2x8x96xf32>
    %230 = tpu.matmul %227, %229, %cst_94 {dimension_numbers = #tpu.dot_dimension_numbers<[2], [0], [0, 1], [1], [0, 0, 0, 1, 1, 1], [], []>} : vector<2x8x32xf32>, vector<32x96xf32>, vector<2x8x96xf32> -> vector<2x8x96xf32>
    "tpu.trace_stop"() : () -> ()
    %c1_95 = arith.constant 1 : index
    %c0_96 = arith.constant 0 : index
    %c0_97 = arith.constant 0 : index
    %231 = vector.load %arg6[%c1_95, %c0_96, %c0_97] : memref<2x1x96xf32, #tpu.memory_space<vmem>>, vector<1x1x96xf32>
    %232 = vector.shape_cast %231 : vector<1x1x96xf32> to vector<1x96xf32>
    %233 = vector.shape_cast %232 : vector<1x96xf32> to vector<1x1x96xf32>
    %234 = vector.broadcast %233 : vector<1x1x96xf32> to vector<2x8x96xf32>
    %235 = arith.addf %230, %234 : vector<2x8x96xf32>
    %236 = vector.extract_strided_slice %235 {offsets = [0, 0, 0], sizes = [2, 8, 8], strides = [1, 1, 1]} : vector<2x8x96xf32> to vector<2x8x8xf32>
    %cst_98 = arith.constant 0.353553385 : f32
    %237 = vector.broadcast %cst_98 : f32 to vector<2x8x8xf32>
    %238 = arith.mulf %236, %237 : vector<2x8x8xf32>
    %239 = vector.extract_strided_slice %235 {offsets = [0, 0, 32], sizes = [2, 8, 8], strides = [1, 1, 1]} : vector<2x8x96xf32> to vector<2x8x8xf32>
    %240 = vector.extract_strided_slice %235 {offsets = [0, 0, 64], sizes = [2, 8, 8], strides = [1, 1, 1]} : vector<2x8x96xf32> to vector<2x8x8xf32>
    "tpu.trace_start"() <{level = 10 : i32, message = "bsd,btd->bst"}> : () -> ()
    %cst_99 = arith.constant dense<0.000000e+00> : vector<2x8x8xf32>
    %241 = tpu.matmul %238, %239, %cst_99 {dimension_numbers = #tpu.dot_dimension_numbers<[2], [2], [1], [1], [0, 0, 0, 1, 1, 1], [0], [0]>} : vector<2x8x8xf32>, vector<2x8x8xf32>, vector<2x8x8xf32> -> vector<2x8x8xf32>
    "tpu.trace_stop"() : () -> ()
    %242 = vector.broadcast %47 : vector<2x1x8xf32> to vector<2x8x8xf32>
    %243 = arith.addf %241, %242 : vector<2x8x8xf32>
    %cst_100 = arith.constant dense<0xFF800000> : vector<2x8xf32>
    %244 = vector.multi_reduction <maximumf>, %243, %cst_100 [2] : vector<2x8x8xf32> to vector<2x8xf32>
    %245 = vector.shape_cast %244 : vector<2x8xf32> to vector<2x8x1xf32>
    %246 = vector.broadcast %245 : vector<2x8x1xf32> to vector<2x8x8xf32>
    %247 = arith.subf %243, %246 : vector<2x8x8xf32>
    %248 = math.exp %247 : vector<2x8x8xf32>
    %cst_101 = arith.constant dense<0.000000e+00> : vector<2x8xf32>
    %249 = vector.multi_reduction <add>, %248, %cst_101 [2] : vector<2x8x8xf32> to vector<2x8xf32>
    %250 = vector.shape_cast %249 : vector<2x8xf32> to vector<2x8x1xf32>
    %251 = tpu.reciprocal %250 {approx = true} : vector<2x8x1xf32> -> vector<2x8x1xf32>
    %252 = vector.broadcast %251 : vector<2x8x1xf32> to vector<2x8x8xf32>
    %253 = arith.mulf %248, %252 : vector<2x8x8xf32>
    "tpu.trace_start"() <{level = 10 : i32, message = "bst,btd->bsd"}> : () -> ()
    %cst_102 = arith.constant dense<0.000000e+00> : vector<2x8x8xf32>
    %254 = tpu.matmul %253, %240, %cst_102 {dimension_numbers = #tpu.dot_dimension_numbers<[2], [1], [1], [2], [0, 0, 0, 1, 1, 2], [0], [0]>} : vector<2x8x8xf32>, vector<2x8x8xf32>, vector<2x8x8xf32> -> vector<2x8x8xf32>
    "tpu.trace_stop"() : () -> ()
    %255 = vector.extract_strided_slice %235 {offsets = [0, 0, 8], sizes = [2, 8, 8], strides = [1, 1, 1]} : vector<2x8x96xf32> to vector<2x8x8xf32>
    %cst_103 = arith.constant 0.353553385 : f32
    %256 = vector.broadcast %cst_103 : f32 to vector<2x8x8xf32>
    %257 = arith.mulf %255, %256 : vector<2x8x8xf32>
    %258 = vector.extract_strided_slice %235 {offsets = [0, 0, 40], sizes = [2, 8, 8], strides = [1, 1, 1]} : vector<2x8x96xf32> to vector<2x8x8xf32>
    %259 = vector.extract_strided_slice %235 {offsets = [0, 0, 72], sizes = [2, 8, 8], strides = [1, 1, 1]} : vector<2x8x96xf32> to vector<2x8x8xf32>
    "tpu.trace_start"() <{level = 10 : i32, message = "bsd,btd->bst"}> : () -> ()
    %cst_104 = arith.constant dense<0.000000e+00> : vector<2x8x8xf32>
    %260 = tpu.matmul %257, %258, %cst_104 {dimension_numbers = #tpu.dot_dimension_numbers<[2], [2], [1], [1], [0, 0, 0, 1, 1, 1], [0], [0]>} : vector<2x8x8xf32>, vector<2x8x8xf32>, vector<2x8x8xf32> -> vector<2x8x8xf32>
    "tpu.trace_stop"() : () -> ()
    %261 = vector.broadcast %47 : vector<2x1x8xf32> to vector<2x8x8xf32>
    %262 = arith.addf %260, %261 : vector<2x8x8xf32>
    %cst_105 = arith.constant dense<0xFF800000> : vector<2x8xf32>
    %263 = vector.multi_reduction <maximumf>, %262, %cst_105 [2] : vector<2x8x8xf32> to vector<2x8xf32>
    %264 = vector.shape_cast %263 : vector<2x8xf32> to vector<2x8x1xf32>
    %265 = vector.broadcast %264 : vector<2x8x1xf32> to vector<2x8x8xf32>
    %266 = arith.subf %262, %265 : vector<2x8x8xf32>
    %267 = math.exp %266 : vector<2x8x8xf32>
    %cst_106 = arith.constant dense<0.000000e+00> : vector<2x8xf32>
    %268 = vector.multi_reduction <add>, %267, %cst_106 [2] : vector<2x8x8xf32> to vector<2x8xf32>
    %269 = vector.shape_cast %268 : vector<2x8xf32> to vector<2x8x1xf32>
    %270 = tpu.reciprocal %269 {approx = true} : vector<2x8x1xf32> -> vector<2x8x1xf32>
    %271 = vector.broadcast %270 : vector<2x8x1xf32> to vector<2x8x8xf32>
    %272 = arith.mulf %267, %271 : vector<2x8x8xf32>
    "tpu.trace_start"() <{level = 10 : i32, message = "bst,btd->bsd"}> : () -> ()
    %cst_107 = arith.constant dense<0.000000e+00> : vector<2x8x8xf32>
    %273 = tpu.matmul %272, %259, %cst_107 {dimension_numbers = #tpu.dot_dimension_numbers<[2], [1], [1], [2], [0, 0, 0, 1, 1, 2], [0], [0]>} : vector<2x8x8xf32>, vector<2x8x8xf32>, vector<2x8x8xf32> -> vector<2x8x8xf32>
    "tpu.trace_stop"() : () -> ()
    %274 = vector.extract_strided_slice %235 {offsets = [0, 0, 16], sizes = [2, 8, 8], strides = [1, 1, 1]} : vector<2x8x96xf32> to vector<2x8x8xf32>
    %cst_108 = arith.constant 0.353553385 : f32
    %275 = vector.broadcast %cst_108 : f32 to vector<2x8x8xf32>
    %276 = arith.mulf %274, %275 : vector<2x8x8xf32>
    %277 = vector.extract_strided_slice %235 {offsets = [0, 0, 48], sizes = [2, 8, 8], strides = [1, 1, 1]} : vector<2x8x96xf32> to vector<2x8x8xf32>
    %278 = vector.extract_strided_slice %235 {offsets = [0, 0, 80], sizes = [2, 8, 8], strides = [1, 1, 1]} : vector<2x8x96xf32> to vector<2x8x8xf32>
    "tpu.trace_start"() <{level = 10 : i32, message = "bsd,btd->bst"}> : () -> ()
    %cst_109 = arith.constant dense<0.000000e+00> : vector<2x8x8xf32>
    %279 = tpu.matmul %276, %277, %cst_109 {dimension_numbers = #tpu.dot_dimension_numbers<[2], [2], [1], [1], [0, 0, 0, 1, 1, 1], [0], [0]>} : vector<2x8x8xf32>, vector<2x8x8xf32>, vector<2x8x8xf32> -> vector<2x8x8xf32>
    "tpu.trace_stop"() : () -> ()
    %280 = vector.broadcast %47 : vector<2x1x8xf32> to vector<2x8x8xf32>
    %281 = arith.addf %279, %280 : vector<2x8x8xf32>
    %cst_110 = arith.constant dense<0xFF800000> : vector<2x8xf32>
    %282 = vector.multi_reduction <maximumf>, %281, %cst_110 [2] : vector<2x8x8xf32> to vector<2x8xf32>
    %283 = vector.shape_cast %282 : vector<2x8xf32> to vector<2x8x1xf32>
    %284 = vector.broadcast %283 : vector<2x8x1xf32> to vector<2x8x8xf32>
    %285 = arith.subf %281, %284 : vector<2x8x8xf32>
    %286 = math.exp %285 : vector<2x8x8xf32>
    %cst_111 = arith.constant dense<0.000000e+00> : vector<2x8xf32>
    %287 = vector.multi_reduction <add>, %286, %cst_111 [2] : vector<2x8x8xf32> to vector<2x8xf32>
    %288 = vector.shape_cast %287 : vector<2x8xf32> to vector<2x8x1xf32>
    %289 = tpu.reciprocal %288 {approx = true} : vector<2x8x1xf32> -> vector<2x8x1xf32>
    %290 = vector.broadcast %289 : vector<2x8x1xf32> to vector<2x8x8xf32>
    %291 = arith.mulf %286, %290 : vector<2x8x8xf32>
    "tpu.trace_start"() <{level = 10 : i32, message = "bst,btd->bsd"}> : () -> ()
    %cst_112 = arith.constant dense<0.000000e+00> : vector<2x8x8xf32>
    %292 = tpu.matmul %291, %278, %cst_112 {dimension_numbers = #tpu.dot_dimension_numbers<[2], [1], [1], [2], [0, 0, 0, 1, 1, 2], [0], [0]>} : vector<2x8x8xf32>, vector<2x8x8xf32>, vector<2x8x8xf32> -> vector<2x8x8xf32>
    "tpu.trace_stop"() : () -> ()
    %293 = vector.extract_strided_slice %235 {offsets = [0, 0, 24], sizes = [2, 8, 8], strides = [1, 1, 1]} : vector<2x8x96xf32> to vector<2x8x8xf32>
    %cst_113 = arith.constant 0.353553385 : f32
    %294 = vector.broadcast %cst_113 : f32 to vector<2x8x8xf32>
    %295 = arith.mulf %293, %294 : vector<2x8x8xf32>
    %296 = vector.extract_strided_slice %235 {offsets = [0, 0, 56], sizes = [2, 8, 8], strides = [1, 1, 1]} : vector<2x8x96xf32> to vector<2x8x8xf32>
    %297 = vector.extract_strided_slice %235 {offsets = [0, 0, 88], sizes = [2, 8, 8], strides = [1, 1, 1]} : vector<2x8x96xf32> to vector<2x8x8xf32>
    "tpu.trace_start"() <{level = 10 : i32, message = "bsd,btd->bst"}> : () -> ()
    %cst_114 = arith.constant dense<0.000000e+00> : vector<2x8x8xf32>
    %298 = tpu.matmul %295, %296, %cst_114 {dimension_numbers = #tpu.dot_dimension_numbers<[2], [2], [1], [1], [0, 0, 0, 1, 1, 1], [0], [0]>} : vector<2x8x8xf32>, vector<2x8x8xf32>, vector<2x8x8xf32> -> vector<2x8x8xf32>
    "tpu.trace_stop"() : () -> ()
    %299 = vector.broadcast %47 : vector<2x1x8xf32> to vector<2x8x8xf32>
    %300 = arith.addf %298, %299 : vector<2x8x8xf32>
    %cst_115 = arith.constant dense<0xFF800000> : vector<2x8xf32>
    %301 = vector.multi_reduction <maximumf>, %300, %cst_115 [2] : vector<2x8x8xf32> to vector<2x8xf32>
    %302 = vector.shape_cast %301 : vector<2x8xf32> to vector<2x8x1xf32>
    %303 = vector.broadcast %302 : vector<2x8x1xf32> to vector<2x8x8xf32>
    %304 = arith.subf %300, %303 : vector<2x8x8xf32>
    %305 = math.exp %304 : vector<2x8x8xf32>
    %cst_116 = arith.constant dense<0.000000e+00> : vector<2x8xf32>
    %306 = vector.multi_reduction <add>, %305, %cst_116 [2] : vector<2x8x8xf32> to vector<2x8xf32>
    %307 = vector.shape_cast %306 : vector<2x8xf32> to vector<2x8x1xf32>
    %308 = tpu.reciprocal %307 {approx = true} : vector<2x8x1xf32> -> vector<2x8x1xf32>
    %309 = vector.broadcast %308 : vector<2x8x1xf32> to vector<2x8x8xf32>
    %310 = arith.mulf %305, %309 : vector<2x8x8xf32>
    "tpu.trace_start"() <{level = 10 : i32, message = "bst,btd->bsd"}> : () -> ()
    %cst_117 = arith.constant dense<0.000000e+00> : vector<2x8x8xf32>
    %311 = tpu.matmul %310, %297, %cst_117 {dimension_numbers = #tpu.dot_dimension_numbers<[2], [1], [1], [2], [0, 0, 0, 1, 1, 2], [0], [0]>} : vector<2x8x8xf32>, vector<2x8x8xf32>, vector<2x8x8xf32> -> vector<2x8x8xf32>
    "tpu.trace_stop"() : () -> ()
    %312 = tpu.concatenate %254, %273, %292, %311 in 2 : vector<2x8x8xf32>, vector<2x8x8xf32>, vector<2x8x8xf32>, vector<2x8x8xf32> -> vector<2x8x32xf32>
    %c1_118 = arith.constant 1 : index
    %c0_119 = arith.constant 0 : index
    %c0_120 = arith.constant 0 : index
    %313 = vector.load %arg7[%c1_118, %c0_119, %c0_120] : memref<2x32x32xf32, #tpu.memory_space<vmem>>, vector<1x32x32xf32>
    %314 = vector.shape_cast %313 : vector<1x32x32xf32> to vector<32x32xf32>
    "tpu.trace_start"() <{level = 10 : i32, message = "bsh,hk->bsk"}> : () -> ()
    %cst_121 = arith.constant dense<0.000000e+00> : vector<2x8x32xf32>
    %315 = tpu.matmul %312, %314, %cst_121 {dimension_numbers = #tpu.dot_dimension_numbers<[2], [0], [0, 1], [1], [0, 0, 0, 1, 1, 1], [], []>} : vector<2x8x32xf32>, vector<32x32xf32>, vector<2x8x32xf32> -> vector<2x8x32xf32>
    "tpu.trace_stop"() : () -> ()
    %c1_122 = arith.constant 1 : index
    %c0_123 = arith.constant 0 : index
    %c0_124 = arith.constant 0 : index
    %316 = vector.load %arg8[%c1_122, %c0_123, %c0_124] : memref<2x1x32xf32, #tpu.memory_space<vmem>>, vector<1x1x32xf32>
    %317 = vector.shape_cast %316 : vector<1x1x32xf32> to vector<1x32xf32>
    %318 = vector.shape_cast %317 : vector<1x32xf32> to vector<1x1x32xf32>
    %319 = vector.broadcast %318 : vector<1x1x32xf32> to vector<2x8x32xf32>
    %320 = arith.addf %315, %319 : vector<2x8x32xf32>
    %321 = arith.addf %320, %227 : vector<2x8x32xf32>
    %c1_125 = arith.constant 1 : index
    %c0_126 = arith.constant 0 : index
    %c0_127 = arith.constant 0 : index
    %322 = vector.load %arg9[%c1_125, %c0_126, %c0_127] : memref<2x1x32xf32, #tpu.memory_space<vmem>>, vector<1x1x32xf32>
    %323 = vector.shape_cast %322 : vector<1x1x32xf32> to vector<1x32xf32>
    %c1_128 = arith.constant 1 : index
    %c0_129 = arith.constant 0 : index
    %c0_130 = arith.constant 0 : index
    %324 = vector.load %arg10[%c1_128, %c0_129, %c0_130] : memref<2x1x32xf32, #tpu.memory_space<vmem>>, vector<1x1x32xf32>
    %325 = vector.shape_cast %324 : vector<1x1x32xf32> to vector<1x32xf32>
    %cst_131 = arith.constant dense<0.000000e+00> : vector<2x8xf32>
    %326 = vector.multi_reduction <add>, %321, %cst_131 [2] : vector<2x8x32xf32> to vector<2x8xf32>
    %327 = vector.shape_cast %326 : vector<2x8xf32> to vector<2x8x1xf32>
    %cst_132 = arith.constant 3.200000e+01 : f32
    %328 = vector.broadcast %cst_132 : f32 to vector<2x8x1xf32>
    %329 = arith.divf %327, %328 : vector<2x8x1xf32>
    %330 = vector.broadcast %329 : vector<2x8x1xf32> to vector<2x8x32xf32>
    %331 = arith.subf %321, %330 : vector<2x8x32xf32>
    %332 = arith.mulf %331, %331 : vector<2x8x32xf32>
    %cst_133 = arith.constant dense<0.000000e+00> : vector<2x8xf32>
    %333 = vector.multi_reduction <add>, %332, %cst_133 [2] : vector<2x8x32xf32> to vector<2x8xf32>
    %334 = vector.shape_cast %333 : vector<2x8xf32> to vector<2x8x1xf32>
    %cst_134 = arith.constant 3.200000e+01 : f32
    %335 = vector.broadcast %cst_134 : f32 to vector<2x8x1xf32>
    %336 = arith.divf %334, %335 : vector<2x8x1xf32>
    %337 = vector.broadcast %329 : vector<2x8x1xf32> to vector<2x8x32xf32>
    %338 = arith.subf %321, %337 : vector<2x8x32xf32>
    %cst_135 = arith.constant 9.99999974E-6 : f32
    %339 = vector.broadcast %cst_135 : f32 to vector<2x8x1xf32>
    %340 = arith.addf %336, %339 : vector<2x8x1xf32>
    %341 = math.rsqrt %340 : vector<2x8x1xf32>
    %342 = vector.broadcast %341 : vector<2x8x1xf32> to vector<2x8x32xf32>
    %343 = arith.mulf %338, %342 : vector<2x8x32xf32>
    %344 = vector.shape_cast %323 : vector<1x32xf32> to vector<1x1x32xf32>
    %345 = vector.broadcast %344 : vector<1x1x32xf32> to vector<2x8x32xf32>
    %346 = arith.mulf %343, %345 : vector<2x8x32xf32>
    %347 = vector.shape_cast %325 : vector<1x32xf32> to vector<1x1x32xf32>
    %348 = vector.broadcast %347 : vector<1x1x32xf32> to vector<2x8x32xf32>
    %349 = arith.addf %346, %348 : vector<2x8x32xf32>
    %c1_136 = arith.constant 1 : index
    %c0_137 = arith.constant 0 : index
    %c0_138 = arith.constant 0 : index
    %350 = vector.load %arg11[%c1_136, %c0_137, %c0_138] : memref<2x32x64xf32, #tpu.memory_space<vmem>>, vector<1x32x64xf32>
    %351 = vector.shape_cast %350 : vector<1x32x64xf32> to vector<32x64xf32>
    "tpu.trace_start"() <{level = 10 : i32, message = "bsh,hi->bsi"}> : () -> ()
    %cst_139 = arith.constant dense<0.000000e+00> : vector<2x8x64xf32>
    %352 = tpu.matmul %349, %351, %cst_139 {dimension_numbers = #tpu.dot_dimension_numbers<[2], [0], [0, 1], [1], [0, 0, 0, 1, 1, 1], [], []>} : vector<2x8x32xf32>, vector<32x64xf32>, vector<2x8x64xf32> -> vector<2x8x64xf32>
    "tpu.trace_stop"() : () -> ()
    %c1_140 = arith.constant 1 : index
    %c0_141 = arith.constant 0 : index
    %c0_142 = arith.constant 0 : index
    %353 = vector.load %arg12[%c1_140, %c0_141, %c0_142] : memref<2x1x64xf32, #tpu.memory_space<vmem>>, vector<1x1x64xf32>
    %354 = vector.shape_cast %353 : vector<1x1x64xf32> to vector<1x64xf32>
    %355 = vector.shape_cast %354 : vector<1x64xf32> to vector<1x1x64xf32>
    %356 = vector.broadcast %355 : vector<1x1x64xf32> to vector<2x8x64xf32>
    %357 = arith.addf %352, %356 : vector<2x8x64xf32>
    %358 = arith.mulf %357, %357 : vector<2x8x64xf32>
    %359 = arith.mulf %357, %358 : vector<2x8x64xf32>
    %cst_143 = arith.constant 4.471500e-02 : f32
    %360 = vector.broadcast %cst_143 : f32 to vector<2x8x64xf32>
    %361 = arith.mulf %360, %359 : vector<2x8x64xf32>
    %362 = arith.addf %357, %361 : vector<2x8x64xf32>
    %cst_144 = arith.constant 0.797884583 : f32
    %363 = vector.broadcast %cst_144 : f32 to vector<2x8x64xf32>
    %364 = arith.mulf %363, %362 : vector<2x8x64xf32>
    %365 = math.tanh %364 : vector<2x8x64xf32>
    %cst_145 = arith.constant 1.000000e+00 : f32
    %366 = vector.broadcast %cst_145 : f32 to vector<2x8x64xf32>
    %367 = arith.addf %366, %365 : vector<2x8x64xf32>
    %cst_146 = arith.constant 5.000000e-01 : f32
    %368 = vector.broadcast %cst_146 : f32 to vector<2x8x64xf32>
    %369 = arith.mulf %368, %367 : vector<2x8x64xf32>
    %370 = arith.mulf %357, %369 : vector<2x8x64xf32>
    %c1_147 = arith.constant 1 : index
    %c0_148 = arith.constant 0 : index
    %c0_149 = arith.constant 0 : index
    %371 = vector.load %arg13[%c1_147, %c0_148, %c0_149] : memref<2x64x32xf32, #tpu.memory_space<vmem>>, vector<1x64x32xf32>
    %372 = vector.shape_cast %371 : vector<1x64x32xf32> to vector<64x32xf32>
    "tpu.trace_start"() <{level = 10 : i32, message = "bsi,ih->bsh"}> : () -> ()
    %cst_150 = arith.constant dense<0.000000e+00> : vector<2x8x32xf32>
    %373 = tpu.matmul %370, %372, %cst_150 {dimension_numbers = #tpu.dot_dimension_numbers<[2], [0], [0, 1], [1], [0, 0, 0, 1, 1, 1], [], []>} : vector<2x8x64xf32>, vector<64x32xf32>, vector<2x8x32xf32> -> vector<2x8x32xf32>
    "tpu.trace_stop"() : () -> ()
    %c1_151 = arith.constant 1 : index
    %c0_152 = arith.constant 0 : index
    %c0_153 = arith.constant 0 : index
    %374 = vector.load %arg14[%c1_151, %c0_152, %c0_153] : memref<2x1x32xf32, #tpu.memory_space<vmem>>, vector<1x1x32xf32>
    %375 = vector.shape_cast %374 : vector<1x1x32xf32> to vector<1x32xf32>
    %376 = vector.shape_cast %375 : vector<1x32xf32> to vector<1x1x32xf32>
    %377 = vector.broadcast %376 : vector<1x1x32xf32> to vector<2x8x32xf32>
    %378 = arith.addf %373, %377 : vector<2x8x32xf32>
    %379 = arith.addf %378, %349 : vector<2x8x32xf32>
    %c1_154 = arith.constant 1 : index
    %c0_155 = arith.constant 0 : index
    %c0_156 = arith.constant 0 : index
    %380 = vector.load %arg15[%c1_154, %c0_155, %c0_156] : memref<2x1x32xf32, #tpu.memory_space<vmem>>, vector<1x1x32xf32>
    %381 = vector.shape_cast %380 : vector<1x1x32xf32> to vector<1x32xf32>
    %c1_157 = arith.constant 1 : index
    %c0_158 = arith.constant 0 : index
    %c0_159 = arith.constant 0 : index
    %382 = vector.load %arg16[%c1_157, %c0_158, %c0_159] : memref<2x1x32xf32, #tpu.memory_space<vmem>>, vector<1x1x32xf32>
    %383 = vector.shape_cast %382 : vector<1x1x32xf32> to vector<1x32xf32>
    %cst_160 = arith.constant dense<0.000000e+00> : vector<2x8xf32>
    %384 = vector.multi_reduction <add>, %379, %cst_160 [2] : vector<2x8x32xf32> to vector<2x8xf32>
    %385 = vector.shape_cast %384 : vector<2x8xf32> to vector<2x8x1xf32>
    %cst_161 = arith.constant 3.200000e+01 : f32
    %386 = vector.broadcast %cst_161 : f32 to vector<2x8x1xf32>
    %387 = arith.divf %385, %386 : vector<2x8x1xf32>
    %388 = vector.broadcast %387 : vector<2x8x1xf32> to vector<2x8x32xf32>
    %389 = arith.subf %379, %388 : vector<2x8x32xf32>
    %390 = arith.mulf %389, %389 : vector<2x8x32xf32>
    %cst_162 = arith.constant dense<0.000000e+00> : vector<2x8xf32>
    %391 = vector.multi_reduction <add>, %390, %cst_162 [2] : vector<2x8x32xf32> to vector<2x8xf32>
    %392 = vector.shape_cast %391 : vector<2x8xf32> to vector<2x8x1xf32>
    %cst_163 = arith.constant 3.200000e+01 : f32
    %393 = vector.broadcast %cst_163 : f32 to vector<2x8x1xf32>
    %394 = arith.divf %392, %393 : vector<2x8x1xf32>
    %395 = vector.broadcast %387 : vector<2x8x1xf32> to vector<2x8x32xf32>
    %396 = arith.subf %379, %395 : vector<2x8x32xf32>
    %cst_164 = arith.constant 9.99999974E-6 : f32
    %397 = vector.broadcast %cst_164 : f32 to vector<2x8x1xf32>
    %398 = arith.addf %394, %397 : vector<2x8x1xf32>
    %399 = math.rsqrt %398 : vector<2x8x1xf32>
    %400 = vector.broadcast %399 : vector<2x8x1xf32> to vector<2x8x32xf32>
    %401 = arith.mulf %396, %400 : vector<2x8x32xf32>
    %402 = vector.shape_cast %381 : vector<1x32xf32> to vector<1x1x32xf32>
    %403 = vector.broadcast %402 : vector<1x1x32xf32> to vector<2x8x32xf32>
    %404 = arith.mulf %401, %403 : vector<2x8x32xf32>
    %405 = vector.shape_cast %383 : vector<1x32xf32> to vector<1x1x32xf32>
    %406 = vector.broadcast %405 : vector<1x1x32xf32> to vector<2x8x32xf32>
    %407 = arith.addf %404, %406 : vector<2x8x32xf32>
    %408 = vector.extract_strided_slice %407 {offsets = [0, 0, 0], sizes = [2, 1, 32], strides = [1, 1, 1]} : vector<2x8x32xf32> to vector<2x1x32xf32>
    %c0_165 = arith.constant 0 : index
    %c0_166 = arith.constant 0 : index
    %409 = vector.load %arg17[%c0_165, %c0_166] : memref<32x32xf32, #tpu.memory_space<vmem>>, vector<32x32xf32>
    "tpu.trace_start"() <{level = 10 : i32, message = "bsh,hk->bsk"}> : () -> ()
    %cst_167 = arith.constant dense<0.000000e+00> : vector<2x1x32xf32>
    %410 = tpu.matmul %408, %409, %cst_167 {dimension_numbers = #tpu.dot_dimension_numbers<[2], [0], [0, 1], [1], [0, 0, 0, 1, 1, 1], [], []>} : vector<2x1x32xf32>, vector<32x32xf32>, vector<2x1x32xf32> -> vector<2x1x32xf32>
    "tpu.trace_stop"() : () -> ()
    %c0_168 = arith.constant 0 : index
    %c0_169 = arith.constant 0 : index
    %411 = vector.load %arg18[%c0_168, %c0_169] : memref<1x32xf32, #tpu.memory_space<vmem>>, vector<1x32xf32>
    %412 = vector.shape_cast %411 : vector<1x32xf32> to vector<1x1x32xf32>
    %413 = vector.broadcast %412 : vector<1x1x32xf32> to vector<2x1x32xf32>
    %414 = arith.addf %410, %413 : vector<2x1x32xf32>
    %415 = math.tanh %414 : vector<2x1x32xf32>
    %c0_170 = arith.constant 0 : index
    %c0_171 = arith.constant 0 : index
    %c0_172 = arith.constant 0 : index
    %416 = vector.load %arg19[%c0_170, %c0_171, %c0_172] : memref<2x1x32xf32, #tpu.memory_space<vmem>>, vector<2x1x32xf32>
    tpu.vector_store %arg19[%c0_170, %c0_171, %c0_172], %415 {strides = array<i32>} : memref<2x1x32xf32, #tpu.memory_space<vmem>>, vector<2x1x32xf32>,
    return
  }
}

</mosaic_0001>

<llo_original>
// kernel: tpu_custom_call.1
$region0: #{tpu_custom_call.1}
  #allocation0 [shape = 'u32[]', space=smem, size = 0x4, offset = 0x4, fixed_abs, tag = 'smem constant byte address 0x4 - core index']
  #allocation1 [shape = 'u32[144,128]{1,0:T(1,128)}', space=vmem, size = 0x12000, scoped, tag = 'internal scratch']
  %s0 = inlined_call_operand.vmem [shape: s32[2,8,3], index: 0, kind: input, shape index: {}]
  %s1 = inlined_call_operand.vmem [shape: f32[2,1,8], index: 1, kind: input, shape index: {}]
  %s2 = inlined_call_operand.vmem [shape: f32[134,32], index: 2, kind: input, shape index: {}]
  %s3 = inlined_call_operand.vmem [shape: f32[1,32], index: 3, kind: input, shape index: {}]
  %s4 = inlined_call_operand.vmem [shape: f32[1,32], index: 4, kind: input, shape index: {}]
  %s5 = inlined_call_operand.vmem [shape: f32[2,32,96], index: 5, kind: input, shape index: {}]
  %s6 = inlined_call_operand.vmem [shape: f32[2,1,96], index: 6, kind: input, shape index: {}]
  %s7 = inlined_call_operand.vmem [shape: f32[2,32,32], index: 7, kind: input, shape index: {}]
  %s8 = inlined_call_operand.vmem [shape: f32[2,1,32], index: 8, kind: input, shape index: {}]
  %s9 = inlined_call_operand.vmem [shape: f32[2,1,32], index: 9, kind: input, shape index: {}]
  %s10 = inlined_call_operand.vmem [shape: f32[2,1,32], index: 10, kind: input, shape index: {}]
  %s11 = inlined_call_operand.vmem [shape: f32[2,32,64], index: 11, kind: input, shape index: {}]
  %s12 = inlined_call_operand.vmem [shape: f32[2,1,64], index: 12, kind: input, shape index: {}]
  %s13 = inlined_call_operand.vmem [shape: f32[2,64,32], index: 13, kind: input, shape index: {}]
  %s14 = inlined_call_operand.vmem [shape: f32[2,1,32], index: 14, kind: input, shape index: {}]
  %s15 = inlined_call_operand.vmem [shape: f32[2,1,32], index: 15, kind: input, shape index: {}]
  %s16 = inlined_call_operand.vmem [shape: f32[2,1,32], index: 16, kind: input, shape index: {}]
  %s17 = inlined_call_operand.vmem [shape: f32[32,32], index: 17, kind: input, shape index: {}]
  %s18 = inlined_call_operand.vmem [shape: f32[1,32], index: 18, kind: input, shape index: {}]
  %s19 = inlined_call_operand.hbm [shape: f32[2,1,32], index: 19, kind: output, shape index: {}]
  %s20 = sld [smem:[#allocation0]]
  $region86: #{tpu_custom_call.1} parent=0
    _
  %s22 = ssub.s32 1, %s20
  %s23 = scalar_select 0, %s22, %s20
  $region1: #{tpu_custom_call.1} parent=0
    #allocation2 [shape = 'u8[1024]{0}', space=vmem, size = 0x400, scoped, tag = 'output window, operand 0, single buffered']
    #allocation3 [shape = 's32[1]{0}', space=sflag, size = 0x4, scoped, tag = 'scoped memory for tpu_custom_call.1']
    %24 = vsyncpa [#allocation3], 0
    // Predicated region
    $region2: #{tpu_custom_call.1} parent=1 // pred_check
      _
    $region3: #{tpu_custom_call.1} parent=1 // pred_check_branch
      %26 = sbr.rel (0) target = $region5
    $region4: #{tpu_custom_call.1} parent=1 // pred_region
      _
    $region5: #{tpu_custom_call.1} parent=1 // pred_fallthru
      _
    // Predicated region
    $region6: #{tpu_custom_call.1} parent=1 // pred_check
      _
    $region7: #{tpu_custom_call.1} parent=1 // pred_check_branch
      %28 = sbr.rel (0) target = $region9
    $region8: #{tpu_custom_call.1} parent=1 // pred_region
      _
    $region9: #{tpu_custom_call.1} parent=1 // pred_fallthru
      _
    // Predicated region
    $region10: #{tpu_custom_call.1} parent=1 // pred_check
      _
    $region11: #{tpu_custom_call.1} parent=1 // pred_check_branch
      %30 = sbr.rel (0) target = $region13
    $region12: #{tpu_custom_call.1} parent=1 // pred_region
      _
    $region13: #{tpu_custom_call.1} parent=1 // pred_fallthru
      _
    // Predicated region
    $region14: #{tpu_custom_call.1} parent=1 // pred_check
      _
    $region15: #{tpu_custom_call.1} parent=1 // pred_check_branch
      %32 = sbr.rel (0) target = $region17
    $region16: #{tpu_custom_call.1} parent=1 // pred_region
      _
    $region17: #{tpu_custom_call.1} parent=1 // pred_fallthru
      _
    // Predicated region
    $region18: #{tpu_custom_call.1} parent=1 // pred_check
      _
    $region19: #{tpu_custom_call.1} parent=1 // pred_check_branch
      %34 = sbr.rel (0) target = $region21
    $region20: #{tpu_custom_call.1} parent=1 // pred_region
      _
    $region21: #{tpu_custom_call.1} parent=1 // pred_fallthru
      _
    // Predicated region
    $region22: #{tpu_custom_call.1} parent=1 // pred_check
      _
    $region23: #{tpu_custom_call.1} parent=1 // pred_check_branch
      %36 = sbr.rel (0) target = $region25
    $region24: #{tpu_custom_call.1} parent=1 // pred_region
      _
    $region25: #{tpu_custom_call.1} parent=1 // pred_fallthru
      _
    // Predicated region
    $region26: #{tpu_custom_call.1} parent=1 // pred_check
      _
    $region27: #{tpu_custom_call.1} parent=1 // pred_check_branch
      %38 = sbr.rel (0) target = $region29
    $region28: #{tpu_custom_call.1} parent=1 // pred_region
      _
    $region29: #{tpu_custom_call.1} parent=1 // pred_fallthru
      _
    // Predicated region
    $region30: #{tpu_custom_call.1} parent=1 // pred_check
      _
    $region31: #{tpu_custom_call.1} parent=1 // pred_check_branch
      %40 = sbr.rel (0) target = $region33
    $region32: #{tpu_custom_call.1} parent=1 // pred_region
      _
    $region33: #{tpu_custom_call.1} parent=1 // pred_fallthru
      _
    // Predicated region
    $region34: #{tpu_custom_call.1} parent=1 // pred_check
      _
    $region35: #{tpu_custom_call.1} parent=1 // pred_check_branch
      %42 = sbr.rel (0) target = $region37
    $region36: #{tpu_custom_call.1} parent=1 // pred_region
      _
    $region37: #{tpu_custom_call.1} parent=1 // pred_fallthru
      _
    // Predicated region
    $region38: #{tpu_custom_call.1} parent=1 // pred_check
      _
    $region39: #{tpu_custom_call.1} parent=1 // pred_check_branch
      %44 = sbr.rel (0) target = $region41
    $region40: #{tpu_custom_call.1} parent=1 // pred_region
      _
    $region41: #{tpu_custom_call.1} parent=1 // pred_fallthru
      _
    // Predicated region
    $region42: #{tpu_custom_call.1} parent=1 // pred_check
      _
    $region43: #{tpu_custom_call.1} parent=1 // pred_check_branch
      %46 = sbr.rel (0) target = $region45
    $region44: #{tpu_custom_call.1} parent=1 // pred_region
      _
    $region45: #{tpu_custom_call.1} parent=1 // pred_fallthru
      _
    // Predicated region
    $region46: #{tpu_custom_call.1} parent=1 // pred_check
      _
    $region47: #{tpu_custom_call.1} parent=1 // pred_check_branch
      %48 = sbr.rel (0) target = $region49
    $region48: #{tpu_custom_call.1} parent=1 // pred_region
      _
    $region49: #{tpu_custom_call.1} parent=1 // pred_fallthru
      _
    // Predicated region
    $region50: #{tpu_custom_call.1} parent=1 // pred_check
      _
    $region51: #{tpu_custom_call.1} parent=1 // pred_check_branch
      %50 = sbr.rel (0) target = $region53
    $region52: #{tpu_custom_call.1} parent=1 // pred_region
      _
    $region53: #{tpu_custom_call.1} parent=1 // pred_fallthru
      _
    // Predicated region
    $region54: #{tpu_custom_call.1} parent=1 // pred_check
      _
    $region55: #{tpu_custom_call.1} parent=1 // pred_check_branch
      %52 = sbr.rel (0) target = $region57
    $region56: #{tpu_custom_call.1} parent=1 // pred_region
      _
    $region57: #{tpu_custom_call.1} parent=1 // pred_fallthru
      _
    // Predicated region
    $region58: #{tpu_custom_call.1} parent=1 // pred_check
      _
    $region59: #{tpu_custom_call.1} parent=1 // pred_check_branch
      %54 = sbr.rel (0) target = $region61
    $region60: #{tpu_custom_call.1} parent=1 // pred_region
      _
    $region61: #{tpu_custom_call.1} parent=1 // pred_fallthru
      _
    // Predicated region
    $region62: #{tpu_custom_call.1} parent=1 // pred_check
      _
    $region63: #{tpu_custom_call.1} parent=1 // pred_check_branch
      %56 = sbr.rel (0) target = $region65
    $region64: #{tpu_custom_call.1} parent=1 // pred_region
      _
    $region65: #{tpu_custom_call.1} parent=1 // pred_fallthru
      _
    // Predicated region
    $region66: #{tpu_custom_call.1} parent=1 // pred_check
      _
    $region67: #{tpu_custom_call.1} parent=1 // pred_check_branch
      %58 = sbr.rel (0) target = $region69
    $region68: #{tpu_custom_call.1} parent=1 // pred_region
      _
    $region69: #{tpu_custom_call.1} parent=1 // pred_fallthru
      _
    // Predicated region
    $region70: #{tpu_custom_call.1} parent=1 // pred_check
      _
    $region71: #{tpu_custom_call.1} parent=1 // pred_check_branch
      %60 = sbr.rel (0) target = $region73
    $region72: #{tpu_custom_call.1} parent=1 // pred_region
      _
    $region73: #{tpu_custom_call.1} parent=1 // pred_fallthru
      _
    // Predicated region
    $region74: #{tpu_custom_call.1} parent=1 // pred_check
      _
    $region75: #{tpu_custom_call.1} parent=1 // pred_check_branch
      %62 = sbr.rel (0) target = $region77
    $region76: #{tpu_custom_call.1} parent=1 // pred_region
      _
    $region77: #{tpu_custom_call.1} parent=1 // pred_fallthru
      _
    %v63 = vld [vmem:[%s0] sm:$0xff]
    %v64 = vld [vmem:[%s0 + $0x8] sm:$0xff]
    %v65 = vlaneseq
    %v66 = vand.u32 %v65, 127
    %v67 = vadd.s32 %v66, 128
    %68 = vset.pattern.permute.xlu0 0
    %69 = vperm.xlu0 %68, %v63
    %v70 = vpop.permute.xlu0 %69
    %71 = vset.pattern.permute.xlu0 0
    %72 = vperm.xlu0 %71, %v64
    %v73 = vpop.permute.xlu0 %72
    %vm74 = vcmp.eq.s32.totalorder %v66, %v70
    %vm75 = vcmp.eq.s32.totalorder %v67, %v70
    %vm76 = vcmp.eq.s32.totalorder %v66, %v73
    %vm77 = vcmp.eq.s32.totalorder %v67, %v73
    %78 = vset.pattern.permute.xlu0 1
    %79 = vperm.xlu0 %78, %v63
    %v80 = vpop.permute.xlu0 %79
    %81 = vset.pattern.permute.xlu0 1
    %82 = vperm.xlu0 %81, %v64
    %v83 = vpop.permute.xlu0 %82
    %vm84 = vcmp.eq.s32.totalorder %v66, %v80
    %vm85 = vcmp.eq.s32.totalorder %v67, %v80
    %vm86 = vcmp.eq.s32.totalorder %v66, %v83
    %vm87 = vcmp.eq.s32.totalorder %v67, %v83
    %vm88 = vmor %vm74, %vm84
    %vm89 = vmor %vm75, %vm85
    %vm90 = vmor %vm76, %vm86
    %vm91 = vmor %vm77, %vm87
    %92 = vset.pattern.permute.xlu0 2
    %93 = vperm.xlu0 %92, %v63
    %v94 = vpop.permute.xlu0 %93
    %95 = vset.pattern.permute.xlu0 2
    %96 = vperm.xlu0 %95, %v64
    %v97 = vpop.permute.xlu0 %96
    %vm98 = vcmp.eq.s32.totalorder %v66, %v94
    %vm99 = vcmp.eq.s32.totalorder %v67, %v94
    %vm100 = vcmp.eq.s32.totalorder %v66, %v97
    %vm101 = vcmp.eq.s32.totalorder %v67, %v97
    %vm102 = vmor %vm88, %vm98
    %vm103 = vmor %vm89, %vm99
    %vm104 = vmor %vm90, %vm100
    %vm105 = vmor %vm91, %vm101
    %v106 = vsel %vm102, 1, 0
    %v107 = vsel %vm103, 1, 0
    %v108 = vsel %vm104, 1, 0
    %v109 = vsel %vm105, 1, 0
    %v110 = vcvt.s32.f32 %v106
    %v111 = vcvt.s32.f32 %v107
    %v112 = vcvt.s32.f32 %v108
    %v113 = vcvt.s32.f32 %v109
    %v114 = vld [vmem:[%s2] sm:$0xff]
    %v115 = vld [vmem:[%s2 + $0x8] sm:$0xff]
    %v116 = vld [vmem:[%s2 + $0x10] sm:$0xff]
    %v117 = vld [vmem:[%s2 + $0x18] sm:$0xff]
    %v118 = vld [vmem:[%s2 + $0x20] sm:$0xff]
    %v119 = vld [vmem:[%s2 + $0x28] sm:$0xff]
    %v120 = vld [vmem:[%s2 + $0x30] sm:$0xff]
    %v121 = vld [vmem:[%s2 + $0x38] sm:$0xff]
    %v122 = vld [vmem:[%s2 + $0x40] sm:$0xff]
    %v123 = vld [vmem:[%s2 + $0x48] sm:$0xff]
    %v124 = vld [vmem:[%s2 + $0x50] sm:$0xff]
    %v125 = vld [vmem:[%s2 + $0x58] sm:$0xff]
    %v126 = vld [vmem:[%s2 + $0x60] sm:$0xff]
    %v127 = vld [vmem:[%s2 + $0x68] sm:$0xff]
    %v128 = vld [vmem:[%s2 + $0x70] sm:$0xff]
    %v129 = vld [vmem:[%s2 + $0x78] sm:$0xff]
    %v130 = vld [vmem:[%s2 + $0x80] sm:$0x3f]
    %vm131 = vcmask 48128
    %v133 = vsel %vm131, %v111, 0
    %v136 = vsel %vm131, %v113, 0
    %vm138 = vcmask 1045504
    %v140 = vsel %vm138, %v130, 0
    %142 = vmatprep.subr.mxu0 0.0
    %143 = vmatpush1.msra.mxu0 %v114
    %144 = vmatprep.subr.mxu0 0.0
    %145 = vmatpush1.msra.mxu0 %v115
    %146 = vmatprep.subr.mxu0 0.0
    %147 = vmatpush1.msra.mxu0 %v116
    %148 = vmatprep.subr.mxu0 0.0
    %149 = vmatpush1.msra.mxu0 %v117
    %150 = vmatprep.subr.mxu0 0.0
    %151 = vmatpush1.msra.mxu0 %v118
    %152 = vmatprep.subr.mxu0 0.0
    %153 = vmatpush1.msra.mxu0 %v119
    %154 = vmatprep.subr.mxu0 0.0
    %155 = vmatpush1.msra.mxu0 %v120
    %156 = vmatprep.subr.mxu0 0.0
    %157 = vmatpush1.msra.mxu0 %v121
    %158 = vmatprep.subr.mxu0 0.0
    %159 = vmatpush1.msra.mxu0 %v122
    %160 = vmatprep.subr.mxu0 0.0
    %161 = vmatpush1.msra.mxu0 %v123
    %162 = vmatprep.subr.mxu0 0.0
    %163 = vmatpush1.msra.mxu0 %v124
    %164 = vmatprep.subr.mxu0 0.0
    %165 = vmatpush1.msra.mxu0 %v125
    %166 = vmatprep.subr.mxu0 0.0
    %167 = vmatpush1.msra.mxu0 %v126
    %168 = vmatprep.subr.mxu0 0.0
    %169 = vmatpush1.msra.mxu0 %v127
    %170 = vmatprep.subr.mxu0 0.0
    %171 = vmatpush1.msra.mxu0 %v128
    %172 = vmatprep.subr.mxu0 0.0
    %173 = vmatpush1.msra.mxu0 %v129
    %174 = vmatprep.subr.mxu0 0.0
    %175 = vmatpush1.msra.mxu0 %v140
    %176 = vmatprep.subr.mxu0 0.0
    %177 = vmatpush1.msra.mxu0 0.0
    %178 = vmatprep.subr.mxu0 0.0
    %179 = vmatpush1.msra.mxu0 0.0
    %180 = vmatprep.subr.mxu0 0.0
    %181 = vmatpush1.msra.mxu0 0.0
    %182 = vmatprep.subr.mxu0 0.0
    %183 = vmatpush1.msra.mxu0 0.0
    %184 = vmatprep.subr.mxu0 0.0
    %185 = vmatpush1.msra.mxu0 0.0
    %186 = vmatprep.subr.mxu0 0.0
    %187 = vmatpush1.msra.mxu0 0.0
    %188 = vmatprep.subr.mxu0 0.0
    %189 = vmatpush1.msra.mxu0 0.0
    %190 = vmatprep.subr.mxu0 0.0
    %191 = vmatpush1.msra.mxu0 0.0
    %192 = vmatprep.subr.mxu0 0.0
    %193 = vmatpush1.msra.mxu0 0.0
    %194 = vmatprep.subr.mxu0 0.0
    %195 = vmatpush1.msra.mxu0 0.0
    %196 = vmatprep.subr.mxu0 0.0
    %197 = vmatpush1.msra.mxu0 0.0
    %198 = vmatprep.subr.mxu0 0.0
    %199 = vmatpush1.msra.mxu0 0.0
    %200 = vmatprep.subr.mxu0 0.0
    %201 = vmatpush1.msra.mxu0 0.0
    %202 = vmatprep.subr.mxu0 0.0
    %203 = vmatpush1.msra.mxu0 0.0
    %204 = vmatprep.subr.mxu0 0.0
    %205 = vmatpush1.msra.mxu0 0.0
    %206 = vmatprep.mubr.f32.mxu0 %v133
    %207 = vmatmul.mubr.f32.gmra.mrb[0].mxu0 %v110
    %v208 = vpop.f32.mrb[0].mxu0
    %v209 = vadd.f32 0.0, %v208
    %v210 = vpop.f32.mrb[0].mxu0
    %211 = vmatprep.mubr.f32.mxu0 %v136
    %212 = vmatmul.mubr.f32.gmra.mrb[0].mxu0 %v112
    %v213 = vpop.f32.mrb[0].mxu0
    %v214 = vadd.f32 0.0, %v213
    %v215 = vpop.f32.mrb[0].mxu0
    %216 = vdwg.mxu0
    %v217 = vld [vmem:[%s3] sm:$0x1]
    %v218 = vld [vmem:[%s4] sm:$0x1]
    %vm219 = vcmask 261120
    %v220 = vsel %vm219, %v209, 0.0
    %221 = vadd.xlane.f32.xlu0 %v220
    %v222 = vpop.xlane.xlu0 %221
    %v223 = vsel %vm219, %v214, 0.0
    %224 = vadd.xlane.f32.xlu0 %v223
    %v225 = vpop.xlane.xlu0 %224
    %v226 = vrcp.pop 32.0
    %v227 = vmul.f32 %v222, %v226
    %v228 = vmul.f32 %v225, %v226
    %v229 = vsub.f32 %v209, %v227
    %v230 = vsub.f32 %v214, %v228
    %v231 = vmul.f32 %v229, %v229
    %v232 = vmul.f32 %v230, %v230
    %v233 = vsel %vm219, %v231, 0.0
    %234 = vadd.xlane.f32.xlu0 %v233
    %v235 = vpop.xlane.xlu0 %234
    %v236 = vsel %vm219, %v232, 0.0
    %237 = vadd.xlane.f32.xlu0 %v236
    %v238 = vpop.xlane.xlu0 %237
    %v239 = vmul.f32 %v235, %v226
    %v240 = vmul.f32 %v238, %v226
    %v241 = vadd.f32 %v239, 1e-05
    %v242 = vadd.f32 %v240, 1e-05
    %v243 = vrsqrt.pop %v241
    %v244 = vrsqrt.pop %v242
    %v245 = vmul.f32 %v229, %v243
    %v246 = vmul.f32 %v230, %v244
    %v248 = vlaneseq
    %v249 = vshrl.u32 %v248, 7
    %v250 = vsub.s32 0, %v249
    %v251 = vrot.slane %v217, %v250
    %v253 = vmul.f32 %v245, %v251
    %v254 = vmul.f32 %v246, %v251
    %v256 = vlaneseq
    %v257 = vshrl.u32 %v256, 7
    %v258 = vsub.s32 0, %v257
    %v259 = vrot.slane %v218, %v258
    %v261 = vadd.f32 %v253, %v259
    %v262 = vadd.f32 %v254, %v259
    %v263 = vld [vmem:[%s1] sm:$0x1]
    %v264 = vld [vmem:[%s1 + $0x1] sm:$0x1]
    %v265 = vsub.f32 1.0, %v263
    %v266 = vsub.f32 1.0, %v264
    %v267 = vmul.f32 %v265, -1e+09
    %v268 = vmul.f32 %v266, -1e+09
    %v269 = vld [vmem:[%s5] sm:$0xff]
    %v270 = vld [vmem:[%s5 + $0x8] sm:$0xff]
    %v271 = vld [vmem:[%s5 + $0x10] sm:$0xff]
    %v272 = vld [vmem:[%s5 + $0x18] sm:$0xff]
    %v273 = vld [vmem:[%s6] sm:$0x1]
    %v275 = vlaneseq
    %v276 = vshrl.u32 %v275, 7
    %v277 = vsub.s32 0, %v276
    %v278 = vrot.slane %v273, %v277
    %v281 = vsel %vm219, %v261, 0
    %v284 = vsel %vm219, %v262, 0
    %286 = vmatprep.subr.mxu0 0.0
    %287 = vmatpush1.msra.mxu0 %v269
    %288 = vmatprep.subr.mxu0 0.0
    %289 = vmatpush1.msra.mxu0 %v270
    %290 = vmatprep.subr.mxu0 0.0
    %291 = vmatpush1.msra.mxu0 %v271
    %292 = vmatprep.subr.mxu0 0.0
    %293 = vmatpush1.msra.mxu0 %v272
    %294 = vmatprep.subr.mxu0 0.0
    %295 = vmatpush1.msra.mxu0 0.0
    %296 = vmatprep.subr.mxu0 0.0
    %297 = vmatpush1.msra.mxu0 0.0
    %298 = vmatprep.subr.mxu0 0.0
    %299 = vmatpush1.msra.mxu0 0.0
    %300 = vmatprep.subr.mxu0 0.0
    %301 = vmatpush1.msra.mxu0 0.0
    %302 = vmatprep.subr.mxu0 0.0
    %303 = vmatpush1.msra.mxu0 0.0
    %304 = vmatprep.subr.mxu0 0.0
    %305 = vmatpush1.msra.mxu0 0.0
    %306 = vmatprep.subr.mxu0 0.0
    %307 = vmatpush1.msra.mxu0 0.0
    %308 = vmatprep.subr.mxu0 0.0
    %309 = vmatpush1.msra.mxu0 0.0
    %310 = vmatprep.subr.mxu0 0.0
    %311 = vmatpush1.msra.mxu0 0.0
    %312 = vmatprep.subr.mxu0 0.0
    %313 = vmatpush1.msra.mxu0 0.0
    %314 = vmatprep.subr.mxu0 0.0
    %315 = vmatpush1.msra.mxu0 0.0
    %316 = vmatprep.subr.mxu0 0.0
    %317 = vmatpush1.msra.mxu0 0.0
    %318 = vmatprep.subr.mxu0 0.0
    %319 = vmatpush1.msra.mxu0 0.0
    %320 = vmatprep.subr.mxu0 0.0
    %321 = vmatpush1.msra.mxu0 0.0
    %322 = vmatprep.subr.mxu0 0.0
    %323 = vmatpush1.msra.mxu0 0.0
    %324 = vmatprep.subr.mxu0 0.0
    %325 = vmatpush1.msra.mxu0 0.0
    %326 = vmatprep.subr.mxu0 0.0
    %327 = vmatpush1.msra.mxu0 0.0
    %328 = vmatprep.subr.mxu0 0.0
    %329 = vmatpush1.msra.mxu0 0.0
    %330 = vmatprep.subr.mxu0 0.0
    %331 = vmatpush1.msra.mxu0 0.0
    %332 = vmatprep.subr.mxu0 0.0
    %333 = vmatpush1.msra.mxu0 0.0
    %334 = vmatprep.subr.mxu0 0.0
    %335 = vmatpush1.msra.mxu0 0.0
    %336 = vmatprep.subr.mxu0 0.0
    %337 = vmatpush1.msra.mxu0 0.0
    %338 = vmatprep.subr.mxu0 0.0
    %339 = vmatpush1.msra.mxu0 0.0
    %340 = vmatprep.subr.mxu0 0.0
    %341 = vmatpush1.msra.mxu0 0.0
    %342 = vmatprep.subr.mxu0 0.0
    %343 = vmatpush1.msra.mxu0 0.0
    %344 = vmatprep.subr.mxu0 0.0
    %345 = vmatpush1.msra.mxu0 0.0
    %346 = vmatprep.subr.mxu0 0.0
    %347 = vmatpush1.msra.mxu0 0.0
    %348 = vmatprep.subr.mxu0 0.0
    %349 = vmatpush1.msra.mxu0 0.0
    %350 = vmatprep.mubr.f32.mxu0 0.0
    %351 = vmatmul.mubr.f32.gmra.mrb[0].mxu0 %v281
    %v352 = vpop.f32.mrb[0].mxu0
    %v353 = vadd.f32 %v278, %v352
    %v354 = vpop.f32.mrb[0].mxu0
    %355 = vmatprep.mubr.f32.mxu0 0.0
    %356 = vmatmul.mubr.f32.gmra.mrb[0].mxu0 %v284
    %v357 = vpop.f32.mrb[0].mxu0
    %v358 = vadd.f32 %v278, %v357
    %v359 = vpop.f32.mrb[0].mxu0
    %360 = vdwg.mxu0
    %v361 = vmul.f32 %v353, 0.35355338
    %v362 = vmul.f32 %v358, 0.35355338
    %v365 = vlaneseq
    %v366 = vshrl.u32 %v365, 7
    %v367 = vsub.s32 0, %v366
    %v368 = vrot.slane %v267, %v367
    %v369 = vlaneseq
    %v370 = vshrl.u32 %v369, 7
    %v371 = vsub.s32 0, %v370
    %v372 = vrot.slane %v268, %v371
    %376 = vrot.lane.b32.xlu0 %v353, 96
    %v377 = vpop.permute.xlu0 %376
    %vm378 = vcmask 64512
    %v380 = vsel %vm378, %v361, 0
    %v382 = vsel %vm378, %v377, 0
    %384 = vmatprep.subr.mxu0 0.0
    %385 = vmatpush1.xpose.msra.mxu0 %v382
    %386 = vmatprep.subr.mxu0 0.0
    %387 = vmatpush1.xpose.msra.mxu0 0.0
    %388 = vmatprep.subr.mxu0 0.0
    %389 = vmatpush1.xpose.msra.mxu0 0.0
    %390 = vmatprep.subr.mxu0 0.0
    %391 = vmatpush1.xpose.msra.mxu0 0.0
    %392 = vmatprep.subr.mxu0 0.0
    %393 = vmatpush1.xpose.msra.mxu0 0.0
    %394 = vmatprep.subr.mxu0 0.0
    %395 = vmatpush1.xpose.msra.mxu0 0.0
    %396 = vmatprep.subr.mxu0 0.0
    %397 = vmatpush1.xpose.msra.mxu0 0.0
    %398 = vmatprep.subr.mxu0 0.0
    %399 = vmatpush1.xpose.msra.mxu0 0.0
    %400 = vmatprep.subr.mxu0 0.0
    %401 = vmatpush1.xpose.msra.mxu0 0.0
    %402 = vmatprep.subr.mxu0 0.0
    %403 = vmatpush1.xpose.msra.mxu0 0.0
    %404 = vmatprep.subr.mxu0 0.0
    %405 = vmatpush1.xpose.msra.mxu0 0.0
    %406 = vmatprep.subr.mxu0 0.0
    %407 = vmatpush1.xpose.msra.mxu0 0.0
    %408 = vmatprep.subr.mxu0 0.0
    %409 = vmatpush1.xpose.msra.mxu0 0.0
    %410 = vmatprep.subr.mxu0 0.0
    %411 = vmatpush1.xpose.msra.mxu0 0.0
    %412 = vmatprep.subr.mxu0 0.0
    %413 = vmatpush1.xpose.msra.mxu0 0.0
    %414 = vmatprep.subr.mxu0 0.0
    %415 = vmatpush1.xpose.msra.mxu0 0.0
    %416 = vmatprep.subr.mxu0 0.0
    %417 = vmatpush1.xpose.msra.mxu0 0.0
    %418 = vmatprep.subr.mxu0 0.0
    %419 = vmatpush1.xpose.msra.mxu0 0.0
    %420 = vmatprep.subr.mxu0 0.0
    %421 = vmatpush1.xpose.msra.mxu0 0.0
    %422 = vmatprep.subr.mxu0 0.0
    %423 = vmatpush1.xpose.msra.mxu0 0.0
    %424 = vmatprep.subr.mxu0 0.0
    %425 = vmatpush1.xpose.msra.mxu0 0.0
    %426 = vmatprep.subr.mxu0 0.0
    %427 = vmatpush1.xpose.msra.mxu0 0.0
    %428 = vmatprep.subr.mxu0 0.0
    %429 = vmatpush1.xpose.msra.mxu0 0.0
    %430 = vmatprep.subr.mxu0 0.0
    %431 = vmatpush1.xpose.msra.mxu0 0.0
    %432 = vmatprep.subr.mxu0 0.0
    %433 = vmatpush1.xpose.msra.mxu0 0.0
    %434 = vmatprep.subr.mxu0 0.0
    %435 = vmatpush1.xpose.msra.mxu0 0.0
    %436 = vmatprep.subr.mxu0 0.0
    %437 = vmatpush1.xpose.msra.mxu0 0.0
    %438 = vmatprep.subr.mxu0 0.0
    %439 = vmatpush1.xpose.msra.mxu0 0.0
    %440 = vmatprep.subr.mxu0 0.0
    %441 = vmatpush1.xpose.msra.mxu0 0.0
    %442 = vmatprep.subr.mxu0 0.0
    %443 = vmatpush1.xpose.msra.mxu0 0.0
    %444 = vmatprep.subr.mxu0 0.0
    %445 = vmatpush1.xpose.msra.mxu0 0.0
    %446 = vmatprep.subr.mxu0 0.0
    %447 = vmatpush1.xpose.msra.mxu0 0.0
    %448 = vmatprep.mubr.f32.mxu0 0.0
    %449 = vmatmul.mubr.f32.gmra.mrb[0].mxu0 %v380
    %v450 = vpop.f32.mrb[0].mxu0
    %v451 = vadd.f32 %v368, %v450
    %v452 = vpop.f32.mrb[0].mxu0
    %453 = vdwg.mxu0
    %455 = vrot.lane.b32.xlu0 %v358, 96
    %v456 = vpop.permute.xlu0 %455
    %v458 = vsel %vm378, %v362, 0
    %v460 = vsel %vm378, %v456, 0
    %462 = vmatprep.subr.mxu0 0.0
    %463 = vmatpush1.xpose.msra.mxu0 %v460
    %464 = vmatprep.subr.mxu0 0.0
    %465 = vmatpush1.xpose.msra.mxu0 0.0
    %466 = vmatprep.subr.mxu0 0.0
    %467 = vmatpush1.xpose.msra.mxu0 0.0
    %468 = vmatprep.subr.mxu0 0.0
    %469 = vmatpush1.xpose.msra.mxu0 0.0
    %470 = vmatprep.subr.mxu0 0.0
    %471 = vmatpush1.xpose.msra.mxu0 0.0
    %472 = vmatprep.subr.mxu0 0.0
    %473 = vmatpush1.xpose.msra.mxu0 0.0
    %474 = vmatprep.subr.mxu0 0.0
    %475 = vmatpush1.xpose.msra.mxu0 0.0
    %476 = vmatprep.subr.mxu0 0.0
    %477 = vmatpush1.xpose.msra.mxu0 0.0
    %478 = vmatprep.subr.mxu0 0.0
    %479 = vmatpush1.xpose.msra.mxu0 0.0
    %480 = vmatprep.subr.mxu0 0.0
    %481 = vmatpush1.xpose.msra.mxu0 0.0
    %482 = vmatprep.subr.mxu0 0.0
    %483 = vmatpush1.xpose.msra.mxu0 0.0
    %484 = vmatprep.subr.mxu0 0.0
    %485 = vmatpush1.xpose.msra.mxu0 0.0
    %486 = vmatprep.subr.mxu0 0.0
    %487 = vmatpush1.xpose.msra.mxu0 0.0
    %488 = vmatprep.subr.mxu0 0.0
    %489 = vmatpush1.xpose.msra.mxu0 0.0
    %490 = vmatprep.subr.mxu0 0.0
    %491 = vmatpush1.xpose.msra.mxu0 0.0
    %492 = vmatprep.subr.mxu0 0.0
    %493 = vmatpush1.xpose.msra.mxu0 0.0
    %494 = vmatprep.subr.mxu0 0.0
    %495 = vmatpush1.xpose.msra.mxu0 0.0
    %496 = vmatprep.subr.mxu0 0.0
    %497 = vmatpush1.xpose.msra.mxu0 0.0
    %498 = vmatprep.subr.mxu0 0.0
    %499 = vmatpush1.xpose.msra.mxu0 0.0
    %500 = vmatprep.subr.mxu0 0.0
    %501 = vmatpush1.xpose.msra.mxu0 0.0
    %502 = vmatprep.subr.mxu0 0.0
    %503 = vmatpush1.xpose.msra.mxu0 0.0
    %504 = vmatprep.subr.mxu0 0.0
    %505 = vmatpush1.xpose.msra.mxu0 0.0
    %506 = vmatprep.subr.mxu0 0.0
    %507 = vmatpush1.xpose.msra.mxu0 0.0
    %508 = vmatprep.subr.mxu0 0.0
    %509 = vmatpush1.xpose.msra.mxu0 0.0
    %510 = vmatprep.subr.mxu0 0.0
    %511 = vmatpush1.xpose.msra.mxu0 0.0
    %512 = vmatprep.subr.mxu0 0.0
    %513 = vmatpush1.xpose.msra.mxu0 0.0
    %514 = vmatprep.subr.mxu0 0.0
    %515 = vmatpush1.xpose.msra.mxu0 0.0
    %516 = vmatprep.subr.mxu0 0.0
    %517 = vmatpush1.xpose.msra.mxu0 0.0
    %518 = vmatprep.subr.mxu0 0.0
    %519 = vmatpush1.xpose.msra.mxu0 0.0
    %520 = vmatprep.subr.mxu0 0.0
    %521 = vmatpush1.xpose.msra.mxu0 0.0
    %522 = vmatprep.subr.mxu0 0.0
    %523 = vmatpush1.xpose.msra.mxu0 0.0
    %524 = vmatprep.subr.mxu0 0.0
    %525 = vmatpush1.xpose.msra.mxu0 0.0
    %526 = vmatprep.mubr.f32.mxu0 0.0
    %527 = vmatmul.mubr.f32.gmra.mrb[0].mxu0 %v458
    %v528 = vpop.f32.mrb[0].mxu0
    %v529 = vadd.f32 %v372, %v528
    %v530 = vpop.f32.mrb[0].mxu0
    %531 = vdwg.mxu0
    %v532 = vsel %vm378, %v451, -inf
    %533 = vmax.xlane.f32.xlu0 %v532
    %v534 = vpop.xlane.xlu0 %533
    %v535 = vsel %vm378, %v529, -inf
    %536 = vmax.xlane.f32.xlu0 %v535
    %v537 = vpop.xlane.xlu0 %536
    %v538 = vsub.f32 %v451, %v534
    %v539 = vsub.f32 %v529, %v537
    %v540 = vmul.f32 %v538, 1.442695
    %v541 = vpow.pop %v540
    %v542 = vmul.f32 %v539, 1.442695
    %v543 = vpow.pop %v542
    %v544 = vsel %vm378, %v541, 0.0
    %545 = vadd.xlane.f32.xlu0 %v544
    %v546 = vpop.xlane.xlu0 %545
    %v547 = vsel %vm378, %v543, 0.0
    %548 = vadd.xlane.f32.xlu0 %v547
    %v549 = vpop.xlane.xlu0 %548
    %v550 = vrcp.pop %v546
    %v551 = vrcp.pop %v549
    %v552 = vmul.f32 %v541, %v550
    %v553 = vmul.f32 %v543, %v551
    %554 = vrot.lane.b32.xlu0 %v353, 64
    %v555 = vpop.permute.xlu0 %554
    %v558 = vsel %vm378, %v552, 0
    %560 = vmatprep.subr.mxu0 0.0
    %561 = vmatpush1.msra.mxu0 %v555
    %562 = vmatprep.subr.mxu0 0.0
    %563 = vmatpush1.msra.mxu0 0.0
    %564 = vmatprep.subr.mxu0 0.0
    %565 = vmatpush1.msra.mxu0 0.0
    %566 = vmatprep.subr.mxu0 0.0
    %567 = vmatpush1.msra.mxu0 0.0
    %568 = vmatprep.subr.mxu0 0.0
    %569 = vmatpush1.msra.mxu0 0.0
    %570 = vmatprep.subr.mxu0 0.0
    %571 = vmatpush1.msra.mxu0 0.0
    %572 = vmatprep.subr.mxu0 0.0
    %573 = vmatpush1.msra.mxu0 0.0
    %574 = vmatprep.subr.mxu0 0.0
    %575 = vmatpush1.msra.mxu0 0.0
    %576 = vmatprep.subr.mxu0 0.0
    %577 = vmatpush1.msra.mxu0 0.0
    %578 = vmatprep.subr.mxu0 0.0
    %579 = vmatpush1.msra.mxu0 0.0
    %580 = vmatprep.subr.mxu0 0.0
    %581 = vmatpush1.msra.mxu0 0.0
    %582 = vmatprep.subr.mxu0 0.0
    %583 = vmatpush1.msra.mxu0 0.0
    %584 = vmatprep.subr.mxu0 0.0
    %585 = vmatpush1.msra.mxu0 0.0
    %586 = vmatprep.subr.mxu0 0.0
    %587 = vmatpush1.msra.mxu0 0.0
    %588 = vmatprep.subr.mxu0 0.0
    %589 = vmatpush1.msra.mxu0 0.0
    %590 = vmatprep.subr.mxu0 0.0
    %591 = vmatpush1.msra.mxu0 0.0
    %592 = vmatprep.subr.mxu0 0.0
    %593 = vmatpush1.msra.mxu0 0.0
    %594 = vmatprep.subr.mxu0 0.0
    %595 = vmatpush1.msra.mxu0 0.0
    %596 = vmatprep.subr.mxu0 0.0
    %597 = vmatpush1.msra.mxu0 0.0
    %598 = vmatprep.subr.mxu0 0.0
    %599 = vmatpush1.msra.mxu0 0.0
    %600 = vmatprep.subr.mxu0 0.0
    %601 = vmatpush1.msra.mxu0 0.0
    %602 = vmatprep.subr.mxu0 0.0
    %603 = vmatpush1.msra.mxu0 0.0
    %604 = vmatprep.subr.mxu0 0.0
    %605 = vmatpush1.msra.mxu0 0.0
    %606 = vmatprep.subr.mxu0 0.0
    %607 = vmatpush1.msra.mxu0 0.0
    %608 = vmatprep.subr.mxu0 0.0
    %609 = vmatpush1.msra.mxu0 0.0
    %610 = vmatprep.subr.mxu0 0.0
    %611 = vmatpush1.msra.mxu0 0.0
    %612 = vmatprep.subr.mxu0 0.0
    %613 = vmatpush1.msra.mxu0 0.0
    %614 = vmatprep.subr.mxu0 0.0
    %615 = vmatpush1.msra.mxu0 0.0
    %616 = vmatprep.subr.mxu0 0.0
    %617 = vmatpush1.msra.mxu0 0.0
    %618 = vmatprep.subr.mxu0 0.0
    %619 = vmatpush1.msra.mxu0 0.0
    %620 = vmatprep.subr.mxu0 0.0
    %621 = vmatpush1.msra.mxu0 0.0
    %622 = vmatprep.subr.mxu0 0.0
    %623 = vmatpush1.msra.mxu0 0.0
    %624 = vmatprep.mubr.f32.mxu0 0.0
    %625 = vmatmul.mubr.f32.gmra.mrb[0].mxu0 %v558
    %v626 = vpop.f32.mrb[0].mxu0
    %v627 = vadd.f32 0.0, %v626
    %v628 = vpop.f32.mrb[0].mxu0
    %629 = vdwg.mxu0
    %630 = vrot.lane.b32.xlu0 %v358, 64
    %v631 = vpop.permute.xlu0 %630
    %v634 = vsel %vm378, %v553, 0
    %636 = vmatprep.subr.mxu0 0.0
    %637 = vmatpush1.msra.mxu0 %v631
    %638 = vmatprep.subr.mxu0 0.0
    %639 = vmatpush1.msra.mxu0 0.0
    %640 = vmatprep.subr.mxu0 0.0
    %641 = vmatpush1.msra.mxu0 0.0
    %642 = vmatprep.subr.mxu0 0.0
    %643 = vmatpush1.msra.mxu0 0.0
    %644 = vmatprep.subr.mxu0 0.0
    %645 = vmatpush1.msra.mxu0 0.0
    %646 = vmatprep.subr.mxu0 0.0
    %647 = vmatpush1.msra.mxu0 0.0
    %648 = vmatprep.subr.mxu0 0.0
    %649 = vmatpush1.msra.mxu0 0.0
    %650 = vmatprep.subr.mxu0 0.0
    %651 = vmatpush1.msra.mxu0 0.0
    %652 = vmatprep.subr.mxu0 0.0
    %653 = vmatpush1.msra.mxu0 0.0
    %654 = vmatprep.subr.mxu0 0.0
    %655 = vmatpush1.msra.mxu0 0.0
    %656 = vmatprep.subr.mxu0 0.0
    %657 = vmatpush1.msra.mxu0 0.0
    %658 = vmatprep.subr.mxu0 0.0
    %659 = vmatpush1.msra.mxu0 0.0
    %660 = vmatprep.subr.mxu0 0.0
    %661 = vmatpush1.msra.mxu0 0.0
    %662 = vmatprep.subr.mxu0 0.0
    %663 = vmatpush1.msra.mxu0 0.0
    %664 = vmatprep.subr.mxu0 0.0
    %665 = vmatpush1.msra.mxu0 0.0
    %666 = vmatprep.subr.mxu0 0.0
    %667 = vmatpush1.msra.mxu0 0.0
    %668 = vmatprep.subr.mxu0 0.0
    %669 = vmatpush1.msra.mxu0 0.0
    %670 = vmatprep.subr.mxu0 0.0
    %671 = vmatpush1.msra.mxu0 0.0
    %672 = vmatprep.subr.mxu0 0.0
    %673 = vmatpush1.msra.mxu0 0.0
    %674 = vmatprep.subr.mxu0 0.0
    %675 = vmatpush1.msra.mxu0 0.0
    %676 = vmatprep.subr.mxu0 0.0
    %677 = vmatpush1.msra.mxu0 0.0
    %678 = vmatprep.subr.mxu0 0.0
    %679 = vmatpush1.msra.mxu0 0.0
    %680 = vmatprep.subr.mxu0 0.0
    %681 = vmatpush1.msra.mxu0 0.0
    %682 = vmatprep.subr.mxu0 0.0
    %683 = vmatpush1.msra.mxu0 0.0
    %684 = vmatprep.subr.mxu0 0.0
    %685 = vmatpush1.msra.mxu0 0.0
    %686 = vmatprep.subr.mxu0 0.0
    %687 = vmatpush1.msra.mxu0 0.0
    %688 = vmatprep.subr.mxu0 0.0
    %689 = vmatpush1.msra.mxu0 0.0
    %690 = vmatprep.subr.mxu0 0.0
    %691 = vmatpush1.msra.mxu0 0.0
    %692 = vmatprep.subr.mxu0 0.0
    %693 = vmatpush1.msra.mxu0 0.0
    %694 = vmatprep.subr.mxu0 0.0
    %695 = vmatpush1.msra.mxu0 0.0
    %696 = vmatprep.subr.mxu0 0.0
    %697 = vmatpush1.msra.mxu0 0.0
    %698 = vmatprep.subr.mxu0 0.0
    %699 = vmatpush1.msra.mxu0 0.0
    %700 = vmatprep.mubr.f32.mxu0 0.0
    %701 = vmatmul.mubr.f32.gmra.mrb[0].mxu0 %v634
    %v702 = vpop.f32.mrb[0].mxu0
    %v703 = vadd.f32 0.0, %v702
    %v704 = vpop.f32.mrb[0].mxu0
    %705 = vdwg.mxu0
    %706 = vrot.lane.b32.xlu0 %v361, 120
    %v707 = vpop.permute.xlu0 %706
    %708 = vrot.lane.b32.xlu0 %v353, 88
    %v709 = vpop.permute.xlu0 %708
    %v710 = vsel %vm378, %v707, 0
    %v712 = vsel %vm378, %v709, 0
    %714 = vmatprep.subr.mxu0 0.0
    %715 = vmatpush1.xpose.msra.mxu0 %v712
    %716 = vmatprep.subr.mxu0 0.0
    %717 = vmatpush1.xpose.msra.mxu0 0.0
    %718 = vmatprep.subr.mxu0 0.0
    %719 = vmatpush1.xpose.msra.mxu0 0.0
    %720 = vmatprep.subr.mxu0 0.0
    %721 = vmatpush1.xpose.msra.mxu0 0.0
    %722 = vmatprep.subr.mxu0 0.0
    %723 = vmatpush1.xpose.msra.mxu0 0.0
    %724 = vmatprep.subr.mxu0 0.0
    %725 = vmatpush1.xpose.msra.mxu0 0.0
    %726 = vmatprep.subr.mxu0 0.0
    %727 = vmatpush1.xpose.msra.mxu0 0.0
    %728 = vmatprep.subr.mxu0 0.0
    %729 = vmatpush1.xpose.msra.mxu0 0.0
    %730 = vmatprep.subr.mxu0 0.0
    %731 = vmatpush1.xpose.msra.mxu0 0.0
    %732 = vmatprep.subr.mxu0 0.0
    %733 = vmatpush1.xpose.msra.mxu0 0.0
    %734 = vmatprep.subr.mxu0 0.0
    %735 = vmatpush1.xpose.msra.mxu0 0.0
    %736 = vmatprep.subr.mxu0 0.0
    %737 = vmatpush1.xpose.msra.mxu0 0.0
    %738 = vmatprep.subr.mxu0 0.0
    %739 = vmatpush1.xpose.msra.mxu0 0.0
    %740 = vmatprep.subr.mxu0 0.0
    %741 = vmatpush1.xpose.msra.mxu0 0.0
    %742 = vmatprep.subr.mxu0 0.0
    %743 = vmatpush1.xpose.msra.mxu0 0.0
    %744 = vmatprep.subr.mxu0 0.0
    %745 = vmatpush1.xpose.msra.mxu0 0.0
    %746 = vmatprep.subr.mxu0 0.0
    %747 = vmatpush1.xpose.msra.mxu0 0.0
    %748 = vmatprep.subr.mxu0 0.0
    %749 = vmatpush1.xpose.msra.mxu0 0.0
    %750 = vmatprep.subr.mxu0 0.0
    %751 = vmatpush1.xpose.msra.mxu0 0.0
    %752 = vmatprep.subr.mxu0 0.0
    %753 = vmatpush1.xpose.msra.mxu0 0.0
    %754 = vmatprep.subr.mxu0 0.0
    %755 = vmatpush1.xpose.msra.mxu0 0.0
    %756 = vmatprep.subr.mxu0 0.0
    %757 = vmatpush1.xpose.msra.mxu0 0.0
    %758 = vmatprep.subr.mxu0 0.0
    %759 = vmatpush1.xpose.msra.mxu0 0.0
    %760 = vmatprep.subr.mxu0 0.0
    %761 = vmatpush1.xpose.msra.mxu0 0.0
    %762 = vmatprep.subr.mxu0 0.0
    %763 = vmatpush1.xpose.msra.mxu0 0.0
    %764 = vmatprep.subr.mxu0 0.0
    %765 = vmatpush1.xpose.msra.mxu0 0.0
    %766 = vmatprep.subr.mxu0 0.0
    %767 = vmatpush1.xpose.msra.mxu0 0.0
    %768 = vmatprep.subr.mxu0 0.0
    %769 = vmatpush1.xpose.msra.mxu0 0.0
    %770 = vmatprep.subr.mxu0 0.0
    %771 = vmatpush1.xpose.msra.mxu0 0.0
    %772 = vmatprep.subr.mxu0 0.0
    %773 = vmatpush1.xpose.msra.mxu0 0.0
    %774 = vmatprep.subr.mxu0 0.0
    %775 = vmatpush1.xpose.msra.mxu0 0.0
    %776 = vmatprep.subr.mxu0 0.0
    %777 = vmatpush1.xpose.msra.mxu0 0.0
    %778 = vmatprep.mubr.f32.mxu0 0.0
    %779 = vmatmul.mubr.f32.gmra.mrb[0].mxu0 %v710
    %v780 = vpop.f32.mrb[0].mxu0
    %v781 = vadd.f32 %v368, %v780
    %v782 = vpop.f32.mrb[0].mxu0
    %783 = vdwg.mxu0
    %784 = vrot.lane.b32.xlu0 %v362, 120
    %v785 = vpop.permute.xlu0 %784
    %786 = vrot.lane.b32.xlu0 %v358, 88
    %v787 = vpop.permute.xlu0 %786
    %v788 = vsel %vm378, %v785, 0
    %v790 = vsel %vm378, %v787, 0
    %792 = vmatprep.subr.mxu0 0.0
    %793 = vmatpush1.xpose.msra.mxu0 %v790
    %794 = vmatprep.subr.mxu0 0.0
    %795 = vmatpush1.xpose.msra.mxu0 0.0
    %796 = vmatprep.subr.mxu0 0.0
    %797 = vmatpush1.xpose.msra.mxu0 0.0
    %798 = vmatprep.subr.mxu0 0.0
    %799 = vmatpush1.xpose.msra.mxu0 0.0
    %800 = vmatprep.subr.mxu0 0.0
    %801 = vmatpush1.xpose.msra.mxu0 0.0
    %802 = vmatprep.subr.mxu0 0.0
    %803 = vmatpush1.xpose.msra.mxu0 0.0
    %804 = vmatprep.subr.mxu0 0.0
    %805 = vmatpush1.xpose.msra.mxu0 0.0
    %806 = vmatprep.subr.mxu0 0.0
    %807 = vmatpush1.xpose.msra.mxu0 0.0
    %808 = vmatprep.subr.mxu0 0.0
    %809 = vmatpush1.xpose.msra.mxu0 0.0
    %810 = vmatprep.subr.mxu0 0.0
    %811 = vmatpush1.xpose.msra.mxu0 0.0
    %812 = vmatprep.subr.mxu0 0.0
    %813 = vmatpush1.xpose.msra.mxu0 0.0
    %814 = vmatprep.subr.mxu0 0.0
    %815 = vmatpush1.xpose.msra.mxu0 0.0
    %816 = vmatprep.subr.mxu0 0.0
    %817 = vmatpush1.xpose.msra.mxu0 0.0
    %818 = vmatprep.subr.mxu0 0.0
    %819 = vmatpush1.xpose.msra.mxu0 0.0
    %820 = vmatprep.subr.mxu0 0.0
    %821 = vmatpush1.xpose.msra.mxu0 0.0
    %822 = vmatprep.subr.mxu0 0.0
    %823 = vmatpush1.xpose.msra.mxu0 0.0
    %824 = vmatprep.subr.mxu0 0.0
    %825 = vmatpush1.xpose.msra.mxu0 0.0
    %826 = vmatprep.subr.mxu0 0.0
    %827 = vmatpush1.xpose.msra.mxu0 0.0
    %828 = vmatprep.subr.mxu0 0.0
    %829 = vmatpush1.xpose.msra.mxu0 0.0
    %830 = vmatprep.subr.mxu0 0.0
    %831 = vmatpush1.xpose.msra.mxu0 0.0
    %832 = vmatprep.subr.mxu0 0.0
    %833 = vmatpush1.xpose.msra.mxu0 0.0
    %834 = vmatprep.subr.mxu0 0.0
    %835 = vmatpush1.xpose.msra.mxu0 0.0
    %836 = vmatprep.subr.mxu0 0.0
    %837 = vmatpush1.xpose.msra.mxu0 0.0
    %838 = vmatprep.subr.mxu0 0.0
    %839 = vmatpush1.xpose.msra.mxu0 0.0
    %840 = vmatprep.subr.mxu0 0.0
    %841 = vmatpush1.xpose.msra.mxu0 0.0
    %842 = vmatprep.subr.mxu0 0.0
    %843 = vmatpush1.xpose.msra.mxu0 0.0
    %844 = vmatprep.subr.mxu0 0.0
    %845 = vmatpush1.xpose.msra.mxu0 0.0
    %846 = vmatprep.subr.mxu0 0.0
    %847 = vmatpush1.xpose.msra.mxu0 0.0
    %848 = vmatprep.subr.mxu0 0.0
    %849 = vmatpush1.xpose.msra.mxu0 0.0
    %850 = vmatprep.subr.mxu0 0.0
    %851 = vmatpush1.xpose.msra.mxu0 0.0
    %852 = vmatprep.subr.mxu0 0.0
    %853 = vmatpush1.xpose.msra.mxu0 0.0
    %854 = vmatprep.subr.mxu0 0.0
    %855 = vmatpush1.xpose.msra.mxu0 0.0
    %856 = vmatprep.mubr.f32.mxu0 0.0
    %857 = vmatmul.mubr.f32.gmra.mrb[0].mxu0 %v788
    %v858 = vpop.f32.mrb[0].mxu0
    %v859 = vadd.f32 %v372, %v858
    %v860 = vpop.f32.mrb[0].mxu0
    %861 = vdwg.mxu0
    %v862 = vsel %vm378, %v781, -inf
    %863 = vmax.xlane.f32.xlu0 %v862
    %v864 = vpop.xlane.xlu0 %863
    %v865 = vsel %vm378, %v859, -inf
    %866 = vmax.xlane.f32.xlu0 %v865
    %v867 = vpop.xlane.xlu0 %866
    %v868 = vsub.f32 %v781, %v864
    %v869 = vsub.f32 %v859, %v867
    %v870 = vmul.f32 %v868, 1.442695
    %v871 = vpow.pop %v870
    %v872 = vmul.f32 %v869, 1.442695
    %v873 = vpow.pop %v872
    %v874 = vsel %vm378, %v871, 0.0
    %875 = vadd.xlane.f32.xlu0 %v874
    %v876 = vpop.xlane.xlu0 %875
    %v877 = vsel %vm378, %v873, 0.0
    %878 = vadd.xlane.f32.xlu0 %v877
    %v879 = vpop.xlane.xlu0 %878
    %v880 = vrcp.pop %v876
    %v881 = vrcp.pop %v879
    %v882 = vmul.f32 %v871, %v880
    %v883 = vmul.f32 %v873, %v881
    %884 = vrot.lane.b32.xlu0 %v353, 56
    %v885 = vpop.permute.xlu0 %884
    %v888 = vsel %vm378, %v882, 0
    %890 = vmatprep.subr.mxu0 0.0
    %891 = vmatpush1.msra.mxu0 %v885
    %892 = vmatprep.subr.mxu0 0.0
    %893 = vmatpush1.msra.mxu0 0.0
    %894 = vmatprep.subr.mxu0 0.0
    %895 = vmatpush1.msra.mxu0 0.0
    %896 = vmatprep.subr.mxu0 0.0
    %897 = vmatpush1.msra.mxu0 0.0
    %898 = vmatprep.subr.mxu0 0.0
    %899 = vmatpush1.msra.mxu0 0.0
    %900 = vmatprep.subr.mxu0 0.0
    %901 = vmatpush1.msra.mxu0 0.0
    %902 = vmatprep.subr.mxu0 0.0
    %903 = vmatpush1.msra.mxu0 0.0
    %904 = vmatprep.subr.mxu0 0.0
    %905 = vmatpush1.msra.mxu0 0.0
    %906 = vmatprep.subr.mxu0 0.0
    %907 = vmatpush1.msra.mxu0 0.0
    %908 = vmatprep.subr.mxu0 0.0
    %909 = vmatpush1.msra.mxu0 0.0
    %910 = vmatprep.subr.mxu0 0.0
    %911 = vmatpush1.msra.mxu0 0.0
    %912 = vmatprep.subr.mxu0 0.0
    %913 = vmatpush1.msra.mxu0 0.0
    %914 = vmatprep.subr.mxu0 0.0
    %915 = vmatpush1.msra.mxu0 0.0
    %916 = vmatprep.subr.mxu0 0.0
    %917 = vmatpush1.msra.mxu0 0.0
    %918 = vmatprep.subr.mxu0 0.0
    %919 = vmatpush1.msra.mxu0 0.0
    %920 = vmatprep.subr.mxu0 0.0
    %921 = vmatpush1.msra.mxu0 0.0
    %922 = vmatprep.subr.mxu0 0.0
    %923 = vmatpush1.msra.mxu0 0.0
    %924 = vmatprep.subr.mxu0 0.0
    %925 = vmatpush1.msra.mxu0 0.0
    %926 = vmatprep.subr.mxu0 0.0
    %927 = vmatpush1.msra.mxu0 0.0
    %928 = vmatprep.subr.mxu0 0.0
    %929 = vmatpush1.msra.mxu0 0.0
    %930 = vmatprep.subr.mxu0 0.0
    %931 = vmatpush1.msra.mxu0 0.0
    %932 = vmatprep.subr.mxu0 0.0
    %933 = vmatpush1.msra.mxu0 0.0
    %934 = vmatprep.subr.mxu0 0.0
    %935 = vmatpush1.msra.mxu0 0.0
    %936 = vmatprep.subr.mxu0 0.0
    %937 = vmatpush1.msra.mxu0 0.0
    %938 = vmatprep.subr.mxu0 0.0
    %939 = vmatpush1.msra.mxu0 0.0
    %940 = vmatprep.subr.mxu0 0.0
    %941 = vmatpush1.msra.mxu0 0.0
    %942 = vmatprep.subr.mxu0 0.0
    %943 = vmatpush1.msra.mxu0 0.0
    %944 = vmatprep.subr.mxu0 0.0
    %945 = vmatpush1.msra.mxu0 0.0
    %946 = vmatprep.subr.mxu0 0.0
    %947 = vmatpush1.msra.mxu0 0.0
    %948 = vmatprep.subr.mxu0 0.0
    %949 = vmatpush1.msra.mxu0 0.0
    %950 = vmatprep.subr.mxu0 0.0
    %951 = vmatpush1.msra.mxu0 0.0
    %952 = vmatprep.subr.mxu0 0.0
    %953 = vmatpush1.msra.mxu0 0.0
    %954 = vmatprep.mubr.f32.mxu0 0.0
    %955 = vmatmul.mubr.f32.gmra.mrb[0].mxu0 %v888
    %v956 = vpop.f32.mrb[0].mxu0
    %v957 = vadd.f32 0.0, %v956
    %v958 = vpop.f32.mrb[0].mxu0
    %959 = vdwg.mxu0
    %960 = vrot.lane.b32.xlu0 %v358, 56
    %v961 = vpop.permute.xlu0 %960
    %v964 = vsel %vm378, %v883, 0
    %966 = vmatprep.subr.mxu0 0.0
    %967 = vmatpush1.msra.mxu0 %v961
    %968 = vmatprep.subr.mxu0 0.0
    %969 = vmatpush1.msra.mxu0 0.0
    %970 = vmatprep.subr.mxu0 0.0
    %971 = vmatpush1.msra.mxu0 0.0
    %972 = vmatprep.subr.mxu0 0.0
    %973 = vmatpush1.msra.mxu0 0.0
    %974 = vmatprep.subr.mxu0 0.0
    %975 = vmatpush1.msra.mxu0 0.0
    %976 = vmatprep.subr.mxu0 0.0
    %977 = vmatpush1.msra.mxu0 0.0
    %978 = vmatprep.subr.mxu0 0.0
    %979 = vmatpush1.msra.mxu0 0.0
    %980 = vmatprep.subr.mxu0 0.0
    %981 = vmatpush1.msra.mxu0 0.0
    %982 = vmatprep.subr.mxu0 0.0
    %983 = vmatpush1.msra.mxu0 0.0
    %984 = vmatprep.subr.mxu0 0.0
    %985 = vmatpush1.msra.mxu0 0.0
    %986 = vmatprep.subr.mxu0 0.0
    %987 = vmatpush1.msra.mxu0 0.0
    %988 = vmatprep.subr.mxu0 0.0
    %989 = vmatpush1.msra.mxu0 0.0
    %990 = vmatprep.subr.mxu0 0.0
    %991 = vmatpush1.msra.mxu0 0.0
    %992 = vmatprep.subr.mxu0 0.0
    %993 = vmatpush1.msra.mxu0 0.0
    %994 = vmatprep.subr.mxu0 0.0
    %995 = vmatpush1.msra.mxu0 0.0
    %996 = vmatprep.subr.mxu0 0.0
    %997 = vmatpush1.msra.mxu0 0.0
    %998 = vmatprep.subr.mxu0 0.0
    %999 = vmatpush1.msra.mxu0 0.0
    %1000 = vmatprep.subr.mxu0 0.0
    %1001 = vmatpush1.msra.mxu0 0.0
    %1002 = vmatprep.subr.mxu0 0.0
    %1003 = vmatpush1.msra.mxu0 0.0
    %1004 = vmatprep.subr.mxu0 0.0
    %1005 = vmatpush1.msra.mxu0 0.0
    %1006 = vmatprep.subr.mxu0 0.0
    %1007 = vmatpush1.msra.mxu0 0.0
    %1008 = vmatprep.subr.mxu0 0.0
    %1009 = vmatpush1.msra.mxu0 0.0
    %1010 = vmatprep.subr.mxu0 0.0
    %1011 = vmatpush1.msra.mxu0 0.0
    %1012 = vmatprep.subr.mxu0 0.0
    %1013 = vmatpush1.msra.mxu0 0.0
    %1014 = vmatprep.subr.mxu0 0.0
    %1015 = vmatpush1.msra.mxu0 0.0
    %1016 = vmatprep.subr.mxu0 0.0
    %1017 = vmatpush1.msra.mxu0 0.0
    %1018 = vmatprep.subr.mxu0 0.0
    %1019 = vmatpush1.msra.mxu0 0.0
    %1020 = vmatprep.subr.mxu0 0.0
    %1021 = vmatpush1.msra.mxu0 0.0
    %1022 = vmatprep.subr.mxu0 0.0
    %1023 = vmatpush1.msra.mxu0 0.0
    %1024 = vmatprep.subr.mxu0 0.0
    %1025 = vmatpush1.msra.mxu0 0.0
    %1026 = vmatprep.subr.mxu0 0.0
    %1027 = vmatpush1.msra.mxu0 0.0
    %1028 = vmatprep.subr.mxu0 0.0
    %1029 = vmatpush1.msra.mxu0 0.0
    %1030 = vmatprep.mubr.f32.mxu0 0.0
    %1031 = vmatmul.mubr.f32.gmra.mrb[0].mxu0 %v964
    %v1032 = vpop.f32.mrb[0].mxu0
    %v1033 = vadd.f32 0.0, %v1032
    %v1034 = vpop.f32.mrb[0].mxu0
    %1035 = vdwg.mxu0
    %1036 = vrot.lane.b32.xlu0 %v361, 112
    %v1037 = vpop.permute.xlu0 %1036
    %1038 = vrot.lane.b32.xlu0 %v353, 80
    %v1039 = vpop.permute.xlu0 %1038
    %v1040 = vsel %vm378, %v1037, 0
    %v1042 = vsel %vm378, %v1039, 0
    %1044 = vmatprep.subr.mxu0 0.0
    %1045 = vmatpush1.xpose.msra.mxu0 %v1042
    %1046 = vmatprep.subr.mxu0 0.0
    %1047 = vmatpush1.xpose.msra.mxu0 0.0
    %1048 = vmatprep.subr.mxu0 0.0
    %1049 = vmatpush1.xpose.msra.mxu0 0.0
    %1050 = vmatprep.subr.mxu0 0.0
    %1051 = vmatpush1.xpose.msra.mxu0 0.0
    %1052 = vmatprep.subr.mxu0 0.0
    %1053 = vmatpush1.xpose.msra.mxu0 0.0
    %1054 = vmatprep.subr.mxu0 0.0
    %1055 = vmatpush1.xpose.msra.mxu0 0.0
    %1056 = vmatprep.subr.mxu0 0.0
    %1057 = vmatpush1.xpose.msra.mxu0 0.0
    %1058 = vmatprep.subr.mxu0 0.0
    %1059 = vmatpush1.xpose.msra.mxu0 0.0
    %1060 = vmatprep.subr.mxu0 0.0
    %1061 = vmatpush1.xpose.msra.mxu0 0.0
    %1062 = vmatprep.subr.mxu0 0.0
    %1063 = vmatpush1.xpose.msra.mxu0 0.0
    %1064 = vmatprep.subr.mxu0 0.0
    %1065 = vmatpush1.xpose.msra.mxu0 0.0
    %1066 = vmatprep.subr.mxu0 0.0
    %1067 = vmatpush1.xpose.msra.mxu0 0.0
    %1068 = vmatprep.subr.mxu0 0.0
    %1069 = vmatpush1.xpose.msra.mxu0 0.0
    %1070 = vmatprep.subr.mxu0 0.0
    %1071 = vmatpush1.xpose.msra.mxu0 0.0
    %1072 = vmatprep.subr.mxu0 0.0
    %1073 = vmatpush1.xpose.msra.mxu0 0.0
    %1074 = vmatprep.subr.mxu0 0.0
    %1075 = vmatpush1.xpose.msra.mxu0 0.0
    %1076 = vmatprep.subr.mxu0 0.0
    %1077 = vmatpush1.xpose.msra.mxu0 0.0
    %1078 = vmatprep.subr.mxu0 0.0
    %1079 = vmatpush1.xpose.msra.mxu0 0.0
    %1080 = vmatprep.subr.mxu0 0.0
    %1081 = vmatpush1.xpose.msra.mxu0 0.0
    %1082 = vmatprep.subr.mxu0 0.0
    %1083 = vmatpush1.xpose.msra.mxu0 0.0
    %1084 = vmatprep.subr.mxu0 0.0
    %1085 = vmatpush1.xpose.msra.mxu0 0.0
    %1086 = vmatprep.subr.mxu0 0.0
    %1087 = vmatpush1.xpose.msra.mxu0 0.0
    %1088 = vmatprep.subr.mxu0 0.0
    %1089 = vmatpush1.xpose.msra.mxu0 0.0
    %1090 = vmatprep.subr.mxu0 0.0
    %1091 = vmatpush1.xpose.msra.mxu0 0.0
    %1092 = vmatprep.subr.mxu0 0.0
    %1093 = vmatpush1.xpose.msra.mxu0 0.0
    %1094 = vmatprep.subr.mxu0 0.0
    %1095 = vmatpush1.xpose.msra.mxu0 0.0
    %1096 = vmatprep.subr.mxu0 0.0
    %1097 = vmatpush1.xpose.msra.mxu0 0.0
    %1098 = vmatprep.subr.mxu0 0.0
    %1099 = vmatpush1.xpose.msra.mxu0 0.0
    %1100 = vmatprep.subr.mxu0 0.0
    %1101 = vmatpush1.xpose.msra.mxu0 0.0
    %1102 = vmatprep.subr.mxu0 0.0
    %1103 = vmatpush1.xpose.msra.mxu0 0.0
    %1104 = vmatprep.subr.mxu0 0.0
    %1105 = vmatpush1.xpose.msra.mxu0 0.0
    %1106 = vmatprep.subr.mxu0 0.0
    %1107 = vmatpush1.xpose.msra.mxu0 0.0
    %1108 = vmatprep.mubr.f32.mxu0 0.0
    %1109 = vmatmul.mubr.f32.gmra.mrb[0].mxu0 %v1040
    %v1110 = vpop.f32.mrb[0].mxu0
    %v1111 = vadd.f32 %v368, %v1110
    %v1112 = vpop.f32.mrb[0].mxu0
    %1113 = vdwg.mxu0
    %1114 = vrot.lane.b32.xlu0 %v362, 112
    %v1115 = vpop.permute.xlu0 %1114
    %1116 = vrot.lane.b32.xlu0 %v358, 80
    %v1117 = vpop.permute.xlu0 %1116
    %v1118 = vsel %vm378, %v1115, 0
    %v1120 = vsel %vm378, %v1117, 0
    %1122 = vmatprep.subr.mxu0 0.0
    %1123 = vmatpush1.xpose.msra.mxu0 %v1120
    %1124 = vmatprep.subr.mxu0 0.0
    %1125 = vmatpush1.xpose.msra.mxu0 0.0
    %1126 = vmatprep.subr.mxu0 0.0
    %1127 = vmatpush1.xpose.msra.mxu0 0.0
    %1128 = vmatprep.subr.mxu0 0.0
    %1129 = vmatpush1.xpose.msra.mxu0 0.0
    %1130 = vmatprep.subr.mxu0 0.0
    %1131 = vmatpush1.xpose.msra.mxu0 0.0
    %1132 = vmatprep.subr.mxu0 0.0
    %1133 = vmatpush1.xpose.msra.mxu0 0.0
    %1134 = vmatprep.subr.mxu0 0.0
    %1135 = vmatpush1.xpose.msra.mxu0 0.0
    %1136 = vmatprep.subr.mxu0 0.0
    %1137 = vmatpush1.xpose.msra.mxu0 0.0
    %1138 = vmatprep.subr.mxu0 0.0
    %1139 = vmatpush1.xpose.msra.mxu0 0.0
    %1140 = vmatprep.subr.mxu0 0.0
    %1141 = vmatpush1.xpose.msra.mxu0 0.0
    %1142 = vmatprep.subr.mxu0 0.0
    %1143 = vmatpush1.xpose.msra.mxu0 0.0
    %1144 = vmatprep.subr.mxu0 0.0
    %1145 = vmatpush1.xpose.msra.mxu0 0.0
    %1146 = vmatprep.subr.mxu0 0.0
    %1147 = vmatpush1.xpose.msra.mxu0 0.0
    %1148 = vmatprep.subr.mxu0 0.0
    %1149 = vmatpush1.xpose.msra.mxu0 0.0
    %1150 = vmatprep.subr.mxu0 0.0
    %1151 = vmatpush1.xpose.msra.mxu0 0.0
    %1152 = vmatprep.subr.mxu0 0.0
    %1153 = vmatpush1.xpose.msra.mxu0 0.0
    %1154 = vmatprep.subr.mxu0 0.0
    %1155 = vmatpush1.xpose.msra.mxu0 0.0
    %1156 = vmatprep.subr.mxu0 0.0
    %1157 = vmatpush1.xpose.msra.mxu0 0.0
    %1158 = vmatprep.subr.mxu0 0.0
    %1159 = vmatpush1.xpose.msra.mxu0 0.0
    %1160 = vmatprep.subr.mxu0 0.0
    %1161 = vmatpush1.xpose.msra.mxu0 0.0
    %1162 = vmatprep.subr.mxu0 0.0
    %1163 = vmatpush1.xpose.msra.mxu0 0.0
    %1164 = vmatprep.subr.mxu0 0.0
    %1165 = vmatpush1.xpose.msra.mxu0 0.0
    %1166 = vmatprep.subr.mxu0 0.0
    %1167 = vmatpush1.xpose.msra.mxu0 0.0
    %1168 = vmatprep.subr.mxu0 0.0
    %1169 = vmatpush1.xpose.msra.mxu0 0.0
    %1170 = vmatprep.subr.mxu0 0.0
    %1171 = vmatpush1.xpose.msra.mxu0 0.0
    %1172 = vmatprep.subr.mxu0 0.0
    %1173 = vmatpush1.xpose.msra.mxu0 0.0
    %1174 = vmatprep.subr.mxu0 0.0
    %1175 = vmatpush1.xpose.msra.mxu0 0.0
    %1176 = vmatprep.subr.mxu0 0.0
    %1177 = vmatpush1.xpose.msra.mxu0 0.0
    %1178 = vmatprep.subr.mxu0 0.0
    %1179 = vmatpush1.xpose.msra.mxu0 0.0
    %1180 = vmatprep.subr.mxu0 0.0
    %1181 = vmatpush1.xpose.msra.mxu0 0.0
    %1182 = vmatprep.subr.mxu0 0.0
    %1183 = vmatpush1.xpose.msra.mxu0 0.0
    %1184 = vmatprep.subr.mxu0 0.0
    %1185 = vmatpush1.xpose.msra.mxu0 0.0
    %1186 = vmatprep.mubr.f32.mxu0 0.0
    %1187 = vmatmul.mubr.f32.gmra.mrb[0].mxu0 %v1118
    %v1188 = vpop.f32.mrb[0].mxu0
    %v1189 = vadd.f32 %v372, %v1188
    %v1190 = vpop.f32.mrb[0].mxu0
    %1191 = vdwg.mxu0
    %v1192 = vsel %vm378, %v1111, -inf
    %1193 = vmax.xlane.f32.xlu0 %v1192
    %v1194 = vpop.xlane.xlu0 %1193
    %v1195 = vsel %vm378, %v1189, -inf
    %1196 = vmax.xlane.f32.xlu0 %v1195
    %v1197 = vpop.xlane.xlu0 %1196
    %v1198 = vsub.f32 %v1111, %v1194
    %v1199 = vsub.f32 %v1189, %v1197
    %v1200 = vmul.f32 %v1198, 1.442695
    %v1201 = vpow.pop %v1200
    %v1202 = vmul.f32 %v1199, 1.442695
    %v1203 = vpow.pop %v1202
    %v1204 = vsel %vm378, %v1201, 0.0
    %1205 = vadd.xlane.f32.xlu0 %v1204
    %v1206 = vpop.xlane.xlu0 %1205
    %v1207 = vsel %vm378, %v1203, 0.0
    %1208 = vadd.xlane.f32.xlu0 %v1207
    %v1209 = vpop.xlane.xlu0 %1208
    %v1210 = vrcp.pop %v1206
    %v1211 = vrcp.pop %v1209
    %v1212 = vmul.f32 %v1201, %v1210
    %v1213 = vmul.f32 %v1203, %v1211
    %1214 = vrot.lane.b32.xlu0 %v353, 48
    %v1215 = vpop.permute.xlu0 %1214
    %v1218 = vsel %vm378, %v1212, 0
    %1220 = vmatprep.subr.mxu0 0.0
    %1221 = vmatpush1.msra.mxu0 %v1215
    %1222 = vmatprep.subr.mxu0 0.0
    %1223 = vmatpush1.msra.mxu0 0.0
    %1224 = vmatprep.subr.mxu0 0.0
    %1225 = vmatpush1.msra.mxu0 0.0
    %1226 = vmatprep.subr.mxu0 0.0
    %1227 = vmatpush1.msra.mxu0 0.0
    %1228 = vmatprep.subr.mxu0 0.0
    %1229 = vmatpush1.msra.mxu0 0.0
    %1230 = vmatprep.subr.mxu0 0.0
    %1231 = vmatpush1.msra.mxu0 0.0
    %1232 = vmatprep.subr.mxu0 0.0
    %1233 = vmatpush1.msra.mxu0 0.0
    %1234 = vmatprep.subr.mxu0 0.0
    %1235 = vmatpush1.msra.mxu0 0.0
    %1236 = vmatprep.subr.mxu0 0.0
    %1237 = vmatpush1.msra.mxu0 0.0
    %1238 = vmatprep.subr.mxu0 0.0
    %1239 = vmatpush1.msra.mxu0 0.0
    %1240 = vmatprep.subr.mxu0 0.0
    %1241 = vmatpush1.msra.mxu0 0.0
    %1242 = vmatprep.subr.mxu0 0.0
    %1243 = vmatpush1.msra.mxu0 0.0
    %1244 = vmatprep.subr.mxu0 0.0
    %1245 = vmatpush1.msra.mxu0 0.0
    %1246 = vmatprep.subr.mxu0 0.0
    %1247 = vmatpush1.msra.mxu0 0.0
    %1248 = vmatprep.subr.mxu0 0.0
    %1249 = vmatpush1.msra.mxu0 0.0
    %1250 = vmatprep.subr.mxu0 0.0
    %1251 = vmatpush1.msra.mxu0 0.0
    %1252 = vmatprep.subr.mxu0 0.0
    %1253 = vmatpush1.msra.mxu0 0.0
    %1254 = vmatprep.subr.mxu0 0.0
    %1255 = vmatpush1.msra.mxu0 0.0
    %1256 = vmatprep.subr.mxu0 0.0
    %1257 = vmatpush1.msra.mxu0 0.0
    %1258 = vmatprep.subr.mxu0 0.0
    %1259 = vmatpush1.msra.mxu0 0.0
    %1260 = vmatprep.subr.mxu0 0.0
    %1261 = vmatpush1.msra.mxu0 0.0
    %1262 = vmatprep.subr.mxu0 0.0
    %1263 = vmatpush1.msra.mxu0 0.0
    %1264 = vmatprep.subr.mxu0 0.0
    %1265 = vmatpush1.msra.mxu0 0.0
    %1266 = vmatprep.subr.mxu0 0.0
    %1267 = vmatpush1.msra.mxu0 0.0
    %1268 = vmatprep.subr.mxu0 0.0
    %1269 = vmatpush1.msra.mxu0 0.0
    %1270 = vmatprep.subr.mxu0 0.0
    %1271 = vmatpush1.msra.mxu0 0.0
    %1272 = vmatprep.subr.mxu0 0.0
    %1273 = vmatpush1.msra.mxu0 0.0
    %1274 = vmatprep.subr.mxu0 0.0
    %1275 = vmatpush1.msra.mxu0 0.0
    %1276 = vmatprep.subr.mxu0 0.0
    %1277 = vmatpush1.msra.mxu0 0.0
    %1278 = vmatprep.subr.mxu0 0.0
    %1279 = vmatpush1.msra.mxu0 0.0
    %1280 = vmatprep.subr.mxu0 0.0
    %1281 = vmatpush1.msra.mxu0 0.0
    %1282 = vmatprep.subr.mxu0 0.0
    %1283 = vmatpush1.msra.mxu0 0.0
    %1284 = vmatprep.mubr.f32.mxu0 0.0
    %1285 = vmatmul.mubr.f32.gmra.mrb[0].mxu0 %v1218
    %v1286 = vpop.f32.mrb[0].mxu0
    %v1287 = vadd.f32 0.0, %v1286
    %v1288 = vpop.f32.mrb[0].mxu0
    %1289 = vdwg.mxu0
    %1290 = vrot.lane.b32.xlu0 %v358, 48
    %v1291 = vpop.permute.xlu0 %1290
    %v1294 = vsel %vm378, %v1213, 0
    %1296 = vmatprep.subr.mxu0 0.0
    %1297 = vmatpush1.msra.mxu0 %v1291
    %1298 = vmatprep.subr.mxu0 0.0
    %1299 = vmatpush1.msra.mxu0 0.0
    %1300 = vmatprep.subr.mxu0 0.0
    %1301 = vmatpush1.msra.mxu0 0.0
    %1302 = vmatprep.subr.mxu0 0.0
    %1303 = vmatpush1.msra.mxu0 0.0
    %1304 = vmatprep.subr.mxu0 0.0
    %1305 = vmatpush1.msra.mxu0 0.0
    %1306 = vmatprep.subr.mxu0 0.0
    %1307 = vmatpush1.msra.mxu0 0.0
    %1308 = vmatprep.subr.mxu0 0.0
    %1309 = vmatpush1.msra.mxu0 0.0
    %1310 = vmatprep.subr.mxu0 0.0
    %1311 = vmatpush1.msra.mxu0 0.0
    %1312 = vmatprep.subr.mxu0 0.0
    %1313 = vmatpush1.msra.mxu0 0.0
    %1314 = vmatprep.subr.mxu0 0.0
    %1315 = vmatpush1.msra.mxu0 0.0
    %1316 = vmatprep.subr.mxu0 0.0
    %1317 = vmatpush1.msra.mxu0 0.0
    %1318 = vmatprep.subr.mxu0 0.0
    %1319 = vmatpush1.msra.mxu0 0.0
    %1320 = vmatprep.subr.mxu0 0.0
    %1321 = vmatpush1.msra.mxu0 0.0
    %1322 = vmatprep.subr.mxu0 0.0
    %1323 = vmatpush1.msra.mxu0 0.0
    %1324 = vmatprep.subr.mxu0 0.0
    %1325 = vmatpush1.msra.mxu0 0.0
    %1326 = vmatprep.subr.mxu0 0.0
    %1327 = vmatpush1.msra.mxu0 0.0
    %1328 = vmatprep.subr.mxu0 0.0
    %1329 = vmatpush1.msra.mxu0 0.0
    %1330 = vmatprep.subr.mxu0 0.0
    %1331 = vmatpush1.msra.mxu0 0.0
    %1332 = vmatprep.subr.mxu0 0.0
    %1333 = vmatpush1.msra.mxu0 0.0
    %1334 = vmatprep.subr.mxu0 0.0
    %1335 = vmatpush1.msra.mxu0 0.0
    %1336 = vmatprep.subr.mxu0 0.0
    %1337 = vmatpush1.msra.mxu0 0.0
    %1338 = vmatprep.subr.mxu0 0.0
    %1339 = vmatpush1.msra.mxu0 0.0
    %1340 = vmatprep.subr.mxu0 0.0
    %1341 = vmatpush1.msra.mxu0 0.0
    %1342 = vmatprep.subr.mxu0 0.0
    %1343 = vmatpush1.msra.mxu0 0.0
    %1344 = vmatprep.subr.mxu0 0.0
    %1345 = vmatpush1.msra.mxu0 0.0
    %1346 = vmatprep.subr.mxu0 0.0
    %1347 = vmatpush1.msra.mxu0 0.0
    %1348 = vmatprep.subr.mxu0 0.0
    %1349 = vmatpush1.msra.mxu0 0.0
    %1350 = vmatprep.subr.mxu0 0.0
    %1351 = vmatpush1.msra.mxu0 0.0
    %1352 = vmatprep.subr.mxu0 0.0
    %1353 = vmatpush1.msra.mxu0 0.0
    %1354 = vmatprep.subr.mxu0 0.0
    %1355 = vmatpush1.msra.mxu0 0.0
    %1356 = vmatprep.subr.mxu0 0.0
    %1357 = vmatpush1.msra.mxu0 0.0
    %1358 = vmatprep.subr.mxu0 0.0
    %1359 = vmatpush1.msra.mxu0 0.0
    %1360 = vmatprep.mubr.f32.mxu0 0.0
    %1361 = vmatmul.mubr.f32.gmra.mrb[0].mxu0 %v1294
    %v1362 = vpop.f32.mrb[0].mxu0
    %v1363 = vadd.f32 0.0, %v1362
    %v1364 = vpop.f32.mrb[0].mxu0
    %1365 = vdwg.mxu0
    %1366 = vrot.lane.b32.xlu0 %v361, 104
    %v1367 = vpop.permute.xlu0 %1366
    %1368 = vrot.lane.b32.xlu0 %v353, 72
    %v1369 = vpop.permute.xlu0 %1368
    %v1370 = vsel %vm378, %v1367, 0
    %v1372 = vsel %vm378, %v1369, 0
    %1374 = vmatprep.subr.mxu0 0.0
    %1375 = vmatpush1.xpose.msra.mxu0 %v1372
    %1376 = vmatprep.subr.mxu0 0.0
    %1377 = vmatpush1.xpose.msra.mxu0 0.0
    %1378 = vmatprep.subr.mxu0 0.0
    %1379 = vmatpush1.xpose.msra.mxu0 0.0
    %1380 = vmatprep.subr.mxu0 0.0
    %1381 = vmatpush1.xpose.msra.mxu0 0.0
    %1382 = vmatprep.subr.mxu0 0.0
    %1383 = vmatpush1.xpose.msra.mxu0 0.0
    %1384 = vmatprep.subr.mxu0 0.0
    %1385 = vmatpush1.xpose.msra.mxu0 0.0
    %1386 = vmatprep.subr.mxu0 0.0
    %1387 = vmatpush1.xpose.msra.mxu0 0.0
    %1388 = vmatprep.subr.mxu0 0.0
    %1389 = vmatpush1.xpose.msra.mxu0 0.0
    %1390 = vmatprep.subr.mxu0 0.0
    %1391 = vmatpush1.xpose.msra.mxu0 0.0
    %1392 = vmatprep.subr.mxu0 0.0
    %1393 = vmatpush1.xpose.msra.mxu0 0.0
    %1394 = vmatprep.subr.mxu0 0.0
    %1395 = vmatpush1.xpose.msra.mxu0 0.0
    %1396 = vmatprep.subr.mxu0 0.0
    %1397 = vmatpush1.xpose.msra.mxu0 0.0
    %1398 = vmatprep.subr.mxu0 0.0
    %1399 = vmatpush1.xpose.msra.mxu0 0.0
    %1400 = vmatprep.subr.mxu0 0.0
    %1401 = vmatpush1.xpose.msra.mxu0 0.0
    %1402 = vmatprep.subr.mxu0 0.0
    %1403 = vmatpush1.xpose.msra.mxu0 0.0
    %1404 = vmatprep.subr.mxu0 0.0
    %1405 = vmatpush1.xpose.msra.mxu0 0.0
    %1406 = vmatprep.subr.mxu0 0.0
    %1407 = vmatpush1.xpose.msra.mxu0 0.0
    %1408 = vmatprep.subr.mxu0 0.0
    %1409 = vmatpush1.xpose.msra.mxu0 0.0
    %1410 = vmatprep.subr.mxu0 0.0
    %1411 = vmatpush1.xpose.msra.mxu0 0.0
    %1412 = vmatprep.subr.mxu0 0.0
    %1413 = vmatpush1.xpose.msra.mxu0 0.0
    %1414 = vmatprep.subr.mxu0 0.0
    %1415 = vmatpush1.xpose.msra.mxu0 0.0
    %1416 = vmatprep.subr.mxu0 0.0
    %1417 = vmatpush1.xpose.msra.mxu0 0.0
    %1418 = vmatprep.subr.mxu0 0.0
    %1419 = vmatpush1.xpose.msra.mxu0 0.0
    %1420 = vmatprep.subr.mxu0 0.0
    %1421 = vmatpush1.xpose.msra.mxu0 0.0
    %1422 = vmatprep.subr.mxu0 0.0
    %1423 = vmatpush1.xpose.msra.mxu0 0.0
    %1424 = vmatprep.subr.mxu0 0.0
    %1425 = vmatpush1.xpose.msra.mxu0 0.0
    %1426 = vmatprep.subr.mxu0 0.0
    %1427 = vmatpush1.xpose.msra.mxu0 0.0
    %1428 = vmatprep.subr.mxu0 0.0
    %1429 = vmatpush1.xpose.msra.mxu0 0.0
    %1430 = vmatprep.subr.mxu0 0.0
    %1431 = vmatpush1.xpose.msra.mxu0 0.0
    %1432 = vmatprep.subr.mxu0 0.0
    %1433 = vmatpush1.xpose.msra.mxu0 0.0
    %1434 = vmatprep.subr.mxu0 0.0
    %1435 = vmatpush1.xpose.msra.mxu0 0.0
    %1436 = vmatprep.subr.mxu0 0.0
    %1437 = vmatpush1.xpose.msra.mxu0 0.0
    %1438 = vmatprep.mubr.f32.mxu0 0.0
    %1439 = vmatmul.mubr.f32.gmra.mrb[0].mxu0 %v1370
    %v1440 = vpop.f32.mrb[0].mxu0
    %v1441 = vadd.f32 %v368, %v1440
    %v1442 = vpop.f32.mrb[0].mxu0
    %1443 = vdwg.mxu0
    %1444 = vrot.lane.b32.xlu0 %v362, 104
    %v1445 = vpop.permute.xlu0 %1444
    %1446 = vrot.lane.b32.xlu0 %v358, 72
    %v1447 = vpop.permute.xlu0 %1446
    %v1448 = vsel %vm378, %v1445, 0
    %v1450 = vsel %vm378, %v1447, 0
    %1452 = vmatprep.subr.mxu0 0.0
    %1453 = vmatpush1.xpose.msra.mxu0 %v1450
    %1454 = vmatprep.subr.mxu0 0.0
    %1455 = vmatpush1.xpose.msra.mxu0 0.0
    %1456 = vmatprep.subr.mxu0 0.0
    %1457 = vmatpush1.xpose.msra.mxu0 0.0
    %1458 = vmatprep.subr.mxu0 0.0
    %1459 = vmatpush1.xpose.msra.mxu0 0.0
    %1460 = vmatprep.subr.mxu0 0.0
    %1461 = vmatpush1.xpose.msra.mxu0 0.0
    %1462 = vmatprep.subr.mxu0 0.0
    %1463 = vmatpush1.xpose.msra.mxu0 0.0
    %1464 = vmatprep.subr.mxu0 0.0
    %1465 = vmatpush1.xpose.msra.mxu0 0.0
    %1466 = vmatprep.subr.mxu0 0.0
    %1467 = vmatpush1.xpose.msra.mxu0 0.0
    %1468 = vmatprep.subr.mxu0 0.0
    %1469 = vmatpush1.xpose.msra.mxu0 0.0
    %1470 = vmatprep.subr.mxu0 0.0
    %1471 = vmatpush1.xpose.msra.mxu0 0.0
    %1472 = vmatprep.subr.mxu0 0.0
    %1473 = vmatpush1.xpose.msra.mxu0 0.0
    %1474 = vmatprep.subr.mxu0 0.0
    %1475 = vmatpush1.xpose.msra.mxu0 0.0
    %1476 = vmatprep.subr.mxu0 0.0
    %1477 = vmatpush1.xpose.msra.mxu0 0.0
    %1478 = vmatprep.subr.mxu0 0.0
    %1479 = vmatpush1.xpose.msra.mxu0 0.0
    %1480 = vmatprep.subr.mxu0 0.0
    %1481 = vmatpush1.xpose.msra.mxu0 0.0
    %1482 = vmatprep.subr.mxu0 0.0
    %1483 = vmatpush1.xpose.msra.mxu0 0.0
    %1484 = vmatprep.subr.mxu0 0.0
    %1485 = vmatpush1.xpose.msra.mxu0 0.0
    %1486 = vmatprep.subr.mxu0 0.0
    %1487 = vmatpush1.xpose.msra.mxu0 0.0
    %1488 = vmatprep.subr.mxu0 0.0
    %1489 = vmatpush1.xpose.msra.mxu0 0.0
    %1490 = vmatprep.subr.mxu0 0.0
    %1491 = vmatpush1.xpose.msra.mxu0 0.0
    %1492 = vmatprep.subr.mxu0 0.0
    %1493 = vmatpush1.xpose.msra.mxu0 0.0
    %1494 = vmatprep.subr.mxu0 0.0
    %1495 = vmatpush1.xpose.msra.mxu0 0.0
    %1496 = vmatprep.subr.mxu0 0.0
    %1497 = vmatpush1.xpose.msra.mxu0 0.0
    %1498 = vmatprep.subr.mxu0 0.0
    %1499 = vmatpush1.xpose.msra.mxu0 0.0
    %1500 = vmatprep.subr.mxu0 0.0
    %1501 = vmatpush1.xpose.msra.mxu0 0.0
    %1502 = vmatprep.subr.mxu0 0.0
    %1503 = vmatpush1.xpose.msra.mxu0 0.0
    %1504 = vmatprep.subr.mxu0 0.0
    %1505 = vmatpush1.xpose.msra.mxu0 0.0
    %1506 = vmatprep.subr.mxu0 0.0
    %1507 = vmatpush1.xpose.msra.mxu0 0.0
    %1508 = vmatprep.subr.mxu0 0.0
    %1509 = vmatpush1.xpose.msra.mxu0 0.0
    %1510 = vmatprep.subr.mxu0 0.0
    %1511 = vmatpush1.xpose.msra.mxu0 0.0
    %1512 = vmatprep.subr.mxu0 0.0
    %1513 = vmatpush1.xpose.msra.mxu0 0.0
    %1514 = vmatprep.subr.mxu0 0.0
    %1515 = vmatpush1.xpose.msra.mxu0 0.0
    %1516 = vmatprep.mubr.f32.mxu0 0.0
    %1517 = vmatmul.mubr.f32.gmra.mrb[0].mxu0 %v1448
    %v1518 = vpop.f32.mrb[0].mxu0
    %v1519 = vadd.f32 %v372, %v1518
    %v1520 = vpop.f32.mrb[0].mxu0
    %1521 = vdwg.mxu0
    %v1522 = vsel %vm378, %v1441, -inf
    %1523 = vmax.xlane.f32.xlu0 %v1522
    %v1524 = vpop.xlane.xlu0 %1523
    %v1525 = vsel %vm378, %v1519, -inf
    %1526 = vmax.xlane.f32.xlu0 %v1525
    %v1527 = vpop.xlane.xlu0 %1526
    %v1528 = vsub.f32 %v1441, %v1524
    %v1529 = vsub.f32 %v1519, %v1527
    %v1530 = vmul.f32 %v1528, 1.442695
    %v1531 = vpow.pop %v1530
    %v1532 = vmul.f32 %v1529, 1.442695
    %v1533 = vpow.pop %v1532
    %v1534 = vsel %vm378, %v1531, 0.0
    %1535 = vadd.xlane.f32.xlu0 %v1534
    %v1536 = vpop.xlane.xlu0 %1535
    %v1537 = vsel %vm378, %v1533, 0.0
    %1538 = vadd.xlane.f32.xlu0 %v1537
    %v1539 = vpop.xlane.xlu0 %1538
    %v1540 = vrcp.pop %v1536
    %v1541 = vrcp.pop %v1539
    %v1542 = vmul.f32 %v1531, %v1540
    %v1543 = vmul.f32 %v1533, %v1541
    %1544 = vrot.lane.b32.xlu0 %v353, 40
    %v1545 = vpop.permute.xlu0 %1544
    %v1548 = vsel %vm378, %v1542, 0
    %1550 = vmatprep.subr.mxu0 0.0
    %1551 = vmatpush1.msra.mxu0 %v1545
    %1552 = vmatprep.subr.mxu0 0.0
    %1553 = vmatpush1.msra.mxu0 0.0
    %1554 = vmatprep.subr.mxu0 0.0
    %1555 = vmatpush1.msra.mxu0 0.0
    %1556 = vmatprep.subr.mxu0 0.0
    %1557 = vmatpush1.msra.mxu0 0.0
    %1558 = vmatprep.subr.mxu0 0.0
    %1559 = vmatpush1.msra.mxu0 0.0
    %1560 = vmatprep.subr.mxu0 0.0
    %1561 = vmatpush1.msra.mxu0 0.0
    %1562 = vmatprep.subr.mxu0 0.0
    %1563 = vmatpush1.msra.mxu0 0.0
    %1564 = vmatprep.subr.mxu0 0.0
    %1565 = vmatpush1.msra.mxu0 0.0
    %1566 = vmatprep.subr.mxu0 0.0
    %1567 = vmatpush1.msra.mxu0 0.0
    %1568 = vmatprep.subr.mxu0 0.0
    %1569 = vmatpush1.msra.mxu0 0.0
    %1570 = vmatprep.subr.mxu0 0.0
    %1571 = vmatpush1.msra.mxu0 0.0
    %1572 = vmatprep.subr.mxu0 0.0
    %1573 = vmatpush1.msra.mxu0 0.0
    %1574 = vmatprep.subr.mxu0 0.0
    %1575 = vmatpush1.msra.mxu0 0.0
    %1576 = vmatprep.subr.mxu0 0.0
    %1577 = vmatpush1.msra.mxu0 0.0
    %1578 = vmatprep.subr.mxu0 0.0
    %1579 = vmatpush1.msra.mxu0 0.0
    %1580 = vmatprep.subr.mxu0 0.0
    %1581 = vmatpush1.msra.mxu0 0.0
    %1582 = vmatprep.subr.mxu0 0.0
    %1583 = vmatpush1.msra.mxu0 0.0
    %1584 = vmatprep.subr.mxu0 0.0
    %1585 = vmatpush1.msra.mxu0 0.0
    %1586 = vmatprep.subr.mxu0 0.0
    %1587 = vmatpush1.msra.mxu0 0.0
    %1588 = vmatprep.subr.mxu0 0.0
    %1589 = vmatpush1.msra.mxu0 0.0
    %1590 = vmatprep.subr.mxu0 0.0
    %1591 = vmatpush1.msra.mxu0 0.0
    %1592 = vmatprep.subr.mxu0 0.0
    %1593 = vmatpush1.msra.mxu0 0.0
    %1594 = vmatprep.subr.mxu0 0.0
    %1595 = vmatpush1.msra.mxu0 0.0
    %1596 = vmatprep.subr.mxu0 0.0
    %1597 = vmatpush1.msra.mxu0 0.0
    %1598 = vmatprep.subr.mxu0 0.0
    %1599 = vmatpush1.msra.mxu0 0.0
    %1600 = vmatprep.subr.mxu0 0.0
    %1601 = vmatpush1.msra.mxu0 0.0
    %1602 = vmatprep.subr.mxu0 0.0
    %1603 = vmatpush1.msra.mxu0 0.0
    %1604 = vmatprep.subr.mxu0 0.0
    %1605 = vmatpush1.msra.mxu0 0.0
    %1606 = vmatprep.subr.mxu0 0.0
    %1607 = vmatpush1.msra.mxu0 0.0
    %1608 = vmatprep.subr.mxu0 0.0
    %1609 = vmatpush1.msra.mxu0 0.0
    %1610 = vmatprep.subr.mxu0 0.0
    %1611 = vmatpush1.msra.mxu0 0.0
    %1612 = vmatprep.subr.mxu0 0.0
    %1613 = vmatpush1.msra.mxu0 0.0
    %1614 = vmatprep.mubr.f32.mxu0 0.0
    %1615 = vmatmul.mubr.f32.gmra.mrb[0].mxu0 %v1548
    %v1616 = vpop.f32.mrb[0].mxu0
    %v1617 = vadd.f32 0.0, %v1616
    %v1618 = vpop.f32.mrb[0].mxu0
    %1619 = vdwg.mxu0
    %1620 = vrot.lane.b32.xlu0 %v358, 40
    %v1621 = vpop.permute.xlu0 %1620
    %v1624 = vsel %vm378, %v1543, 0
    %1626 = vmatprep.subr.mxu0 0.0
    %1627 = vmatpush1.msra.mxu0 %v1621
    %1628 = vmatprep.subr.mxu0 0.0
    %1629 = vmatpush1.msra.mxu0 0.0
    %1630 = vmatprep.subr.mxu0 0.0
    %1631 = vmatpush1.msra.mxu0 0.0
    %1632 = vmatprep.subr.mxu0 0.0
    %1633 = vmatpush1.msra.mxu0 0.0
    %1634 = vmatprep.subr.mxu0 0.0
    %1635 = vmatpush1.msra.mxu0 0.0
    %1636 = vmatprep.subr.mxu0 0.0
    %1637 = vmatpush1.msra.mxu0 0.0
    %1638 = vmatprep.subr.mxu0 0.0
    %1639 = vmatpush1.msra.mxu0 0.0
    %1640 = vmatprep.subr.mxu0 0.0
    %1641 = vmatpush1.msra.mxu0 0.0
    %1642 = vmatprep.subr.mxu0 0.0
    %1643 = vmatpush1.msra.mxu0 0.0
    %1644 = vmatprep.subr.mxu0 0.0
    %1645 = vmatpush1.msra.mxu0 0.0
    %1646 = vmatprep.subr.mxu0 0.0
    %1647 = vmatpush1.msra.mxu0 0.0
    %1648 = vmatprep.subr.mxu0 0.0
    %1649 = vmatpush1.msra.mxu0 0.0
    %1650 = vmatprep.subr.mxu0 0.0
    %1651 = vmatpush1.msra.mxu0 0.0
    %1652 = vmatprep.subr.mxu0 0.0
    %1653 = vmatpush1.msra.mxu0 0.0
    %1654 = vmatprep.subr.mxu0 0.0
    %1655 = vmatpush1.msra.mxu0 0.0
    %1656 = vmatprep.subr.mxu0 0.0
    %1657 = vmatpush1.msra.mxu0 0.0
    %1658 = vmatprep.subr.mxu0 0.0
    %1659 = vmatpush1.msra.mxu0 0.0
    %1660 = vmatprep.subr.mxu0 0.0
    %1661 = vmatpush1.msra.mxu0 0.0
    %1662 = vmatprep.subr.mxu0 0.0
    %1663 = vmatpush1.msra.mxu0 0.0
    %1664 = vmatprep.subr.mxu0 0.0
    %1665 = vmatpush1.msra.mxu0 0.0
    %1666 = vmatprep.subr.mxu0 0.0
    %1667 = vmatpush1.msra.mxu0 0.0
    %1668 = vmatprep.subr.mxu0 0.0
    %1669 = vmatpush1.msra.mxu0 0.0
    %1670 = vmatprep.subr.mxu0 0.0
    %1671 = vmatpush1.msra.mxu0 0.0
    %1672 = vmatprep.subr.mxu0 0.0
    %1673 = vmatpush1.msra.mxu0 0.0
    %1674 = vmatprep.subr.mxu0 0.0
    %1675 = vmatpush1.msra.mxu0 0.0
    %1676 = vmatprep.subr.mxu0 0.0
    %1677 = vmatpush1.msra.mxu0 0.0
    %1678 = vmatprep.subr.mxu0 0.0
    %1679 = vmatpush1.msra.mxu0 0.0
    %1680 = vmatprep.subr.mxu0 0.0
    %1681 = vmatpush1.msra.mxu0 0.0
    %1682 = vmatprep.subr.mxu0 0.0
    %1683 = vmatpush1.msra.mxu0 0.0
    %1684 = vmatprep.subr.mxu0 0.0
    %1685 = vmatpush1.msra.mxu0 0.0
    %1686 = vmatprep.subr.mxu0 0.0
    %1687 = vmatpush1.msra.mxu0 0.0
    %1688 = vmatprep.subr.mxu0 0.0
    %1689 = vmatpush1.msra.mxu0 0.0
    %1690 = vmatprep.mubr.f32.mxu0 0.0
    %1691 = vmatmul.mubr.f32.gmra.mrb[0].mxu0 %v1624
    %v1692 = vpop.f32.mrb[0].mxu0
    %v1693 = vadd.f32 0.0, %v1692
    %v1694 = vpop.f32.mrb[0].mxu0
    %1695 = vdwg.mxu0
    %1698 = vrot.lane.b32.xlu0 %v957, 8
    %v1699 = vpop.permute.xlu0 %1698
    %1700 = vrot.lane.b32.xlu0 %v1033, 8
    %v1701 = vpop.permute.xlu0 %1700
    %1706 = vrot.lane.b32.xlu0 %v1287, 16
    %v1707 = vpop.permute.xlu0 %1706
    %1708 = vrot.lane.b32.xlu0 %v1363, 16
    %v1709 = vpop.permute.xlu0 %1708
    %1714 = vrot.lane.b32.xlu0 %v1617, 24
    %v1715 = vpop.permute.xlu0 %1714
    %1716 = vrot.lane.b32.xlu0 %v1693, 24
    %v1717 = vpop.permute.xlu0 %1716
    %v1720 = vsel %vm378, %v627, %v1699
    %v1721 = vsel %vm378, %v703, %v1701
    %vm1722 = vcmask 130048
    %v1723 = vsel %vm1722, %v1720, %v1707
    %v1724 = vsel %vm1722, %v1721, %v1709
    %vm1725 = vcmask 195584
    %v1726 = vsel %vm1725, %v1723, %v1715
    %v1727 = vsel %vm1725, %v1724, %v1717
    %v1728 = vld [vmem:[%s7] sm:$0xff]
    %v1729 = vld [vmem:[%s7 + $0x8] sm:$0xff]
    %v1730 = vld [vmem:[%s7 + $0x10] sm:$0xff]
    %v1731 = vld [vmem:[%s7 + $0x18] sm:$0xff]
    %v1732 = vld [vmem:[%s8] sm:$0x1]
    %v1734 = vlaneseq
    %v1735 = vshrl.u32 %v1734, 7
    %v1736 = vsub.s32 0, %v1735
    %v1737 = vrot.slane %v1732, %v1736
    %v1740 = vsel %vm219, %v1726, 0
    %v1743 = vsel %vm219, %v1727, 0
    %1745 = vmatprep.subr.mxu0 0.0
    %1746 = vmatpush1.msra.mxu0 %v1728
    %1747 = vmatprep.subr.mxu0 0.0
    %1748 = vmatpush1.msra.mxu0 %v1729
    %1749 = vmatprep.subr.mxu0 0.0
    %1750 = vmatpush1.msra.mxu0 %v1730
    %1751 = vmatprep.subr.mxu0 0.0
    %1752 = vmatpush1.msra.mxu0 %v1731
    %1753 = vmatprep.subr.mxu0 0.0
    %1754 = vmatpush1.msra.mxu0 0.0
    %1755 = vmatprep.subr.mxu0 0.0
    %1756 = vmatpush1.msra.mxu0 0.0
    %1757 = vmatprep.subr.mxu0 0.0
    %1758 = vmatpush1.msra.mxu0 0.0
    %1759 = vmatprep.subr.mxu0 0.0
    %1760 = vmatpush1.msra.mxu0 0.0
    %1761 = vmatprep.subr.mxu0 0.0
    %1762 = vmatpush1.msra.mxu0 0.0
    %1763 = vmatprep.subr.mxu0 0.0
    %1764 = vmatpush1.msra.mxu0 0.0
    %1765 = vmatprep.subr.mxu0 0.0
    %1766 = vmatpush1.msra.mxu0 0.0
    %1767 = vmatprep.subr.mxu0 0.0
    %1768 = vmatpush1.msra.mxu0 0.0
    %1769 = vmatprep.subr.mxu0 0.0
    %1770 = vmatpush1.msra.mxu0 0.0
    %1771 = vmatprep.subr.mxu0 0.0
    %1772 = vmatpush1.msra.mxu0 0.0
    %1773 = vmatprep.subr.mxu0 0.0
    %1774 = vmatpush1.msra.mxu0 0.0
    %1775 = vmatprep.subr.mxu0 0.0
    %1776 = vmatpush1.msra.mxu0 0.0
    %1777 = vmatprep.subr.mxu0 0.0
    %1778 = vmatpush1.msra.mxu0 0.0
    %1779 = vmatprep.subr.mxu0 0.0
    %1780 = vmatpush1.msra.mxu0 0.0
    %1781 = vmatprep.subr.mxu0 0.0
    %1782 = vmatpush1.msra.mxu0 0.0
    %1783 = vmatprep.subr.mxu0 0.0
    %1784 = vmatpush1.msra.mxu0 0.0
    %1785 = vmatprep.subr.mxu0 0.0
    %1786 = vmatpush1.msra.mxu0 0.0
    %1787 = vmatprep.subr.mxu0 0.0
    %1788 = vmatpush1.msra.mxu0 0.0
    %1789 = vmatprep.subr.mxu0 0.0
    %1790 = vmatpush1.msra.mxu0 0.0
    %1791 = vmatprep.subr.mxu0 0.0
    %1792 = vmatpush1.msra.mxu0 0.0
    %1793 = vmatprep.subr.mxu0 0.0
    %1794 = vmatpush1.msra.mxu0 0.0
    %1795 = vmatprep.subr.mxu0 0.0
    %1796 = vmatpush1.msra.mxu0 0.0
    %1797 = vmatprep.subr.mxu0 0.0
    %1798 = vmatpush1.msra.mxu0 0.0
    %1799 = vmatprep.subr.mxu0 0.0
    %1800 = vmatpush1.msra.mxu0 0.0
    %1801 = vmatprep.subr.mxu0 0.0
    %1802 = vmatpush1.msra.mxu0 0.0
    %1803 = vmatprep.subr.mxu0 0.0
    %1804 = vmatpush1.msra.mxu0 0.0
    %1805 = vmatprep.subr.mxu0 0.0
    %1806 = vmatpush1.msra.mxu0 0.0
    %1807 = vmatprep.subr.mxu0 0.0
    %1808 = vmatpush1.msra.mxu0 0.0
    %1809 = vmatprep.mubr.f32.mxu0 0.0
    %1810 = vmatmul.mubr.f32.gmra.mrb[0].mxu0 %v1740
    %v1811 = vpop.f32.mrb[0].mxu0
    %v1812 = vadd.f32 %v1737, %v1811
    %v1813 = vpop.f32.mrb[0].mxu0
    %1814 = vmatprep.mubr.f32.mxu0 0.0
    %1815 = vmatmul.mubr.f32.gmra.mrb[0].mxu0 %v1743
    %v1816 = vpop.f32.mrb[0].mxu0
    %v1817 = vadd.f32 %v1737, %v1816
    %v1818 = vpop.f32.mrb[0].mxu0
    %1819 = vdwg.mxu0
    %v1820 = vadd.f32 %v1812, %v261
    %v1821 = vadd.f32 %v1817, %v262
    %v1822 = vld [vmem:[%s9] sm:$0x1]
    %v1823 = vld [vmem:[%s10] sm:$0x1]
    %v1824 = vsel %vm219, %v1820, 0.0
    %1825 = vadd.xlane.f32.xlu0 %v1824
    %v1826 = vpop.xlane.xlu0 %1825
    %v1827 = vsel %vm219, %v1821, 0.0
    %1828 = vadd.xlane.f32.xlu0 %v1827
    %v1829 = vpop.xlane.xlu0 %1828
    %v1830 = vmul.f32 %v1826, %v226
    %v1831 = vmul.f32 %v1829, %v226
    %v1832 = vsub.f32 %v1820, %v1830
    %v1833 = vsub.f32 %v1821, %v1831
    %v1834 = vmul.f32 %v1832, %v1832
    %v1835 = vmul.f32 %v1833, %v1833
    %v1836 = vsel %vm219, %v1834, 0.0
    %1837 = vadd.xlane.f32.xlu0 %v1836
    %v1838 = vpop.xlane.xlu0 %1837
    %v1839 = vsel %vm219, %v1835, 0.0
    %1840 = vadd.xlane.f32.xlu0 %v1839
    %v1841 = vpop.xlane.xlu0 %1840
    %v1842 = vmul.f32 %v1838, %v226
    %v1843 = vmul.f32 %v1841, %v226
    %v1844 = vadd.f32 %v1842, 1e-05
    %v1845 = vadd.f32 %v1843, 1e-05
    %v1846 = vrsqrt.pop %v1844
    %v1847 = vrsqrt.pop %v1845
    %v1848 = vmul.f32 %v1832, %v1846
    %v1849 = vmul.f32 %v1833, %v1847
    %v1851 = vlaneseq
    %v1852 = vshrl.u32 %v1851, 7
    %v1853 = vsub.s32 0, %v1852
    %v1854 = vrot.slane %v1822, %v1853
    %v1856 = vmul.f32 %v1848, %v1854
    %v1857 = vmul.f32 %v1849, %v1854
    %v1859 = vlaneseq
    %v1860 = vshrl.u32 %v1859, 7
    %v1861 = vsub.s32 0, %v1860
    %v1862 = vrot.slane %v1823, %v1861
    %v1864 = vadd.f32 %v1856, %v1862
    %v1865 = vadd.f32 %v1857, %v1862
    %v1866 = vld [vmem:[%s11] sm:$0xff]
    %v1867 = vld [vmem:[%s11 + $0x8] sm:$0xff]
    %v1868 = vld [vmem:[%s11 + $0x10] sm:$0xff]
    %v1869 = vld [vmem:[%s11 + $0x18] sm:$0xff]
    %v1870 = vld [vmem:[%s12] sm:$0x1]
    %v1872 = vlaneseq
    %v1873 = vshrl.u32 %v1872, 7
    %v1874 = vsub.s32 0, %v1873
    %v1875 = vrot.slane %v1870, %v1874
    %v1878 = vsel %vm219, %v1864, 0
    %v1881 = vsel %vm219, %v1865, 0
    %1883 = vmatprep.subr.mxu0 0.0
    %1884 = vmatpush1.msra.mxu0 %v1866
    %1885 = vmatprep.subr.mxu0 0.0
    %1886 = vmatpush1.msra.mxu0 %v1867
    %1887 = vmatprep.subr.mxu0 0.0
    %1888 = vmatpush1.msra.mxu0 %v1868
    %1889 = vmatprep.subr.mxu0 0.0
    %1890 = vmatpush1.msra.mxu0 %v1869
    %1891 = vmatprep.subr.mxu0 0.0
    %1892 = vmatpush1.msra.mxu0 0.0
    %1893 = vmatprep.subr.mxu0 0.0
    %1894 = vmatpush1.msra.mxu0 0.0
    %1895 = vmatprep.subr.mxu0 0.0
    %1896 = vmatpush1.msra.mxu0 0.0
    %1897 = vmatprep.subr.mxu0 0.0
    %1898 = vmatpush1.msra.mxu0 0.0
    %1899 = vmatprep.subr.mxu0 0.0
    %1900 = vmatpush1.msra.mxu0 0.0
    %1901 = vmatprep.subr.mxu0 0.0
    %1902 = vmatpush1.msra.mxu0 0.0
    %1903 = vmatprep.subr.mxu0 0.0
    %1904 = vmatpush1.msra.mxu0 0.0
    %1905 = vmatprep.subr.mxu0 0.0
    %1906 = vmatpush1.msra.mxu0 0.0
    %1907 = vmatprep.subr.mxu0 0.0
    %1908 = vmatpush1.msra.mxu0 0.0
    %1909 = vmatprep.subr.mxu0 0.0
    %1910 = vmatpush1.msra.mxu0 0.0
    %1911 = vmatprep.subr.mxu0 0.0
    %1912 = vmatpush1.msra.mxu0 0.0
    %1913 = vmatprep.subr.mxu0 0.0
    %1914 = vmatpush1.msra.mxu0 0.0
    %1915 = vmatprep.subr.mxu0 0.0
    %1916 = vmatpush1.msra.mxu0 0.0
    %1917 = vmatprep.subr.mxu0 0.0
    %1918 = vmatpush1.msra.mxu0 0.0
    %1919 = vmatprep.subr.mxu0 0.0
    %1920 = vmatpush1.msra.mxu0 0.0
    %1921 = vmatprep.subr.mxu0 0.0
    %1922 = vmatpush1.msra.mxu0 0.0
    %1923 = vmatprep.subr.mxu0 0.0
    %1924 = vmatpush1.msra.mxu0 0.0
    %1925 = vmatprep.subr.mxu0 0.0
    %1926 = vmatpush1.msra.mxu0 0.0
    %1927 = vmatprep.subr.mxu0 0.0
    %1928 = vmatpush1.msra.mxu0 0.0
    %1929 = vmatprep.subr.mxu0 0.0
    %1930 = vmatpush1.msra.mxu0 0.0
    %1931 = vmatprep.subr.mxu0 0.0
    %1932 = vmatpush1.msra.mxu0 0.0
    %1933 = vmatprep.subr.mxu0 0.0
    %1934 = vmatpush1.msra.mxu0 0.0
    %1935 = vmatprep.subr.mxu0 0.0
    %1936 = vmatpush1.msra.mxu0 0.0
    %1937 = vmatprep.subr.mxu0 0.0
    %1938 = vmatpush1.msra.mxu0 0.0
    %1939 = vmatprep.subr.mxu0 0.0
    %1940 = vmatpush1.msra.mxu0 0.0
    %1941 = vmatprep.subr.mxu0 0.0
    %1942 = vmatpush1.msra.mxu0 0.0
    %1943 = vmatprep.subr.mxu0 0.0
    %1944 = vmatpush1.msra.mxu0 0.0
    %1945 = vmatprep.subr.mxu0 0.0
    %1946 = vmatpush1.msra.mxu0 0.0
    %1947 = vmatprep.mubr.f32.mxu0 0.0
    %1948 = vmatmul.mubr.f32.gmra.mrb[0].mxu0 %v1878
    %v1949 = vpop.f32.mrb[0].mxu0
    %v1950 = vadd.f32 %v1875, %v1949
    %v1951 = vpop.f32.mrb[0].mxu0
    %1952 = vmatprep.mubr.f32.mxu0 0.0
    %1953 = vmatmul.mubr.f32.gmra.mrb[0].mxu0 %v1881
    %v1954 = vpop.f32.mrb[0].mxu0
    %v1955 = vadd.f32 %v1875, %v1954
    %v1956 = vpop.f32.mrb[0].mxu0
    %1957 = vdwg.mxu0
    %v1958 = vmul.f32 %v1950, %v1950
    %v1959 = vmul.f32 %v1955, %v1955
    %v1960 = vmul.f32 %v1950, %v1958
    %v1961 = vmul.f32 %v1955, %v1959
    %v1962 = vmul.f32 %v1960, 0.044715
    %v1963 = vmul.f32 %v1961, 0.044715
    %v1964 = vadd.f32 %v1950, %v1962
    %v1965 = vadd.f32 %v1955, %v1963
    %v1966 = vmul.f32 %v1964, 0.7978846
    %v1967 = vmul.f32 %v1965, 0.7978846
    %v1968 = vtanh.pop %v1966
    %v1969 = vtanh.pop %v1967
    %v1970 = vadd.f32 %v1968, 1.0
    %v1971 = vadd.f32 %v1969, 1.0
    %v1972 = vmul.f32 %v1970, 0.5
    %v1973 = vmul.f32 %v1971, 0.5
    %v1974 = vmul.f32 %v1950, %v1972
    %v1975 = vmul.f32 %v1955, %v1973
    %v1976 = vld [vmem:[%s13] sm:$0xff]
    %v1977 = vld [vmem:[%s13 + $0x8] sm:$0xff]
    %v1978 = vld [vmem:[%s13 + $0x10] sm:$0xff]
    %v1979 = vld [vmem:[%s13 + $0x18] sm:$0xff]
    %v1980 = vld [vmem:[%s13 + $0x20] sm:$0xff]
    %v1981 = vld [vmem:[%s13 + $0x28] sm:$0xff]
    %v1982 = vld [vmem:[%s13 + $0x30] sm:$0xff]
    %v1983 = vld [vmem:[%s13 + $0x38] sm:$0xff]
    %v1984 = vld [vmem:[%s14] sm:$0x1]
    %v1986 = vlaneseq
    %v1987 = vshrl.u32 %v1986, 7
    %v1988 = vsub.s32 0, %v1987
    %v1989 = vrot.slane %v1984, %v1988
    %vm1991 = vcmask 523264
    %v1993 = vsel %vm1991, %v1974, 0
    %v1996 = vsel %vm1991, %v1975, 0
    %1998 = vmatprep.subr.mxu0 0.0
    %1999 = vmatpush1.msra.mxu0 %v1976
    %2000 = vmatprep.subr.mxu0 0.0
    %2001 = vmatpush1.msra.mxu0 %v1977
    %2002 = vmatprep.subr.mxu0 0.0
    %2003 = vmatpush1.msra.mxu0 %v1978
    %2004 = vmatprep.subr.mxu0 0.0
    %2005 = vmatpush1.msra.mxu0 %v1979
    %2006 = vmatprep.subr.mxu0 0.0
    %2007 = vmatpush1.msra.mxu0 %v1980
    %2008 = vmatprep.subr.mxu0 0.0
    %2009 = vmatpush1.msra.mxu0 %v1981
    %2010 = vmatprep.subr.mxu0 0.0
    %2011 = vmatpush1.msra.mxu0 %v1982
    %2012 = vmatprep.subr.mxu0 0.0
    %2013 = vmatpush1.msra.mxu0 %v1983
    %2014 = vmatprep.subr.mxu0 0.0
    %2015 = vmatpush1.msra.mxu0 0.0
    %2016 = vmatprep.subr.mxu0 0.0
    %2017 = vmatpush1.msra.mxu0 0.0
    %2018 = vmatprep.subr.mxu0 0.0
    %2019 = vmatpush1.msra.mxu0 0.0
    %2020 = vmatprep.subr.mxu0 0.0
    %2021 = vmatpush1.msra.mxu0 0.0
    %2022 = vmatprep.subr.mxu0 0.0
    %2023 = vmatpush1.msra.mxu0 0.0
    %2024 = vmatprep.subr.mxu0 0.0
    %2025 = vmatpush1.msra.mxu0 0.0
    %2026 = vmatprep.subr.mxu0 0.0
    %2027 = vmatpush1.msra.mxu0 0.0
    %2028 = vmatprep.subr.mxu0 0.0
    %2029 = vmatpush1.msra.mxu0 0.0
    %2030 = vmatprep.subr.mxu0 0.0
    %2031 = vmatpush1.msra.mxu0 0.0
    %2032 = vmatprep.subr.mxu0 0.0
    %2033 = vmatpush1.msra.mxu0 0.0
    %2034 = vmatprep.subr.mxu0 0.0
    %2035 = vmatpush1.msra.mxu0 0.0
    %2036 = vmatprep.subr.mxu0 0.0
    %2037 = vmatpush1.msra.mxu0 0.0
    %2038 = vmatprep.subr.mxu0 0.0
    %2039 = vmatpush1.msra.mxu0 0.0
    %2040 = vmatprep.subr.mxu0 0.0
    %2041 = vmatpush1.msra.mxu0 0.0
    %2042 = vmatprep.subr.mxu0 0.0
    %2043 = vmatpush1.msra.mxu0 0.0
    %2044 = vmatprep.subr.mxu0 0.0
    %2045 = vmatpush1.msra.mxu0 0.0
    %2046 = vmatprep.subr.mxu0 0.0
    %2047 = vmatpush1.msra.mxu0 0.0
    %2048 = vmatprep.subr.mxu0 0.0
    %2049 = vmatpush1.msra.mxu0 0.0
    %2050 = vmatprep.subr.mxu0 0.0
    %2051 = vmatpush1.msra.mxu0 0.0
    %2052 = vmatprep.subr.mxu0 0.0
    %2053 = vmatpush1.msra.mxu0 0.0
    %2054 = vmatprep.subr.mxu0 0.0
    %2055 = vmatpush1.msra.mxu0 0.0
    %2056 = vmatprep.subr.mxu0 0.0
    %2057 = vmatpush1.msra.mxu0 0.0
    %2058 = vmatprep.subr.mxu0 0.0
    %2059 = vmatpush1.msra.mxu0 0.0
    %2060 = vmatprep.subr.mxu0 0.0
    %2061 = vmatpush1.msra.mxu0 0.0
    %2062 = vmatprep.mubr.f32.mxu0 0.0
    %2063 = vmatmul.mubr.f32.gmra.mrb[0].mxu0 %v1993
    %v2064 = vpop.f32.mrb[0].mxu0
    %v2065 = vadd.f32 %v1989, %v2064
    %v2066 = vpop.f32.mrb[0].mxu0
    %2067 = vmatprep.mubr.f32.mxu0 0.0
    %2068 = vmatmul.mubr.f32.gmra.mrb[0].mxu0 %v1996
    %v2069 = vpop.f32.mrb[0].mxu0
    %v2070 = vadd.f32 %v1989, %v2069
    %v2071 = vpop.f32.mrb[0].mxu0
    %2072 = vdwg.mxu0
    %v2073 = vadd.f32 %v2065, %v1864
    %v2074 = vadd.f32 %v2070, %v1865
    %v2075 = vld [vmem:[%s15] sm:$0x1]
    %v2076 = vld [vmem:[%s16] sm:$0x1]
    %v2077 = vsel %vm219, %v2073, 0.0
    %2078 = vadd.xlane.f32.xlu0 %v2077
    %v2079 = vpop.xlane.xlu0 %2078
    %v2080 = vsel %vm219, %v2074, 0.0
    %2081 = vadd.xlane.f32.xlu0 %v2080
    %v2082 = vpop.xlane.xlu0 %2081
    %v2083 = vmul.f32 %v2079, %v226
    %v2084 = vmul.f32 %v2082, %v226
    %v2085 = vsub.f32 %v2073, %v2083
    %v2086 = vsub.f32 %v2074, %v2084
    %v2087 = vmul.f32 %v2085, %v2085
    %v2088 = vmul.f32 %v2086, %v2086
    %v2089 = vsel %vm219, %v2087, 0.0
    %2090 = vadd.xlane.f32.xlu0 %v2089
    %v2091 = vpop.xlane.xlu0 %2090
    %v2092 = vsel %vm219, %v2088, 0.0
    %2093 = vadd.xlane.f32.xlu0 %v2092
    %v2094 = vpop.xlane.xlu0 %2093
    %v2095 = vmul.f32 %v2091, %v226
    %v2096 = vmul.f32 %v2094, %v226
    %v2097 = vadd.f32 %v2095, 1e-05
    %v2098 = vadd.f32 %v2096, 1e-05
    %v2099 = vrsqrt.pop %v2097
    %v2100 = vrsqrt.pop %v2098
    %v2101 = vmul.f32 %v2085, %v2099
    %v2102 = vmul.f32 %v2086, %v2100
    %v2104 = vlaneseq
    %v2105 = vshrl.u32 %v2104, 7
    %v2106 = vsub.s32 0, %v2105
    %v2107 = vrot.slane %v2075, %v2106
    %v2109 = vmul.f32 %v2101, %v2107
    %v2110 = vmul.f32 %v2102, %v2107
    %v2112 = vlaneseq
    %v2113 = vshrl.u32 %v2112, 7
    %v2114 = vsub.s32 0, %v2113
    %v2115 = vrot.slane %v2076, %v2114
    %v2117 = vadd.f32 %v2109, %v2115
    %v2118 = vadd.f32 %v2110, %v2115
    %s2119 = scalar_lea.vmem %s5, 32
    %v2120 = vld [vmem:[%s2119] sm:$0xff]
    %v2121 = vld [vmem:[%s2119 + $0x8] sm:$0xff]
    %v2122 = vld [vmem:[%s2119 + $0x10] sm:$0xff]
    %v2123 = vld [vmem:[%s2119 + $0x18] sm:$0xff]
    %s2124 = scalar_lea.vmem %s6, 1
    %v2125 = vld [vmem:[%s2124] sm:$0x1]
    %v2127 = vlaneseq
    %v2128 = vshrl.u32 %v2127, 7
    %v2129 = vsub.s32 0, %v2128
    %v2130 = vrot.slane %v2125, %v2129
    %v2133 = vsel %vm219, %v2117, 0
    %v2136 = vsel %vm219, %v2118, 0
    %2138 = vmatprep.subr.mxu0 0.0
    %2139 = vmatpush1.msra.mxu0 %v2120
    %2140 = vmatprep.subr.mxu0 0.0
    %2141 = vmatpush1.msra.mxu0 %v2121
    %2142 = vmatprep.subr.mxu0 0.0
    %2143 = vmatpush1.msra.mxu0 %v2122
    %2144 = vmatprep.subr.mxu0 0.0
    %2145 = vmatpush1.msra.mxu0 %v2123
    %2146 = vmatprep.subr.mxu0 0.0
    %2147 = vmatpush1.msra.mxu0 0.0
    %2148 = vmatprep.subr.mxu0 0.0
    %2149 = vmatpush1.msra.mxu0 0.0
    %2150 = vmatprep.subr.mxu0 0.0
    %2151 = vmatpush1.msra.mxu0 0.0
    %2152 = vmatprep.subr.mxu0 0.0
    %2153 = vmatpush1.msra.mxu0 0.0
    %2154 = vmatprep.subr.mxu0 0.0
    %2155 = vmatpush1.msra.mxu0 0.0
    %2156 = vmatprep.subr.mxu0 0.0
    %2157 = vmatpush1.msra.mxu0 0.0
    %2158 = vmatprep.subr.mxu0 0.0
    %2159 = vmatpush1.msra.mxu0 0.0
    %2160 = vmatprep.subr.mxu0 0.0
    %2161 = vmatpush1.msra.mxu0 0.0
    %2162 = vmatprep.subr.mxu0 0.0
    %2163 = vmatpush1.msra.mxu0 0.0
    %2164 = vmatprep.subr.mxu0 0.0
    %2165 = vmatpush1.msra.mxu0 0.0
    %2166 = vmatprep.subr.mxu0 0.0
    %2167 = vmatpush1.msra.mxu0 0.0
    %2168 = vmatprep.subr.mxu0 0.0
    %2169 = vmatpush1.msra.mxu0 0.0
    %2170 = vmatprep.subr.mxu0 0.0
    %2171 = vmatpush1.msra.mxu0 0.0
    %2172 = vmatprep.subr.mxu0 0.0
    %2173 = vmatpush1.msra.mxu0 0.0
    %2174 = vmatprep.subr.mxu0 0.0
    %2175 = vmatpush1.msra.mxu0 0.0
    %2176 = vmatprep.subr.mxu0 0.0
    %2177 = vmatpush1.msra.mxu0 0.0
    %2178 = vmatprep.subr.mxu0 0.0
    %2179 = vmatpush1.msra.mxu0 0.0
    %2180 = vmatprep.subr.mxu0 0.0
    %2181 = vmatpush1.msra.mxu0 0.0
    %2182 = vmatprep.subr.mxu0 0.0
    %2183 = vmatpush1.msra.mxu0 0.0
    %2184 = vmatprep.subr.mxu0 0.0
    %2185 = vmatpush1.msra.mxu0 0.0
    %2186 = vmatprep.subr.mxu0 0.0
    %2187 = vmatpush1.msra.mxu0 0.0
    %2188 = vmatprep.subr.mxu0 0.0
    %2189 = vmatpush1.msra.mxu0 0.0
    %2190 = vmatprep.subr.mxu0 0.0
    %2191 = vmatpush1.msra.mxu0 0.0
    %2192 = vmatprep.subr.mxu0 0.0
    %2193 = vmatpush1.msra.mxu0 0.0
    %2194 = vmatprep.subr.mxu0 0.0
    %2195 = vmatpush1.msra.mxu0 0.0
    %2196 = vmatprep.subr.mxu0 0.0
    %2197 = vmatpush1.msra.mxu0 0.0
    %2198 = vmatprep.subr.mxu0 0.0
    %2199 = vmatpush1.msra.mxu0 0.0
    %2200 = vmatprep.subr.mxu0 0.0
    %2201 = vmatpush1.msra.mxu0 0.0
    %2202 = vmatprep.mubr.f32.mxu0 0.0
    %2203 = vmatmul.mubr.f32.gmra.mrb[0].mxu0 %v2133
    %v2204 = vpop.f32.mrb[0].mxu0
    %v2205 = vadd.f32 %v2130, %v2204
    %v2206 = vpop.f32.mrb[0].mxu0
    %2207 = vmatprep.mubr.f32.mxu0 0.0
    %2208 = vmatmul.mubr.f32.gmra.mrb[0].mxu0 %v2136
    %v2209 = vpop.f32.mrb[0].mxu0
    %v2210 = vadd.f32 %v2130, %v2209
    %v2211 = vpop.f32.mrb[0].mxu0
    %2212 = vdwg.mxu0
    %v2213 = vmul.f32 %v2205, 0.35355338
    %v2214 = vmul.f32 %v2210, 0.35355338
    %2216 = vrot.lane.b32.xlu0 %v2205, 96
    %v2217 = vpop.permute.xlu0 %2216
    %v2219 = vsel %vm378, %v2213, 0
    %v2221 = vsel %vm378, %v2217, 0
    %2223 = vmatprep.subr.mxu0 0.0
    %2224 = vmatpush1.xpose.msra.mxu0 %v2221
    %2225 = vmatprep.subr.mxu0 0.0
    %2226 = vmatpush1.xpose.msra.mxu0 0.0
    %2227 = vmatprep.subr.mxu0 0.0
    %2228 = vmatpush1.xpose.msra.mxu0 0.0
    %2229 = vmatprep.subr.mxu0 0.0
    %2230 = vmatpush1.xpose.msra.mxu0 0.0
    %2231 = vmatprep.subr.mxu0 0.0
    %2232 = vmatpush1.xpose.msra.mxu0 0.0
    %2233 = vmatprep.subr.mxu0 0.0
    %2234 = vmatpush1.xpose.msra.mxu0 0.0
    %2235 = vmatprep.subr.mxu0 0.0
    %2236 = vmatpush1.xpose.msra.mxu0 0.0
    %2237 = vmatprep.subr.mxu0 0.0
    %2238 = vmatpush1.xpose.msra.mxu0 0.0
    %2239 = vmatprep.subr.mxu0 0.0
    %2240 = vmatpush1.xpose.msra.mxu0 0.0
    %2241 = vmatprep.subr.mxu0 0.0
    %2242 = vmatpush1.xpose.msra.mxu0 0.0
    %2243 = vmatprep.subr.mxu0 0.0
    %2244 = vmatpush1.xpose.msra.mxu0 0.0
    %2245 = vmatprep.subr.mxu0 0.0
    %2246 = vmatpush1.xpose.msra.mxu0 0.0
    %2247 = vmatprep.subr.mxu0 0.0
    %2248 = vmatpush1.xpose.msra.mxu0 0.0
    %2249 = vmatprep.subr.mxu0 0.0
    %2250 = vmatpush1.xpose.msra.mxu0 0.0
    %2251 = vmatprep.subr.mxu0 0.0
    %2252 = vmatpush1.xpose.msra.mxu0 0.0
    %2253 = vmatprep.subr.mxu0 0.0
    %2254 = vmatpush1.xpose.msra.mxu0 0.0
    %2255 = vmatprep.subr.mxu0 0.0
    %2256 = vmatpush1.xpose.msra.mxu0 0.0
    %2257 = vmatprep.subr.mxu0 0.0
    %2258 = vmatpush1.xpose.msra.mxu0 0.0
    %2259 = vmatprep.subr.mxu0 0.0
    %2260 = vmatpush1.xpose.msra.mxu0 0.0
    %2261 = vmatprep.subr.mxu0 0.0
    %2262 = vmatpush1.xpose.msra.mxu0 0.0
    %2263 = vmatprep.subr.mxu0 0.0
    %2264 = vmatpush1.xpose.msra.mxu0 0.0
    %2265 = vmatprep.subr.mxu0 0.0
    %2266 = vmatpush1.xpose.msra.mxu0 0.0
    %2267 = vmatprep.subr.mxu0 0.0
    %2268 = vmatpush1.xpose.msra.mxu0 0.0
    %2269 = vmatprep.subr.mxu0 0.0
    %2270 = vmatpush1.xpose.msra.mxu0 0.0
    %2271 = vmatprep.subr.mxu0 0.0
    %2272 = vmatpush1.xpose.msra.mxu0 0.0
    %2273 = vmatprep.subr.mxu0 0.0
    %2274 = vmatpush1.xpose.msra.mxu0 0.0
    %2275 = vmatprep.subr.mxu0 0.0
    %2276 = vmatpush1.xpose.msra.mxu0 0.0
    %2277 = vmatprep.subr.mxu0 0.0
    %2278 = vmatpush1.xpose.msra.mxu0 0.0
    %2279 = vmatprep.subr.mxu0 0.0
    %2280 = vmatpush1.xpose.msra.mxu0 0.0
    %2281 = vmatprep.subr.mxu0 0.0
    %2282 = vmatpush1.xpose.msra.mxu0 0.0
    %2283 = vmatprep.subr.mxu0 0.0
    %2284 = vmatpush1.xpose.msra.mxu0 0.0
    %2285 = vmatprep.subr.mxu0 0.0
    %2286 = vmatpush1.xpose.msra.mxu0 0.0
    %2287 = vmatprep.mubr.f32.mxu0 0.0
    %2288 = vmatmul.mubr.f32.gmra.mrb[0].mxu0 %v2219
    %v2289 = vpop.f32.mrb[0].mxu0
    %v2290 = vadd.f32 %v368, %v2289
    %v2291 = vpop.f32.mrb[0].mxu0
    %2292 = vdwg.mxu0
    %2294 = vrot.lane.b32.xlu0 %v2210, 96
    %v2295 = vpop.permute.xlu0 %2294
    %v2297 = vsel %vm378, %v2214, 0
    %v2299 = vsel %vm378, %v2295, 0
    %2301 = vmatprep.subr.mxu0 0.0
    %2302 = vmatpush1.xpose.msra.mxu0 %v2299
    %2303 = vmatprep.subr.mxu0 0.0
    %2304 = vmatpush1.xpose.msra.mxu0 0.0
    %2305 = vmatprep.subr.mxu0 0.0
    %2306 = vmatpush1.xpose.msra.mxu0 0.0
    %2307 = vmatprep.subr.mxu0 0.0
    %2308 = vmatpush1.xpose.msra.mxu0 0.0
    %2309 = vmatprep.subr.mxu0 0.0
    %2310 = vmatpush1.xpose.msra.mxu0 0.0
    %2311 = vmatprep.subr.mxu0 0.0
    %2312 = vmatpush1.xpose.msra.mxu0 0.0
    %2313 = vmatprep.subr.mxu0 0.0
    %2314 = vmatpush1.xpose.msra.mxu0 0.0
    %2315 = vmatprep.subr.mxu0 0.0
    %2316 = vmatpush1.xpose.msra.mxu0 0.0
    %2317 = vmatprep.subr.mxu0 0.0
    %2318 = vmatpush1.xpose.msra.mxu0 0.0
    %2319 = vmatprep.subr.mxu0 0.0
    %2320 = vmatpush1.xpose.msra.mxu0 0.0
    %2321 = vmatprep.subr.mxu0 0.0
    %2322 = vmatpush1.xpose.msra.mxu0 0.0
    %2323 = vmatprep.subr.mxu0 0.0
    %2324 = vmatpush1.xpose.msra.mxu0 0.0
    %2325 = vmatprep.subr.mxu0 0.0
    %2326 = vmatpush1.xpose.msra.mxu0 0.0
    %2327 = vmatprep.subr.mxu0 0.0
    %2328 = vmatpush1.xpose.msra.mxu0 0.0
    %2329 = vmatprep.subr.mxu0 0.0
    %2330 = vmatpush1.xpose.msra.mxu0 0.0
    %2331 = vmatprep.subr.mxu0 0.0
    %2332 = vmatpush1.xpose.msra.mxu0 0.0
    %2333 = vmatprep.subr.mxu0 0.0
    %2334 = vmatpush1.xpose.msra.mxu0 0.0
    %2335 = vmatprep.subr.mxu0 0.0
    %2336 = vmatpush1.xpose.msra.mxu0 0.0
    %2337 = vmatprep.subr.mxu0 0.0
    %2338 = vmatpush1.xpose.msra.mxu0 0.0
    %2339 = vmatprep.subr.mxu0 0.0
    %2340 = vmatpush1.xpose.msra.mxu0 0.0
    %2341 = vmatprep.subr.mxu0 0.0
    %2342 = vmatpush1.xpose.msra.mxu0 0.0
    %2343 = vmatprep.subr.mxu0 0.0
    %2344 = vmatpush1.xpose.msra.mxu0 0.0
    %2345 = vmatprep.subr.mxu0 0.0
    %2346 = vmatpush1.xpose.msra.mxu0 0.0
    %2347 = vmatprep.subr.mxu0 0.0
    %2348 = vmatpush1.xpose.msra.mxu0 0.0
    %2349 = vmatprep.subr.mxu0 0.0
    %2350 = vmatpush1.xpose.msra.mxu0 0.0
    %2351 = vmatprep.subr.mxu0 0.0
    %2352 = vmatpush1.xpose.msra.mxu0 0.0
    %2353 = vmatprep.subr.mxu0 0.0
    %2354 = vmatpush1.xpose.msra.mxu0 0.0
    %2355 = vmatprep.subr.mxu0 0.0
    %2356 = vmatpush1.xpose.msra.mxu0 0.0
    %2357 = vmatprep.subr.mxu0 0.0
    %2358 = vmatpush1.xpose.msra.mxu0 0.0
    %2359 = vmatprep.subr.mxu0 0.0
    %2360 = vmatpush1.xpose.msra.mxu0 0.0
    %2361 = vmatprep.subr.mxu0 0.0
    %2362 = vmatpush1.xpose.msra.mxu0 0.0
    %2363 = vmatprep.subr.mxu0 0.0
    %2364 = vmatpush1.xpose.msra.mxu0 0.0
    %2365 = vmatprep.mubr.f32.mxu0 0.0
    %2366 = vmatmul.mubr.f32.gmra.mrb[0].mxu0 %v2297
    %v2367 = vpop.f32.mrb[0].mxu0
    %v2368 = vadd.f32 %v372, %v2367
    %v2369 = vpop.f32.mrb[0].mxu0
    %2370 = vdwg.mxu0
    %v2371 = vsel %vm378, %v2290, -inf
    %2372 = vmax.xlane.f32.xlu0 %v2371
    %v2373 = vpop.xlane.xlu0 %2372
    %v2374 = vsel %vm378, %v2368, -inf
    %2375 = vmax.xlane.f32.xlu0 %v2374
    %v2376 = vpop.xlane.xlu0 %2375
    %v2377 = vsub.f32 %v2290, %v2373
    %v2378 = vsub.f32 %v2368, %v2376
    %v2379 = vmul.f32 %v2377, 1.442695
    %v2380 = vpow.pop %v2379
    %v2381 = vmul.f32 %v2378, 1.442695
    %v2382 = vpow.pop %v2381
    %v2383 = vsel %vm378, %v2380, 0.0
    %2384 = vadd.xlane.f32.xlu0 %v2383
    %v2385 = vpop.xlane.xlu0 %2384
    %v2386 = vsel %vm378, %v2382, 0.0
    %2387 = vadd.xlane.f32.xlu0 %v2386
    %v2388 = vpop.xlane.xlu0 %2387
    %v2389 = vrcp.pop %v2385
    %v2390 = vrcp.pop %v2388
    %v2391 = vmul.f32 %v2380, %v2389
    %v2392 = vmul.f32 %v2382, %v2390
    %2393 = vrot.lane.b32.xlu0 %v2205, 64
    %v2394 = vpop.permute.xlu0 %2393
    %v2397 = vsel %vm378, %v2391, 0
    %2399 = vmatprep.subr.mxu0 0.0
    %2400 = vmatpush1.msra.mxu0 %v2394
    %2401 = vmatprep.subr.mxu0 0.0
    %2402 = vmatpush1.msra.mxu0 0.0
    %2403 = vmatprep.subr.mxu0 0.0
    %2404 = vmatpush1.msra.mxu0 0.0
    %2405 = vmatprep.subr.mxu0 0.0
    %2406 = vmatpush1.msra.mxu0 0.0
    %2407 = vmatprep.subr.mxu0 0.0
    %2408 = vmatpush1.msra.mxu0 0.0
    %2409 = vmatprep.subr.mxu0 0.0
    %2410 = vmatpush1.msra.mxu0 0.0
    %2411 = vmatprep.subr.mxu0 0.0
    %2412 = vmatpush1.msra.mxu0 0.0
    %2413 = vmatprep.subr.mxu0 0.0
    %2414 = vmatpush1.msra.mxu0 0.0
    %2415 = vmatprep.subr.mxu0 0.0
    %2416 = vmatpush1.msra.mxu0 0.0
    %2417 = vmatprep.subr.mxu0 0.0
    %2418 = vmatpush1.msra.mxu0 0.0
    %2419 = vmatprep.subr.mxu0 0.0
    %2420 = vmatpush1.msra.mxu0 0.0
    %2421 = vmatprep.subr.mxu0 0.0
    %2422 = vmatpush1.msra.mxu0 0.0
    %2423 = vmatprep.subr.mxu0 0.0
    %2424 = vmatpush1.msra.mxu0 0.0
    %2425 = vmatprep.subr.mxu0 0.0
    %2426 = vmatpush1.msra.mxu0 0.0
    %2427 = vmatprep.subr.mxu0 0.0
    %2428 = vmatpush1.msra.mxu0 0.0
    %2429 = vmatprep.subr.mxu0 0.0
    %2430 = vmatpush1.msra.mxu0 0.0
    %2431 = vmatprep.subr.mxu0 0.0
    %2432 = vmatpush1.msra.mxu0 0.0
    %2433 = vmatprep.subr.mxu0 0.0
    %2434 = vmatpush1.msra.mxu0 0.0
    %2435 = vmatprep.subr.mxu0 0.0
    %2436 = vmatpush1.msra.mxu0 0.0
    %2437 = vmatprep.subr.mxu0 0.0
    %2438 = vmatpush1.msra.mxu0 0.0
    %2439 = vmatprep.subr.mxu0 0.0
    %2440 = vmatpush1.msra.mxu0 0.0
    %2441 = vmatprep.subr.mxu0 0.0
    %2442 = vmatpush1.msra.mxu0 0.0
    %2443 = vmatprep.subr.mxu0 0.0
    %2444 = vmatpush1.msra.mxu0 0.0
    %2445 = vmatprep.subr.mxu0 0.0
    %2446 = vmatpush1.msra.mxu0 0.0
    %2447 = vmatprep.subr.mxu0 0.0
    %2448 = vmatpush1.msra.mxu0 0.0
    %2449 = vmatprep.subr.mxu0 0.0
    %2450 = vmatpush1.msra.mxu0 0.0
    %2451 = vmatprep.subr.mxu0 0.0
    %2452 = vmatpush1.msra.mxu0 0.0
    %2453 = vmatprep.subr.mxu0 0.0
    %2454 = vmatpush1.msra.mxu0 0.0
    %2455 = vmatprep.subr.mxu0 0.0
    %2456 = vmatpush1.msra.mxu0 0.0
    %2457 = vmatprep.subr.mxu0 0.0
    %2458 = vmatpush1.msra.mxu0 0.0
    %2459 = vmatprep.subr.mxu0 0.0
    %2460 = vmatpush1.msra.mxu0 0.0
    %2461 = vmatprep.subr.mxu0 0.0
    %2462 = vmatpush1.msra.mxu0 0.0
    %2463 = vmatprep.mubr.f32.mxu0 0.0
    %2464 = vmatmul.mubr.f32.gmra.mrb[0].mxu0 %v2397
    %v2465 = vpop.f32.mrb[0].mxu0
    %v2466 = vadd.f32 0.0, %v2465
    %v2467 = vpop.f32.mrb[0].mxu0
    %2468 = vdwg.mxu0
    %2469 = vrot.lane.b32.xlu0 %v2210, 64
    %v2470 = vpop.permute.xlu0 %2469
    %v2473 = vsel %vm378, %v2392, 0
    %2475 = vmatprep.subr.mxu0 0.0
    %2476 = vmatpush1.msra.mxu0 %v2470
    %2477 = vmatprep.subr.mxu0 0.0
    %2478 = vmatpush1.msra.mxu0 0.0
    %2479 = vmatprep.subr.mxu0 0.0
    %2480 = vmatpush1.msra.mxu0 0.0
    %2481 = vmatprep.subr.mxu0 0.0
    %2482 = vmatpush1.msra.mxu0 0.0
    %2483 = vmatprep.subr.mxu0 0.0
    %2484 = vmatpush1.msra.mxu0 0.0
    %2485 = vmatprep.subr.mxu0 0.0
    %2486 = vmatpush1.msra.mxu0 0.0
    %2487 = vmatprep.subr.mxu0 0.0
    %2488 = vmatpush1.msra.mxu0 0.0
    %2489 = vmatprep.subr.mxu0 0.0
    %2490 = vmatpush1.msra.mxu0 0.0
    %2491 = vmatprep.subr.mxu0 0.0
    %2492 = vmatpush1.msra.mxu0 0.0
    %2493 = vmatprep.subr.mxu0 0.0
    %2494 = vmatpush1.msra.mxu0 0.0
    %2495 = vmatprep.subr.mxu0 0.0
    %2496 = vmatpush1.msra.mxu0 0.0
    %2497 = vmatprep.subr.mxu0 0.0
    %2498 = vmatpush1.msra.mxu0 0.0
    %2499 = vmatprep.subr.mxu0 0.0
    %2500 = vmatpush1.msra.mxu0 0.0
    %2501 = vmatprep.subr.mxu0 0.0
    %2502 = vmatpush1.msra.mxu0 0.0
    %2503 = vmatprep.subr.mxu0 0.0
    %2504 = vmatpush1.msra.mxu0 0.0
    %2505 = vmatprep.subr.mxu0 0.0
    %2506 = vmatpush1.msra.mxu0 0.0
    %2507 = vmatprep.subr.mxu0 0.0
    %2508 = vmatpush1.msra.mxu0 0.0
    %2509 = vmatprep.subr.mxu0 0.0
    %2510 = vmatpush1.msra.mxu0 0.0
    %2511 = vmatprep.subr.mxu0 0.0
    %2512 = vmatpush1.msra.mxu0 0.0
    %2513 = vmatprep.subr.mxu0 0.0
    %2514 = vmatpush1.msra.mxu0 0.0
    %2515 = vmatprep.subr.mxu0 0.0
    %2516 = vmatpush1.msra.mxu0 0.0
    %2517 = vmatprep.subr.mxu0 0.0
    %2518 = vmatpush1.msra.mxu0 0.0
    %2519 = vmatprep.subr.mxu0 0.0
    %2520 = vmatpush1.msra.mxu0 0.0
    %2521 = vmatprep.subr.mxu0 0.0
    %2522 = vmatpush1.msra.mxu0 0.0
    %2523 = vmatprep.subr.mxu0 0.0
    %2524 = vmatpush1.msra.mxu0 0.0
    %2525 = vmatprep.subr.mxu0 0.0
    %2526 = vmatpush1.msra.mxu0 0.0
    %2527 = vmatprep.subr.mxu0 0.0
    %2528 = vmatpush1.msra.mxu0 0.0
    %2529 = vmatprep.subr.mxu0 0.0
    %2530 = vmatpush1.msra.mxu0 0.0
    %2531 = vmatprep.subr.mxu0 0.0
    %2532 = vmatpush1.msra.mxu0 0.0
    %2533 = vmatprep.subr.mxu0 0.0
    %2534 = vmatpush1.msra.mxu0 0.0
    %2535 = vmatprep.subr.mxu0 0.0
    %2536 = vmatpush1.msra.mxu0 0.0
    %2537 = vmatprep.subr.mxu0 0.0
    %2538 = vmatpush1.msra.mxu0 0.0
    %2539 = vmatprep.mubr.f32.mxu0 0.0
    %2540 = vmatmul.mubr.f32.gmra.mrb[0].mxu0 %v2473
    %v2541 = vpop.f32.mrb[0].mxu0
    %v2542 = vadd.f32 0.0, %v2541
    %v2543 = vpop.f32.mrb[0].mxu0
    %2544 = vdwg.mxu0
    %2545 = vrot.lane.b32.xlu0 %v2213, 120
    %v2546 = vpop.permute.xlu0 %2545
    %2547 = vrot.lane.b32.xlu0 %v2205, 88
    %v2548 = vpop.permute.xlu0 %2547
    %v2549 = vsel %vm378, %v2546, 0
    %v2551 = vsel %vm378, %v2548, 0
    %2553 = vmatprep.subr.mxu0 0.0
    %2554 = vmatpush1.xpose.msra.mxu0 %v2551
    %2555 = vmatprep.subr.mxu0 0.0
    %2556 = vmatpush1.xpose.msra.mxu0 0.0
    %2557 = vmatprep.subr.mxu0 0.0
    %2558 = vmatpush1.xpose.msra.mxu0 0.0
    %2559 = vmatprep.subr.mxu0 0.0
    %2560 = vmatpush1.xpose.msra.mxu0 0.0
    %2561 = vmatprep.subr.mxu0 0.0
    %2562 = vmatpush1.xpose.msra.mxu0 0.0
    %2563 = vmatprep.subr.mxu0 0.0
    %2564 = vmatpush1.xpose.msra.mxu0 0.0
    %2565 = vmatprep.subr.mxu0 0.0
    %2566 = vmatpush1.xpose.msra.mxu0 0.0
    %2567 = vmatprep.subr.mxu0 0.0
    %2568 = vmatpush1.xpose.msra.mxu0 0.0
    %2569 = vmatprep.subr.mxu0 0.0
    %2570 = vmatpush1.xpose.msra.mxu0 0.0
    %2571 = vmatprep.subr.mxu0 0.0
    %2572 = vmatpush1.xpose.msra.mxu0 0.0
    %2573 = vmatprep.subr.mxu0 0.0
    %2574 = vmatpush1.xpose.msra.mxu0 0.0
    %2575 = vmatprep.subr.mxu0 0.0
    %2576 = vmatpush1.xpose.msra.mxu0 0.0
    %2577 = vmatprep.subr.mxu0 0.0
    %2578 = vmatpush1.xpose.msra.mxu0 0.0
    %2579 = vmatprep.subr.mxu0 0.0
    %2580 = vmatpush1.xpose.msra.mxu0 0.0
    %2581 = vmatprep.subr.mxu0 0.0
    %2582 = vmatpush1.xpose.msra.mxu0 0.0
    %2583 = vmatprep.subr.mxu0 0.0
    %2584 = vmatpush1.xpose.msra.mxu0 0.0
    %2585 = vmatprep.subr.mxu0 0.0
    %2586 = vmatpush1.xpose.msra.mxu0 0.0
    %2587 = vmatprep.subr.mxu0 0.0
    %2588 = vmatpush1.xpose.msra.mxu0 0.0
    %2589 = vmatprep.subr.mxu0 0.0
    %2590 = vmatpush1.xpose.msra.mxu0 0.0
    %2591 = vmatprep.subr.mxu0 0.0
    %2592 = vmatpush1.xpose.msra.mxu0 0.0
    %2593 = vmatprep.subr.mxu0 0.0
    %2594 = vmatpush1.xpose.msra.mxu0 0.0
    %2595 = vmatprep.subr.mxu0 0.0
    %2596 = vmatpush1.xpose.msra.mxu0 0.0
    %2597 = vmatprep.subr.mxu0 0.0
    %2598 = vmatpush1.xpose.msra.mxu0 0.0
    %2599 = vmatprep.subr.mxu0 0.0
    %2600 = vmatpush1.xpose.msra.mxu0 0.0
    %2601 = vmatprep.subr.mxu0 0.0
    %2602 = vmatpush1.xpose.msra.mxu0 0.0
    %2603 = vmatprep.subr.mxu0 0.0
    %2604 = vmatpush1.xpose.msra.mxu0 0.0
    %2605 = vmatprep.subr.mxu0 0.0
    %2606 = vmatpush1.xpose.msra.mxu0 0.0
    %2607 = vmatprep.subr.mxu0 0.0
    %2608 = vmatpush1.xpose.msra.mxu0 0.0
    %2609 = vmatprep.subr.mxu0 0.0
    %2610 = vmatpush1.xpose.msra.mxu0 0.0
    %2611 = vmatprep.subr.mxu0 0.0
    %2612 = vmatpush1.xpose.msra.mxu0 0.0
    %2613 = vmatprep.subr.mxu0 0.0
    %2614 = vmatpush1.xpose.msra.mxu0 0.0
    %2615 = vmatprep.subr.mxu0 0.0
    %2616 = vmatpush1.xpose.msra.mxu0 0.0
    %2617 = vmatprep.mubr.f32.mxu0 0.0
    %2618 = vmatmul.mubr.f32.gmra.mrb[0].mxu0 %v2549
    %v2619 = vpop.f32.mrb[0].mxu0
    %v2620 = vadd.f32 %v368, %v2619
    %v2621 = vpop.f32.mrb[0].mxu0
    %2622 = vdwg.mxu0
    %2623 = vrot.lane.b32.xlu0 %v2214, 120
    %v2624 = vpop.permute.xlu0 %2623
    %2625 = vrot.lane.b32.xlu0 %v2210, 88
    %v2626 = vpop.permute.xlu0 %2625
    %v2627 = vsel %vm378, %v2624, 0
    %v2629 = vsel %vm378, %v2626, 0
    %2631 = vmatprep.subr.mxu0 0.0
    %2632 = vmatpush1.xpose.msra.mxu0 %v2629
    %2633 = vmatprep.subr.mxu0 0.0
    %2634 = vmatpush1.xpose.msra.mxu0 0.0
    %2635 = vmatprep.subr.mxu0 0.0
    %2636 = vmatpush1.xpose.msra.mxu0 0.0
    %2637 = vmatprep.subr.mxu0 0.0
    %2638 = vmatpush1.xpose.msra.mxu0 0.0
    %2639 = vmatprep.subr.mxu0 0.0
    %2640 = vmatpush1.xpose.msra.mxu0 0.0
    %2641 = vmatprep.subr.mxu0 0.0
    %2642 = vmatpush1.xpose.msra.mxu0 0.0
    %2643 = vmatprep.subr.mxu0 0.0
    %2644 = vmatpush1.xpose.msra.mxu0 0.0
    %2645 = vmatprep.subr.mxu0 0.0
    %2646 = vmatpush1.xpose.msra.mxu0 0.0
    %2647 = vmatprep.subr.mxu0 0.0
    %2648 = vmatpush1.xpose.msra.mxu0 0.0
    %2649 = vmatprep.subr.mxu0 0.0
    %2650 = vmatpush1.xpose.msra.mxu0 0.0
    %2651 = vmatprep.subr.mxu0 0.0
    %2652 = vmatpush1.xpose.msra.mxu0 0.0
    %2653 = vmatprep.subr.mxu0 0.0
    %2654 = vmatpush1.xpose.msra.mxu0 0.0
    %2655 = vmatprep.subr.mxu0 0.0
    %2656 = vmatpush1.xpose.msra.mxu0 0.0
    %2657 = vmatprep.subr.mxu0 0.0
    %2658 = vmatpush1.xpose.msra.mxu0 0.0
    %2659 = vmatprep.subr.mxu0 0.0
    %2660 = vmatpush1.xpose.msra.mxu0 0.0
    %2661 = vmatprep.subr.mxu0 0.0
    %2662 = vmatpush1.xpose.msra.mxu0 0.0
    %2663 = vmatprep.subr.mxu0 0.0
    %2664 = vmatpush1.xpose.msra.mxu0 0.0
    %2665 = vmatprep.subr.mxu0 0.0
    %2666 = vmatpush1.xpose.msra.mxu0 0.0
    %2667 = vmatprep.subr.mxu0 0.0
    %2668 = vmatpush1.xpose.msra.mxu0 0.0
    %2669 = vmatprep.subr.mxu0 0.0
    %2670 = vmatpush1.xpose.msra.mxu0 0.0
    %2671 = vmatprep.subr.mxu0 0.0
    %2672 = vmatpush1.xpose.msra.mxu0 0.0
    %2673 = vmatprep.subr.mxu0 0.0
    %2674 = vmatpush1.xpose.msra.mxu0 0.0
    %2675 = vmatprep.subr.mxu0 0.0
    %2676 = vmatpush1.xpose.msra.mxu0 0.0
    %2677 = vmatprep.subr.mxu0 0.0
    %2678 = vmatpush1.xpose.msra.mxu0 0.0
    %2679 = vmatprep.subr.mxu0 0.0
    %2680 = vmatpush1.xpose.msra.mxu0 0.0
    %2681 = vmatprep.subr.mxu0 0.0
    %2682 = vmatpush1.xpose.msra.mxu0 0.0
    %2683 = vmatprep.subr.mxu0 0.0
    %2684 = vmatpush1.xpose.msra.mxu0 0.0
    %2685 = vmatprep.subr.mxu0 0.0
    %2686 = vmatpush1.xpose.msra.mxu0 0.0
    %2687 = vmatprep.subr.mxu0 0.0
    %2688 = vmatpush1.xpose.msra.mxu0 0.0
    %2689 = vmatprep.subr.mxu0 0.0
    %2690 = vmatpush1.xpose.msra.mxu0 0.0
    %2691 = vmatprep.subr.mxu0 0.0
    %2692 = vmatpush1.xpose.msra.mxu0 0.0
    %2693 = vmatprep.subr.mxu0 0.0
    %2694 = vmatpush1.xpose.msra.mxu0 0.0
    %2695 = vmatprep.mubr.f32.mxu0 0.0
    %2696 = vmatmul.mubr.f32.gmra.mrb[0].mxu0 %v2627
    %v2697 = vpop.f32.mrb[0].mxu0
    %v2698 = vadd.f32 %v372, %v2697
    %v2699 = vpop.f32.mrb[0].mxu0
    %2700 = vdwg.mxu0
    %v2701 = vsel %vm378, %v2620, -inf
    %2702 = vmax.xlane.f32.xlu0 %v2701
    %v2703 = vpop.xlane.xlu0 %2702
    %v2704 = vsel %vm378, %v2698, -inf
    %2705 = vmax.xlane.f32.xlu0 %v2704
    %v2706 = vpop.xlane.xlu0 %2705
    %v2707 = vsub.f32 %v2620, %v2703
    %v2708 = vsub.f32 %v2698, %v2706
    %v2709 = vmul.f32 %v2707, 1.442695
    %v2710 = vpow.pop %v2709
    %v2711 = vmul.f32 %v2708, 1.442695
    %v2712 = vpow.pop %v2711
    %v2713 = vsel %vm378, %v2710, 0.0
    %2714 = vadd.xlane.f32.xlu0 %v2713
    %v2715 = vpop.xlane.xlu0 %2714
    %v2716 = vsel %vm378, %v2712, 0.0
    %2717 = vadd.xlane.f32.xlu0 %v2716
    %v2718 = vpop.xlane.xlu0 %2717
    %v2719 = vrcp.pop %v2715
    %v2720 = vrcp.pop %v2718
    %v2721 = vmul.f32 %v2710, %v2719
    %v2722 = vmul.f32 %v2712, %v2720
    %2723 = vrot.lane.b32.xlu0 %v2205, 56
    %v2724 = vpop.permute.xlu0 %2723
    %v2727 = vsel %vm378, %v2721, 0
    %2729 = vmatprep.subr.mxu0 0.0
    %2730 = vmatpush1.msra.mxu0 %v2724
    %2731 = vmatprep.subr.mxu0 0.0
    %2732 = vmatpush1.msra.mxu0 0.0
    %2733 = vmatprep.subr.mxu0 0.0
    %2734 = vmatpush1.msra.mxu0 0.0
    %2735 = vmatprep.subr.mxu0 0.0
    %2736 = vmatpush1.msra.mxu0 0.0
    %2737 = vmatprep.subr.mxu0 0.0
    %2738 = vmatpush1.msra.mxu0 0.0
    %2739 = vmatprep.subr.mxu0 0.0
    %2740 = vmatpush1.msra.mxu0 0.0
    %2741 = vmatprep.subr.mxu0 0.0
    %2742 = vmatpush1.msra.mxu0 0.0
    %2743 = vmatprep.subr.mxu0 0.0
    %2744 = vmatpush1.msra.mxu0 0.0
    %2745 = vmatprep.subr.mxu0 0.0
    %2746 = vmatpush1.msra.mxu0 0.0
    %2747 = vmatprep.subr.mxu0 0.0
    %2748 = vmatpush1.msra.mxu0 0.0
    %2749 = vmatprep.subr.mxu0 0.0
    %2750 = vmatpush1.msra.mxu0 0.0
    %2751 = vmatprep.subr.mxu0 0.0
    %2752 = vmatpush1.msra.mxu0 0.0
    %2753 = vmatprep.subr.mxu0 0.0
    %2754 = vmatpush1.msra.mxu0 0.0
    %2755 = vmatprep.subr.mxu0 0.0
    %2756 = vmatpush1.msra.mxu0 0.0
    %2757 = vmatprep.subr.mxu0 0.0
    %2758 = vmatpush1.msra.mxu0 0.0
    %2759 = vmatprep.subr.mxu0 0.0
    %2760 = vmatpush1.msra.mxu0 0.0
    %2761 = vmatprep.subr.mxu0 0.0
    %2762 = vmatpush1.msra.mxu0 0.0
    %2763 = vmatprep.subr.mxu0 0.0
    %2764 = vmatpush1.msra.mxu0 0.0
    %2765 = vmatprep.subr.mxu0 0.0
    %2766 = vmatpush1.msra.mxu0 0.0
    %2767 = vmatprep.subr.mxu0 0.0
    %2768 = vmatpush1.msra.mxu0 0.0
    %2769 = vmatprep.subr.mxu0 0.0
    %2770 = vmatpush1.msra.mxu0 0.0
    %2771 = vmatprep.subr.mxu0 0.0
    %2772 = vmatpush1.msra.mxu0 0.0
    %2773 = vmatprep.subr.mxu0 0.0
    %2774 = vmatpush1.msra.mxu0 0.0
    %2775 = vmatprep.subr.mxu0 0.0
    %2776 = vmatpush1.msra.mxu0 0.0
    %2777 = vmatprep.subr.mxu0 0.0
    %2778 = vmatpush1.msra.mxu0 0.0
    %2779 = vmatprep.subr.mxu0 0.0
    %2780 = vmatpush1.msra.mxu0 0.0
    %2781 = vmatprep.subr.mxu0 0.0
    %2782 = vmatpush1.msra.mxu0 0.0
    %2783 = vmatprep.subr.mxu0 0.0
    %2784 = vmatpush1.msra.mxu0 0.0
    %2785 = vmatprep.subr.mxu0 0.0
    %2786 = vmatpush1.msra.mxu0 0.0
    %2787 = vmatprep.subr.mxu0 0.0
    %2788 = vmatpush1.msra.mxu0 0.0
    %2789 = vmatprep.subr.mxu0 0.0
    %2790 = vmatpush1.msra.mxu0 0.0
    %2791 = vmatprep.subr.mxu0 0.0
    %2792 = vmatpush1.msra.mxu0 0.0
    %2793 = vmatprep.mubr.f32.mxu0 0.0
    %2794 = vmatmul.mubr.f32.gmra.mrb[0].mxu0 %v2727
    %v2795 = vpop.f32.mrb[0].mxu0
    %v2796 = vadd.f32 0.0, %v2795
    %v2797 = vpop.f32.mrb[0].mxu0
    %2798 = vdwg.mxu0
    %2799 = vrot.lane.b32.xlu0 %v2210, 56
    %v2800 = vpop.permute.xlu0 %2799
    %v2803 = vsel %vm378, %v2722, 0
    %2805 = vmatprep.subr.mxu0 0.0
    %2806 = vmatpush1.msra.mxu0 %v2800
    %2807 = vmatprep.subr.mxu0 0.0
    %2808 = vmatpush1.msra.mxu0 0.0
    %2809 = vmatprep.subr.mxu0 0.0
    %2810 = vmatpush1.msra.mxu0 0.0
    %2811 = vmatprep.subr.mxu0 0.0
    %2812 = vmatpush1.msra.mxu0 0.0
    %2813 = vmatprep.subr.mxu0 0.0
    %2814 = vmatpush1.msra.mxu0 0.0
    %2815 = vmatprep.subr.mxu0 0.0
    %2816 = vmatpush1.msra.mxu0 0.0
    %2817 = vmatprep.subr.mxu0 0.0
    %2818 = vmatpush1.msra.mxu0 0.0
    %2819 = vmatprep.subr.mxu0 0.0
    %2820 = vmatpush1.msra.mxu0 0.0
    %2821 = vmatprep.subr.mxu0 0.0
    %2822 = vmatpush1.msra.mxu0 0.0
    %2823 = vmatprep.subr.mxu0 0.0
    %2824 = vmatpush1.msra.mxu0 0.0
    %2825 = vmatprep.subr.mxu0 0.0
    %2826 = vmatpush1.msra.mxu0 0.0
    %2827 = vmatprep.subr.mxu0 0.0
    %2828 = vmatpush1.msra.mxu0 0.0
    %2829 = vmatprep.subr.mxu0 0.0
    %2830 = vmatpush1.msra.mxu0 0.0
    %2831 = vmatprep.subr.mxu0 0.0
    %2832 = vmatpush1.msra.mxu0 0.0
    %2833 = vmatprep.subr.mxu0 0.0
    %2834 = vmatpush1.msra.mxu0 0.0
    %2835 = vmatprep.subr.mxu0 0.0
    %2836 = vmatpush1.msra.mxu0 0.0
    %2837 = vmatprep.subr.mxu0 0.0
    %2838 = vmatpush1.msra.mxu0 0.0
    %2839 = vmatprep.subr.mxu0 0.0
    %2840 = vmatpush1.msra.mxu0 0.0
    %2841 = vmatprep.subr.mxu0 0.0
    %2842 = vmatpush1.msra.mxu0 0.0
    %2843 = vmatprep.subr.mxu0 0.0
    %2844 = vmatpush1.msra.mxu0 0.0
    %2845 = vmatprep.subr.mxu0 0.0
    %2846 = vmatpush1.msra.mxu0 0.0
    %2847 = vmatprep.subr.mxu0 0.0
    %2848 = vmatpush1.msra.mxu0 0.0
    %2849 = vmatprep.subr.mxu0 0.0
    %2850 = vmatpush1.msra.mxu0 0.0
    %2851 = vmatprep.subr.mxu0 0.0
    %2852 = vmatpush1.msra.mxu0 0.0
    %2853 = vmatprep.subr.mxu0 0.0
    %2854 = vmatpush1.msra.mxu0 0.0
    %2855 = vmatprep.subr.mxu0 0.0
    %2856 = vmatpush1.msra.mxu0 0.0
    %2857 = vmatprep.subr.mxu0 0.0
    %2858 = vmatpush1.msra.mxu0 0.0
    %2859 = vmatprep.subr.mxu0 0.0
    %2860 = vmatpush1.msra.mxu0 0.0
    %2861 = vmatprep.subr.mxu0 0.0
    %2862 = vmatpush1.msra.mxu0 0.0
    %2863 = vmatprep.subr.mxu0 0.0
    %2864 = vmatpush1.msra.mxu0 0.0
    %2865 = vmatprep.subr.mxu0 0.0
    %2866 = vmatpush1.msra.mxu0 0.0
    %2867 = vmatprep.subr.mxu0 0.0
    %2868 = vmatpush1.msra.mxu0 0.0
    %2869 = vmatprep.mubr.f32.mxu0 0.0
    %2870 = vmatmul.mubr.f32.gmra.mrb[0].mxu0 %v2803
    %v2871 = vpop.f32.mrb[0].mxu0
    %v2872 = vadd.f32 0.0, %v2871
    %v2873 = vpop.f32.mrb[0].mxu0
    %2874 = vdwg.mxu0
    %2875 = vrot.lane.b32.xlu0 %v2213, 112
    %v2876 = vpop.permute.xlu0 %2875
    %2877 = vrot.lane.b32.xlu0 %v2205, 80
    %v2878 = vpop.permute.xlu0 %2877
    %v2879 = vsel %vm378, %v2876, 0
    %v2881 = vsel %vm378, %v2878, 0
    %2883 = vmatprep.subr.mxu0 0.0
    %2884 = vmatpush1.xpose.msra.mxu0 %v2881
    %2885 = vmatprep.subr.mxu0 0.0
    %2886 = vmatpush1.xpose.msra.mxu0 0.0
    %2887 = vmatprep.subr.mxu0 0.0
    %2888 = vmatpush1.xpose.msra.mxu0 0.0
    %2889 = vmatprep.subr.mxu0 0.0
    %2890 = vmatpush1.xpose.msra.mxu0 0.0
    %2891 = vmatprep.subr.mxu0 0.0
    %2892 = vmatpush1.xpose.msra.mxu0 0.0
    %2893 = vmatprep.subr.mxu0 0.0
    %2894 = vmatpush1.xpose.msra.mxu0 0.0
    %2895 = vmatprep.subr.mxu0 0.0
    %2896 = vmatpush1.xpose.msra.mxu0 0.0
    %2897 = vmatprep.subr.mxu0 0.0
    %2898 = vmatpush1.xpose.msra.mxu0 0.0
    %2899 = vmatprep.subr.mxu0 0.0
    %2900 = vmatpush1.xpose.msra.mxu0 0.0
    %2901 = vmatprep.subr.mxu0 0.0
    %2902 = vmatpush1.xpose.msra.mxu0 0.0
    %2903 = vmatprep.subr.mxu0 0.0
    %2904 = vmatpush1.xpose.msra.mxu0 0.0
    %2905 = vmatprep.subr.mxu0 0.0
    %2906 = vmatpush1.xpose.msra.mxu0 0.0
    %2907 = vmatprep.subr.mxu0 0.0
    %2908 = vmatpush1.xpose.msra.mxu0 0.0
    %2909 = vmatprep.subr.mxu0 0.0
    %2910 = vmatpush1.xpose.msra.mxu0 0.0
    %2911 = vmatprep.subr.mxu0 0.0
    %2912 = vmatpush1.xpose.msra.mxu0 0.0
    %2913 = vmatprep.subr.mxu0 0.0
    %2914 = vmatpush1.xpose.msra.mxu0 0.0
    %2915 = vmatprep.subr.mxu0 0.0
    %2916 = vmatpush1.xpose.msra.mxu0 0.0
    %2917 = vmatprep.subr.mxu0 0.0
    %2918 = vmatpush1.xpose.msra.mxu0 0.0
    %2919 = vmatprep.subr.mxu0 0.0
    %2920 = vmatpush1.xpose.msra.mxu0 0.0
    %2921 = vmatprep.subr.mxu0 0.0
    %2922 = vmatpush1.xpose.msra.mxu0 0.0
    %2923 = vmatprep.subr.mxu0 0.0
    %2924 = vmatpush1.xpose.msra.mxu0 0.0
    %2925 = vmatprep.subr.mxu0 0.0
    %2926 = vmatpush1.xpose.msra.mxu0 0.0
    %2927 = vmatprep.subr.mxu0 0.0
    %2928 = vmatpush1.xpose.msra.mxu0 0.0
    %2929 = vmatprep.subr.mxu0 0.0
    %2930 = vmatpush1.xpose.msra.mxu0 0.0
    %2931 = vmatprep.subr.mxu0 0.0
    %2932 = vmatpush1.xpose.msra.mxu0 0.0
    %2933 = vmatprep.subr.mxu0 0.0
    %2934 = vmatpush1.xpose.msra.mxu0 0.0
    %2935 = vmatprep.subr.mxu0 0.0
    %2936 = vmatpush1.xpose.msra.mxu0 0.0
    %2937 = vmatprep.subr.mxu0 0.0
    %2938 = vmatpush1.xpose.msra.mxu0 0.0
    %2939 = vmatprep.subr.mxu0 0.0
    %2940 = vmatpush1.xpose.msra.mxu0 0.0
    %2941 = vmatprep.subr.mxu0 0.0
    %2942 = vmatpush1.xpose.msra.mxu0 0.0
    %2943 = vmatprep.subr.mxu0 0.0
    %2944 = vmatpush1.xpose.msra.mxu0 0.0
    %2945 = vmatprep.subr.mxu0 0.0
    %2946 = vmatpush1.xpose.msra.mxu0 0.0
    %2947 = vmatprep.mubr.f32.mxu0 0.0
    %2948 = vmatmul.mubr.f32.gmra.mrb[0].mxu0 %v2879
    %v2949 = vpop.f32.mrb[0].mxu0
    %v2950 = vadd.f32 %v368, %v2949
    %v2951 = vpop.f32.mrb[0].mxu0
    %2952 = vdwg.mxu0
    %2953 = vrot.lane.b32.xlu0 %v2214, 112
    %v2954 = vpop.permute.xlu0 %2953
    %2955 = vrot.lane.b32.xlu0 %v2210, 80
    %v2956 = vpop.permute.xlu0 %2955
    %v2957 = vsel %vm378, %v2954, 0
    %v2959 = vsel %vm378, %v2956, 0
    %2961 = vmatprep.subr.mxu0 0.0
    %2962 = vmatpush1.xpose.msra.mxu0 %v2959
    %2963 = vmatprep.subr.mxu0 0.0
    %2964 = vmatpush1.xpose.msra.mxu0 0.0
    %2965 = vmatprep.subr.mxu0 0.0
    %2966 = vmatpush1.xpose.msra.mxu0 0.0
    %2967 = vmatprep.subr.mxu0 0.0
    %2968 = vmatpush1.xpose.msra.mxu0 0.0
    %2969 = vmatprep.subr.mxu0 0.0
    %2970 = vmatpush1.xpose.msra.mxu0 0.0
    %2971 = vmatprep.subr.mxu0 0.0
    %2972 = vmatpush1.xpose.msra.mxu0 0.0
    %2973 = vmatprep.subr.mxu0 0.0
    %2974 = vmatpush1.xpose.msra.mxu0 0.0
    %2975 = vmatprep.subr.mxu0 0.0
    %2976 = vmatpush1.xpose.msra.mxu0 0.0
    %2977 = vmatprep.subr.mxu0 0.0
    %2978 = vmatpush1.xpose.msra.mxu0 0.0
    %2979 = vmatprep.subr.mxu0 0.0
    %2980 = vmatpush1.xpose.msra.mxu0 0.0
    %2981 = vmatprep.subr.mxu0 0.0
    %2982 = vmatpush1.xpose.msra.mxu0 0.0
    %2983 = vmatprep.subr.mxu0 0.0
    %2984 = vmatpush1.xpose.msra.mxu0 0.0
    %2985 = vmatprep.subr.mxu0 0.0
    %2986 = vmatpush1.xpose.msra.mxu0 0.0
    %2987 = vmatprep.subr.mxu0 0.0
    %2988 = vmatpush1.xpose.msra.mxu0 0.0
    %2989 = vmatprep.subr.mxu0 0.0
    %2990 = vmatpush1.xpose.msra.mxu0 0.0
    %2991 = vmatprep.subr.mxu0 0.0
    %2992 = vmatpush1.xpose.msra.mxu0 0.0
    %2993 = vmatprep.subr.mxu0 0.0
    %2994 = vmatpush1.xpose.msra.mxu0 0.0
    %2995 = vmatprep.subr.mxu0 0.0
    %2996 = vmatpush1.xpose.msra.mxu0 0.0
    %2997 = vmatprep.subr.mxu0 0.0
    %2998 = vmatpush1.xpose.msra.mxu0 0.0
    %2999 = vmatprep.subr.mxu0 0.0
    %3000 = vmatpush1.xpose.msra.mxu0 0.0
    %3001 = vmatprep.subr.mxu0 0.0
    %3002 = vmatpush1.xpose.msra.mxu0 0.0
    %3003 = vmatprep.subr.mxu0 0.0
    %3004 = vmatpush1.xpose.msra.mxu0 0.0
    %3005 = vmatprep.subr.mxu0 0.0
    %3006 = vmatpush1.xpose.msra.mxu0 0.0
    %3007 = vmatprep.subr.mxu0 0.0
    %3008 = vmatpush1.xpose.msra.mxu0 0.0
    %3009 = vmatprep.subr.mxu0 0.0
    %3010 = vmatpush1.xpose.msra.mxu0 0.0
    %3011 = vmatprep.subr.mxu0 0.0
    %3012 = vmatpush1.xpose.msra.mxu0 0.0
    %3013 = vmatprep.subr.mxu0 0.0
    %3014 = vmatpush1.xpose.msra.mxu0 0.0
    %3015 = vmatprep.subr.mxu0 0.0
    %3016 = vmatpush1.xpose.msra.mxu0 0.0
    %3017 = vmatprep.subr.mxu0 0.0
    %3018 = vmatpush1.xpose.msra.mxu0 0.0
    %3019 = vmatprep.subr.mxu0 0.0
    %3020 = vmatpush1.xpose.msra.mxu0 0.0
    %3021 = vmatprep.subr.mxu0 0.0
    %3022 = vmatpush1.xpose.msra.mxu0 0.0
    %3023 = vmatprep.subr.mxu0 0.0
    %3024 = vmatpush1.xpose.msra.mxu0 0.0
    %3025 = vmatprep.mubr.f32.mxu0 0.0
    %3026 = vmatmul.mubr.f32.gmra.mrb[0].mxu0 %v2957
    %v3027 = vpop.f32.mrb[0].mxu0
    %v3028 = vadd.f32 %v372, %v3027
    %v3029 = vpop.f32.mrb[0].mxu0
    %3030 = vdwg.mxu0
    %v3031 = vsel %vm378, %v2950, -inf
    %3032 = vmax.xlane.f32.xlu0 %v3031
    %v3033 = vpop.xlane.xlu0 %3032
    %v3034 = vsel %vm378, %v3028, -inf
    %3035 = vmax.xlane.f32.xlu0 %v3034
    %v3036 = vpop.xlane.xlu0 %3035
    %v3037 = vsub.f32 %v2950, %v3033
    %v3038 = vsub.f32 %v3028, %v3036
    %v3039 = vmul.f32 %v3037, 1.442695
    %v3040 = vpow.pop %v3039
    %v3041 = vmul.f32 %v3038, 1.442695
    %v3042 = vpow.pop %v3041
    %v3043 = vsel %vm378, %v3040, 0.0
    %3044 = vadd.xlane.f32.xlu0 %v3043
    %v3045 = vpop.xlane.xlu0 %3044
    %v3046 = vsel %vm378, %v3042, 0.0
    %3047 = vadd.xlane.f32.xlu0 %v3046
    %v3048 = vpop.xlane.xlu0 %3047
    %v3049 = vrcp.pop %v3045
    %v3050 = vrcp.pop %v3048
    %v3051 = vmul.f32 %v3040, %v3049
    %v3052 = vmul.f32 %v3042, %v3050
    %3053 = vrot.lane.b32.xlu0 %v2205, 48
    %v3054 = vpop.permute.xlu0 %3053
    %v3057 = vsel %vm378, %v3051, 0
    %3059 = vmatprep.subr.mxu0 0.0
    %3060 = vmatpush1.msra.mxu0 %v3054
    %3061 = vmatprep.subr.mxu0 0.0
    %3062 = vmatpush1.msra.mxu0 0.0
    %3063 = vmatprep.subr.mxu0 0.0
    %3064 = vmatpush1.msra.mxu0 0.0
    %3065 = vmatprep.subr.mxu0 0.0
    %3066 = vmatpush1.msra.mxu0 0.0
    %3067 = vmatprep.subr.mxu0 0.0
    %3068 = vmatpush1.msra.mxu0 0.0
    %3069 = vmatprep.subr.mxu0 0.0
    %3070 = vmatpush1.msra.mxu0 0.0
    %3071 = vmatprep.subr.mxu0 0.0
    %3072 = vmatpush1.msra.mxu0 0.0
    %3073 = vmatprep.subr.mxu0 0.0
    %3074 = vmatpush1.msra.mxu0 0.0
    %3075 = vmatprep.subr.mxu0 0.0
    %3076 = vmatpush1.msra.mxu0 0.0
    %3077 = vmatprep.subr.mxu0 0.0
    %3078 = vmatpush1.msra.mxu0 0.0
    %3079 = vmatprep.subr.mxu0 0.0
    %3080 = vmatpush1.msra.mxu0 0.0
    %3081 = vmatprep.subr.mxu0 0.0
    %3082 = vmatpush1.msra.mxu0 0.0
    %3083 = vmatprep.subr.mxu0 0.0
    %3084 = vmatpush1.msra.mxu0 0.0
    %3085 = vmatprep.subr.mxu0 0.0
    %3086 = vmatpush1.msra.mxu0 0.0
    %3087 = vmatprep.subr.mxu0 0.0
    %3088 = vmatpush1.msra.mxu0 0.0
    %3089 = vmatprep.subr.mxu0 0.0
    %3090 = vmatpush1.msra.mxu0 0.0
    %3091 = vmatprep.subr.mxu0 0.0
    %3092 = vmatpush1.msra.mxu0 0.0
    %3093 = vmatprep.subr.mxu0 0.0
    %3094 = vmatpush1.msra.mxu0 0.0
    %3095 = vmatprep.subr.mxu0 0.0
    %3096 = vmatpush1.msra.mxu0 0.0
    %3097 = vmatprep.subr.mxu0 0.0
    %3098 = vmatpush1.msra.mxu0 0.0
    %3099 = vmatprep.subr.mxu0 0.0
    %3100 = vmatpush1.msra.mxu0 0.0
    %3101 = vmatprep.subr.mxu0 0.0
    %3102 = vmatpush1.msra.mxu0 0.0
    %3103 = vmatprep.subr.mxu0 0.0
    %3104 = vmatpush1.msra.mxu0 0.0
    %3105 = vmatprep.subr.mxu0 0.0
    %3106 = vmatpush1.msra.mxu0 0.0
    %3107 = vmatprep.subr.mxu0 0.0
    %3108 = vmatpush1.msra.mxu0 0.0
    %3109 = vmatprep.subr.mxu0 0.0
    %3110 = vmatpush1.msra.mxu0 0.0
    %3111 = vmatprep.subr.mxu0 0.0
    %3112 = vmatpush1.msra.mxu0 0.0
    %3113 = vmatprep.subr.mxu0 0.0
    %3114 = vmatpush1.msra.mxu0 0.0
    %3115 = vmatprep.subr.mxu0 0.0
    %3116 = vmatpush1.msra.mxu0 0.0
    %3117 = vmatprep.subr.mxu0 0.0
    %3118 = vmatpush1.msra.mxu0 0.0
    %3119 = vmatprep.subr.mxu0 0.0
    %3120 = vmatpush1.msra.mxu0 0.0
    %3121 = vmatprep.subr.mxu0 0.0
    %3122 = vmatpush1.msra.mxu0 0.0
    %3123 = vmatprep.mubr.f32.mxu0 0.0
    %3124 = vmatmul.mubr.f32.gmra.mrb[0].mxu0 %v3057
    %v3125 = vpop.f32.mrb[0].mxu0
    %v3126 = vadd.f32 0.0, %v3125
    %v3127 = vpop.f32.mrb[0].mxu0
    %3128 = vdwg.mxu0
    %3129 = vrot.lane.b32.xlu0 %v2210, 48
    %v3130 = vpop.permute.xlu0 %3129
    %v3133 = vsel %vm378, %v3052, 0
    %3135 = vmatprep.subr.mxu0 0.0
    %3136 = vmatpush1.msra.mxu0 %v3130
    %3137 = vmatprep.subr.mxu0 0.0
    %3138 = vmatpush1.msra.mxu0 0.0
    %3139 = vmatprep.subr.mxu0 0.0
    %3140 = vmatpush1.msra.mxu0 0.0
    %3141 = vmatprep.subr.mxu0 0.0
    %3142 = vmatpush1.msra.mxu0 0.0
    %3143 = vmatprep.subr.mxu0 0.0
    %3144 = vmatpush1.msra.mxu0 0.0
    %3145 = vmatprep.subr.mxu0 0.0
    %3146 = vmatpush1.msra.mxu0 0.0
    %3147 = vmatprep.subr.mxu0 0.0
    %3148 = vmatpush1.msra.mxu0 0.0
    %3149 = vmatprep.subr.mxu0 0.0
    %3150 = vmatpush1.msra.mxu0 0.0
    %3151 = vmatprep.subr.mxu0 0.0
    %3152 = vmatpush1.msra.mxu0 0.0
    %3153 = vmatprep.subr.mxu0 0.0
    %3154 = vmatpush1.msra.mxu0 0.0
    %3155 = vmatprep.subr.mxu0 0.0
    %3156 = vmatpush1.msra.mxu0 0.0
    %3157 = vmatprep.subr.mxu0 0.0
    %3158 = vmatpush1.msra.mxu0 0.0
    %3159 = vmatprep.subr.mxu0 0.0
    %3160 = vmatpush1.msra.mxu0 0.0
    %3161 = vmatprep.subr.mxu0 0.0
    %3162 = vmatpush1.msra.mxu0 0.0
    %3163 = vmatprep.subr.mxu0 0.0
    %3164 = vmatpush1.msra.mxu0 0.0
    %3165 = vmatprep.subr.mxu0 0.0
    %3166 = vmatpush1.msra.mxu0 0.0
    %3167 = vmatprep.subr.mxu0 0.0
    %3168 = vmatpush1.msra.mxu0 0.0
    %3169 = vmatprep.subr.mxu0 0.0
    %3170 = vmatpush1.msra.mxu0 0.0
    %3171 = vmatprep.subr.mxu0 0.0
    %3172 = vmatpush1.msra.mxu0 0.0
    %3173 = vmatprep.subr.mxu0 0.0
    %3174 = vmatpush1.msra.mxu0 0.0
    %3175 = vmatprep.subr.mxu0 0.0
    %3176 = vmatpush1.msra.mxu0 0.0
    %3177 = vmatprep.subr.mxu0 0.0
    %3178 = vmatpush1.msra.mxu0 0.0
    %3179 = vmatprep.subr.mxu0 0.0
    %3180 = vmatpush1.msra.mxu0 0.0
    %3181 = vmatprep.subr.mxu0 0.0
    %3182 = vmatpush1.msra.mxu0 0.0
    %3183 = vmatprep.subr.mxu0 0.0
    %3184 = vmatpush1.msra.mxu0 0.0
    %3185 = vmatprep.subr.mxu0 0.0
    %3186 = vmatpush1.msra.mxu0 0.0
    %3187 = vmatprep.subr.mxu0 0.0
    %3188 = vmatpush1.msra.mxu0 0.0
    %3189 = vmatprep.subr.mxu0 0.0
    %3190 = vmatpush1.msra.mxu0 0.0
    %3191 = vmatprep.subr.mxu0 0.0
    %3192 = vmatpush1.msra.mxu0 0.0
    %3193 = vmatprep.subr.mxu0 0.0
    %3194 = vmatpush1.msra.mxu0 0.0
    %3195 = vmatprep.subr.mxu0 0.0
    %3196 = vmatpush1.msra.mxu0 0.0
    %3197 = vmatprep.subr.mxu0 0.0
    %3198 = vmatpush1.msra.mxu0 0.0
    %3199 = vmatprep.mubr.f32.mxu0 0.0
    %3200 = vmatmul.mubr.f32.gmra.mrb[0].mxu0 %v3133
    %v3201 = vpop.f32.mrb[0].mxu0
    %v3202 = vadd.f32 0.0, %v3201
    %v3203 = vpop.f32.mrb[0].mxu0
    %3204 = vdwg.mxu0
    %3205 = vrot.lane.b32.xlu0 %v2213, 104
    %v3206 = vpop.permute.xlu0 %3205
    %3207 = vrot.lane.b32.xlu0 %v2205, 72
    %v3208 = vpop.permute.xlu0 %3207
    %v3209 = vsel %vm378, %v3206, 0
    %v3211 = vsel %vm378, %v3208, 0
    %3213 = vmatprep.subr.mxu0 0.0
    %3214 = vmatpush1.xpose.msra.mxu0 %v3211
    %3215 = vmatprep.subr.mxu0 0.0
    %3216 = vmatpush1.xpose.msra.mxu0 0.0
    %3217 = vmatprep.subr.mxu0 0.0
    %3218 = vmatpush1.xpose.msra.mxu0 0.0
    %3219 = vmatprep.subr.mxu0 0.0
    %3220 = vmatpush1.xpose.msra.mxu0 0.0
    %3221 = vmatprep.subr.mxu0 0.0
    %3222 = vmatpush1.xpose.msra.mxu0 0.0
    %3223 = vmatprep.subr.mxu0 0.0
    %3224 = vmatpush1.xpose.msra.mxu0 0.0
    %3225 = vmatprep.subr.mxu0 0.0
    %3226 = vmatpush1.xpose.msra.mxu0 0.0
    %3227 = vmatprep.subr.mxu0 0.0
    %3228 = vmatpush1.xpose.msra.mxu0 0.0
    %3229 = vmatprep.subr.mxu0 0.0
    %3230 = vmatpush1.xpose.msra.mxu0 0.0
    %3231 = vmatprep.subr.mxu0 0.0
    %3232 = vmatpush1.xpose.msra.mxu0 0.0
    %3233 = vmatprep.subr.mxu0 0.0
    %3234 = vmatpush1.xpose.msra.mxu0 0.0
    %3235 = vmatprep.subr.mxu0 0.0
    %3236 = vmatpush1.xpose.msra.mxu0 0.0
    %3237 = vmatprep.subr.mxu0 0.0
    %3238 = vmatpush1.xpose.msra.mxu0 0.0
    %3239 = vmatprep.subr.mxu0 0.0
    %3240 = vmatpush1.xpose.msra.mxu0 0.0
    %3241 = vmatprep.subr.mxu0 0.0
    %3242 = vmatpush1.xpose.msra.mxu0 0.0
    %3243 = vmatprep.subr.mxu0 0.0
    %3244 = vmatpush1.xpose.msra.mxu0 0.0
    %3245 = vmatprep.subr.mxu0 0.0
    %3246 = vmatpush1.xpose.msra.mxu0 0.0
    %3247 = vmatprep.subr.mxu0 0.0
    %3248 = vmatpush1.xpose.msra.mxu0 0.0
    %3249 = vmatprep.subr.mxu0 0.0
    %3250 = vmatpush1.xpose.msra.mxu0 0.0
    %3251 = vmatprep.subr.mxu0 0.0
    %3252 = vmatpush1.xpose.msra.mxu0 0.0
    %3253 = vmatprep.subr.mxu0 0.0
    %3254 = vmatpush1.xpose.msra.mxu0 0.0
    %3255 = vmatprep.subr.mxu0 0.0
    %3256 = vmatpush1.xpose.msra.mxu0 0.0
    %3257 = vmatprep.subr.mxu0 0.0
    %3258 = vmatpush1.xpose.msra.mxu0 0.0
    %3259 = vmatprep.subr.mxu0 0.0
    %3260 = vmatpush1.xpose.msra.mxu0 0.0
    %3261 = vmatprep.subr.mxu0 0.0
    %3262 = vmatpush1.xpose.msra.mxu0 0.0
    %3263 = vmatprep.subr.mxu0 0.0
    %3264 = vmatpush1.xpose.msra.mxu0 0.0
    %3265 = vmatprep.subr.mxu0 0.0
    %3266 = vmatpush1.xpose.msra.mxu0 0.0
    %3267 = vmatprep.subr.mxu0 0.0
    %3268 = vmatpush1.xpose.msra.mxu0 0.0
    %3269 = vmatprep.subr.mxu0 0.0
    %3270 = vmatpush1.xpose.msra.mxu0 0.0
    %3271 = vmatprep.subr.mxu0 0.0
    %3272 = vmatpush1.xpose.msra.mxu0 0.0
    %3273 = vmatprep.subr.mxu0 0.0
    %3274 = vmatpush1.xpose.msra.mxu0 0.0
    %3275 = vmatprep.subr.mxu0 0.0
    %3276 = vmatpush1.xpose.msra.mxu0 0.0
    %3277 = vmatprep.mubr.f32.mxu0 0.0
    %3278 = vmatmul.mubr.f32.gmra.mrb[0].mxu0 %v3209
    %v3279 = vpop.f32.mrb[0].mxu0
    %v3280 = vadd.f32 %v368, %v3279
    %v3281 = vpop.f32.mrb[0].mxu0
    %3282 = vdwg.mxu0
    %3283 = vrot.lane.b32.xlu0 %v2214, 104
    %v3284 = vpop.permute.xlu0 %3283
    %3285 = vrot.lane.b32.xlu0 %v2210, 72
    %v3286 = vpop.permute.xlu0 %3285
    %v3287 = vsel %vm378, %v3284, 0
    %v3289 = vsel %vm378, %v3286, 0
    %3291 = vmatprep.subr.mxu0 0.0
    %3292 = vmatpush1.xpose.msra.mxu0 %v3289
    %3293 = vmatprep.subr.mxu0 0.0
    %3294 = vmatpush1.xpose.msra.mxu0 0.0
    %3295 = vmatprep.subr.mxu0 0.0
    %3296 = vmatpush1.xpose.msra.mxu0 0.0
    %3297 = vmatprep.subr.mxu0 0.0
    %3298 = vmatpush1.xpose.msra.mxu0 0.0
    %3299 = vmatprep.subr.mxu0 0.0
    %3300 = vmatpush1.xpose.msra.mxu0 0.0
    %3301 = vmatprep.subr.mxu0 0.0
    %3302 = vmatpush1.xpose.msra.mxu0 0.0
    %3303 = vmatprep.subr.mxu0 0.0
    %3304 = vmatpush1.xpose.msra.mxu0 0.0
    %3305 = vmatprep.subr.mxu0 0.0
    %3306 = vmatpush1.xpose.msra.mxu0 0.0
    %3307 = vmatprep.subr.mxu0 0.0
    %3308 = vmatpush1.xpose.msra.mxu0 0.0
    %3309 = vmatprep.subr.mxu0 0.0
    %3310 = vmatpush1.xpose.msra.mxu0 0.0
    %3311 = vmatprep.subr.mxu0 0.0
    %3312 = vmatpush1.xpose.msra.mxu0 0.0
    %3313 = vmatprep.subr.mxu0 0.0
    %3314 = vmatpush1.xpose.msra.mxu0 0.0
    %3315 = vmatprep.subr.mxu0 0.0
    %3316 = vmatpush1.xpose.msra.mxu0 0.0
    %3317 = vmatprep.subr.mxu0 0.0
    %3318 = vmatpush1.xpose.msra.mxu0 0.0
    %3319 = vmatprep.subr.mxu0 0.0
    %3320 = vmatpush1.xpose.msra.mxu0 0.0
    %3321 = vmatprep.subr.mxu0 0.0
    %3322 = vmatpush1.xpose.msra.mxu0 0.0
    %3323 = vmatprep.subr.mxu0 0.0
    %3324 = vmatpush1.xpose.msra.mxu0 0.0
    %3325 = vmatprep.subr.mxu0 0.0
    %3326 = vmatpush1.xpose.msra.mxu0 0.0
    %3327 = vmatprep.subr.mxu0 0.0
    %3328 = vmatpush1.xpose.msra.mxu0 0.0
    %3329 = vmatprep.subr.mxu0 0.0
    %3330 = vmatpush1.xpose.msra.mxu0 0.0
    %3331 = vmatprep.subr.mxu0 0.0
    %3332 = vmatpush1.xpose.msra.mxu0 0.0
    %3333 = vmatprep.subr.mxu0 0.0
    %3334 = vmatpush1.xpose.msra.mxu0 0.0
    %3335 = vmatprep.subr.mxu0 0.0
    %3336 = vmatpush1.xpose.msra.mxu0 0.0
    %3337 = vmatprep.subr.mxu0 0.0
    %3338 = vmatpush1.xpose.msra.mxu0 0.0
    %3339 = vmatprep.subr.mxu0 0.0
    %3340 = vmatpush1.xpose.msra.mxu0 0.0
    %3341 = vmatprep.subr.mxu0 0.0
    %3342 = vmatpush1.xpose.msra.mxu0 0.0
    %3343 = vmatprep.subr.mxu0 0.0
    %3344 = vmatpush1.xpose.msra.mxu0 0.0
    %3345 = vmatprep.subr.mxu0 0.0
    %3346 = vmatpush1.xpose.msra.mxu0 0.0
    %3347 = vmatprep.subr.mxu0 0.0
    %3348 = vmatpush1.xpose.msra.mxu0 0.0
    %3349 = vmatprep.subr.mxu0 0.0
    %3350 = vmatpush1.xpose.msra.mxu0 0.0
    %3351 = vmatprep.subr.mxu0 0.0
    %3352 = vmatpush1.xpose.msra.mxu0 0.0
    %3353 = vmatprep.subr.mxu0 0.0
    %3354 = vmatpush1.xpose.msra.mxu0 0.0
    %3355 = vmatprep.mubr.f32.mxu0 0.0
    %3356 = vmatmul.mubr.f32.gmra.mrb[0].mxu0 %v3287
    %v3357 = vpop.f32.mrb[0].mxu0
    %v3358 = vadd.f32 %v372, %v3357
    %v3359 = vpop.f32.mrb[0].mxu0
    %3360 = vdwg.mxu0
    %v3361 = vsel %vm378, %v3280, -inf
    %3362 = vmax.xlane.f32.xlu0 %v3361
    %v3363 = vpop.xlane.xlu0 %3362
    %v3364 = vsel %vm378, %v3358, -inf
    %3365 = vmax.xlane.f32.xlu0 %v3364
    %v3366 = vpop.xlane.xlu0 %3365
    %v3367 = vsub.f32 %v3280, %v3363
    %v3368 = vsub.f32 %v3358, %v3366
    %v3369 = vmul.f32 %v3367, 1.442695
    %v3370 = vpow.pop %v3369
    %v3371 = vmul.f32 %v3368, 1.442695
    %v3372 = vpow.pop %v3371
    %v3373 = vsel %vm378, %v3370, 0.0
    %3374 = vadd.xlane.f32.xlu0 %v3373
    %v3375 = vpop.xlane.xlu0 %3374
    %v3376 = vsel %vm378, %v3372, 0.0
    %3377 = vadd.xlane.f32.xlu0 %v3376
    %v3378 = vpop.xlane.xlu0 %3377
    %v3379 = vrcp.pop %v3375
    %v3380 = vrcp.pop %v3378
    %v3381 = vmul.f32 %v3370, %v3379
    %v3382 = vmul.f32 %v3372, %v3380
    %3383 = vrot.lane.b32.xlu0 %v2205, 40
    %v3384 = vpop.permute.xlu0 %3383
    %v3387 = vsel %vm378, %v3381, 0
    %3389 = vmatprep.subr.mxu0 0.0
    %3390 = vmatpush1.msra.mxu0 %v3384
    %3391 = vmatprep.subr.mxu0 0.0
    %3392 = vmatpush1.msra.mxu0 0.0
    %3393 = vmatprep.subr.mxu0 0.0
    %3394 = vmatpush1.msra.mxu0 0.0
    %3395 = vmatprep.subr.mxu0 0.0
    %3396 = vmatpush1.msra.mxu0 0.0
    %3397 = vmatprep.subr.mxu0 0.0
    %3398 = vmatpush1.msra.mxu0 0.0
    %3399 = vmatprep.subr.mxu0 0.0
    %3400 = vmatpush1.msra.mxu0 0.0
    %3401 = vmatprep.subr.mxu0 0.0
    %3402 = vmatpush1.msra.mxu0 0.0
    %3403 = vmatprep.subr.mxu0 0.0
    %3404 = vmatpush1.msra.mxu0 0.0
    %3405 = vmatprep.subr.mxu0 0.0
    %3406 = vmatpush1.msra.mxu0 0.0
    %3407 = vmatprep.subr.mxu0 0.0
    %3408 = vmatpush1.msra.mxu0 0.0
    %3409 = vmatprep.subr.mxu0 0.0
    %3410 = vmatpush1.msra.mxu0 0.0
    %3411 = vmatprep.subr.mxu0 0.0
    %3412 = vmatpush1.msra.mxu0 0.0
    %3413 = vmatprep.subr.mxu0 0.0
    %3414 = vmatpush1.msra.mxu0 0.0
    %3415 = vmatprep.subr.mxu0 0.0
    %3416 = vmatpush1.msra.mxu0 0.0
    %3417 = vmatprep.subr.mxu0 0.0
    %3418 = vmatpush1.msra.mxu0 0.0
    %3419 = vmatprep.subr.mxu0 0.0
    %3420 = vmatpush1.msra.mxu0 0.0
    %3421 = vmatprep.subr.mxu0 0.0
    %3422 = vmatpush1.msra.mxu0 0.0
    %3423 = vmatprep.subr.mxu0 0.0
    %3424 = vmatpush1.msra.mxu0 0.0
    %3425 = vmatprep.subr.mxu0 0.0
    %3426 = vmatpush1.msra.mxu0 0.0
    %3427 = vmatprep.subr.mxu0 0.0
    %3428 = vmatpush1.msra.mxu0 0.0
    %3429 = vmatprep.subr.mxu0 0.0
    %3430 = vmatpush1.msra.mxu0 0.0
    %3431 = vmatprep.subr.mxu0 0.0
    %3432 = vmatpush1.msra.mxu0 0.0
    %3433 = vmatprep.subr.mxu0 0.0
    %3434 = vmatpush1.msra.mxu0 0.0
    %3435 = vmatprep.subr.mxu0 0.0
    %3436 = vmatpush1.msra.mxu0 0.0
    %3437 = vmatprep.subr.mxu0 0.0
    %3438 = vmatpush1.msra.mxu0 0.0
    %3439 = vmatprep.subr.mxu0 0.0
    %3440 = vmatpush1.msra.mxu0 0.0
    %3441 = vmatprep.subr.mxu0 0.0
    %3442 = vmatpush1.msra.mxu0 0.0
    %3443 = vmatprep.subr.mxu0 0.0
    %3444 = vmatpush1.msra.mxu0 0.0
    %3445 = vmatprep.subr.mxu0 0.0
    %3446 = vmatpush1.msra.mxu0 0.0
    %3447 = vmatprep.subr.mxu0 0.0
    %3448 = vmatpush1.msra.mxu0 0.0
    %3449 = vmatprep.subr.mxu0 0.0
    %3450 = vmatpush1.msra.mxu0 0.0
    %3451 = vmatprep.subr.mxu0 0.0
    %3452 = vmatpush1.msra.mxu0 0.0
    %3453 = vmatprep.mubr.f32.mxu0 0.0
    %3454 = vmatmul.mubr.f32.gmra.mrb[0].mxu0 %v3387
    %v3455 = vpop.f32.mrb[0].mxu0
    %v3456 = vadd.f32 0.0, %v3455
    %v3457 = vpop.f32.mrb[0].mxu0
    %3458 = vdwg.mxu0
    %3459 = vrot.lane.b32.xlu0 %v2210, 40
    %v3460 = vpop.permute.xlu0 %3459
    %v3463 = vsel %vm378, %v3382, 0
    %3465 = vmatprep.subr.mxu0 0.0
    %3466 = vmatpush1.msra.mxu0 %v3460
    %3467 = vmatprep.subr.mxu0 0.0
    %3468 = vmatpush1.msra.mxu0 0.0
    %3469 = vmatprep.subr.mxu0 0.0
    %3470 = vmatpush1.msra.mxu0 0.0
    %3471 = vmatprep.subr.mxu0 0.0
    %3472 = vmatpush1.msra.mxu0 0.0
    %3473 = vmatprep.subr.mxu0 0.0
    %3474 = vmatpush1.msra.mxu0 0.0
    %3475 = vmatprep.subr.mxu0 0.0
    %3476 = vmatpush1.msra.mxu0 0.0
    %3477 = vmatprep.subr.mxu0 0.0
    %3478 = vmatpush1.msra.mxu0 0.0
    %3479 = vmatprep.subr.mxu0 0.0
    %3480 = vmatpush1.msra.mxu0 0.0
    %3481 = vmatprep.subr.mxu0 0.0
    %3482 = vmatpush1.msra.mxu0 0.0
    %3483 = vmatprep.subr.mxu0 0.0
    %3484 = vmatpush1.msra.mxu0 0.0
    %3485 = vmatprep.subr.mxu0 0.0
    %3486 = vmatpush1.msra.mxu0 0.0
    %3487 = vmatprep.subr.mxu0 0.0
    %3488 = vmatpush1.msra.mxu0 0.0
    %3489 = vmatprep.subr.mxu0 0.0
    %3490 = vmatpush1.msra.mxu0 0.0
    %3491 = vmatprep.subr.mxu0 0.0
    %3492 = vmatpush1.msra.mxu0 0.0
    %3493 = vmatprep.subr.mxu0 0.0
    %3494 = vmatpush1.msra.mxu0 0.0
    %3495 = vmatprep.subr.mxu0 0.0
    %3496 = vmatpush1.msra.mxu0 0.0
    %3497 = vmatprep.subr.mxu0 0.0
    %3498 = vmatpush1.msra.mxu0 0.0
    %3499 = vmatprep.subr.mxu0 0.0
    %3500 = vmatpush1.msra.mxu0 0.0
    %3501 = vmatprep.subr.mxu0 0.0
    %3502 = vmatpush1.msra.mxu0 0.0
    %3503 = vmatprep.subr.mxu0 0.0
    %3504 = vmatpush1.msra.mxu0 0.0
    %3505 = vmatprep.subr.mxu0 0.0
    %3506 = vmatpush1.msra.mxu0 0.0
    %3507 = vmatprep.subr.mxu0 0.0
    %3508 = vmatpush1.msra.mxu0 0.0
    %3509 = vmatprep.subr.mxu0 0.0
    %3510 = vmatpush1.msra.mxu0 0.0
    %3511 = vmatprep.subr.mxu0 0.0
    %3512 = vmatpush1.msra.mxu0 0.0
    %3513 = vmatprep.subr.mxu0 0.0
    %3514 = vmatpush1.msra.mxu0 0.0
    %3515 = vmatprep.subr.mxu0 0.0
    %3516 = vmatpush1.msra.mxu0 0.0
    %3517 = vmatprep.subr.mxu0 0.0
    %3518 = vmatpush1.msra.mxu0 0.0
    %3519 = vmatprep.subr.mxu0 0.0
    %3520 = vmatpush1.msra.mxu0 0.0
    %3521 = vmatprep.subr.mxu0 0.0
    %3522 = vmatpush1.msra.mxu0 0.0
    %3523 = vmatprep.subr.mxu0 0.0
    %3524 = vmatpush1.msra.mxu0 0.0
    %3525 = vmatprep.subr.mxu0 0.0
    %3526 = vmatpush1.msra.mxu0 0.0
    %3527 = vmatprep.subr.mxu0 0.0
    %3528 = vmatpush1.msra.mxu0 0.0
    %3529 = vmatprep.mubr.f32.mxu0 0.0
    %3530 = vmatmul.mubr.f32.gmra.mrb[0].mxu0 %v3463
    %v3531 = vpop.f32.mrb[0].mxu0
    %v3532 = vadd.f32 0.0, %v3531
    %v3533 = vpop.f32.mrb[0].mxu0
    %3534 = vdwg.mxu0
    %3537 = vrot.lane.b32.xlu0 %v2796, 8
    %v3538 = vpop.permute.xlu0 %3537
    %3539 = vrot.lane.b32.xlu0 %v2872, 8
    %v3540 = vpop.permute.xlu0 %3539
    %3545 = vrot.lane.b32.xlu0 %v3126, 16
    %v3546 = vpop.permute.xlu0 %3545
    %3547 = vrot.lane.b32.xlu0 %v3202, 16
    %v3548 = vpop.permute.xlu0 %3547
    %3553 = vrot.lane.b32.xlu0 %v3456, 24
    %v3554 = vpop.permute.xlu0 %3553
    %3555 = vrot.lane.b32.xlu0 %v3532, 24
    %v3556 = vpop.permute.xlu0 %3555
    %v3559 = vsel %vm378, %v2466, %v3538
    %v3560 = vsel %vm378, %v2542, %v3540
    %v3561 = vsel %vm1722, %v3559, %v3546
    %v3562 = vsel %vm1722, %v3560, %v3548
    %v3563 = vsel %vm1725, %v3561, %v3554
    %v3564 = vsel %vm1725, %v3562, %v3556
    %s3565 = scalar_lea.vmem %s7, 32
    %v3566 = vld [vmem:[%s3565] sm:$0xff]
    %v3567 = vld [vmem:[%s3565 + $0x8] sm:$0xff]
    %v3568 = vld [vmem:[%s3565 + $0x10] sm:$0xff]
    %v3569 = vld [vmem:[%s3565 + $0x18] sm:$0xff]
    %s3570 = scalar_lea.vmem %s8, 1
    %v3571 = vld [vmem:[%s3570] sm:$0x1]
    %v3573 = vlaneseq
    %v3574 = vshrl.u32 %v3573, 7
    %v3575 = vsub.s32 0, %v3574
    %v3576 = vrot.slane %v3571, %v3575
    %v3579 = vsel %vm219, %v3563, 0
    %v3582 = vsel %vm219, %v3564, 0
    %3584 = vmatprep.subr.mxu0 0.0
    %3585 = vmatpush1.msra.mxu0 %v3566
    %3586 = vmatprep.subr.mxu0 0.0
    %3587 = vmatpush1.msra.mxu0 %v3567
    %3588 = vmatprep.subr.mxu0 0.0
    %3589 = vmatpush1.msra.mxu0 %v3568
    %3590 = vmatprep.subr.mxu0 0.0
    %3591 = vmatpush1.msra.mxu0 %v3569
    %3592 = vmatprep.subr.mxu0 0.0
    %3593 = vmatpush1.msra.mxu0 0.0
    %3594 = vmatprep.subr.mxu0 0.0
    %3595 = vmatpush1.msra.mxu0 0.0
    %3596 = vmatprep.subr.mxu0 0.0
    %3597 = vmatpush1.msra.mxu0 0.0
    %3598 = vmatprep.subr.mxu0 0.0
    %3599 = vmatpush1.msra.mxu0 0.0
    %3600 = vmatprep.subr.mxu0 0.0
    %3601 = vmatpush1.msra.mxu0 0.0
    %3602 = vmatprep.subr.mxu0 0.0
    %3603 = vmatpush1.msra.mxu0 0.0
    %3604 = vmatprep.subr.mxu0 0.0
    %3605 = vmatpush1.msra.mxu0 0.0
    %3606 = vmatprep.subr.mxu0 0.0
    %3607 = vmatpush1.msra.mxu0 0.0
    %3608 = vmatprep.subr.mxu0 0.0
    %3609 = vmatpush1.msra.mxu0 0.0
    %3610 = vmatprep.subr.mxu0 0.0
    %3611 = vmatpush1.msra.mxu0 0.0
    %3612 = vmatprep.subr.mxu0 0.0
    %3613 = vmatpush1.msra.mxu0 0.0
    %3614 = vmatprep.subr.mxu0 0.0
    %3615 = vmatpush1.msra.mxu0 0.0
    %3616 = vmatprep.subr.mxu0 0.0
    %3617 = vmatpush1.msra.mxu0 0.0
    %3618 = vmatprep.subr.mxu0 0.0
    %3619 = vmatpush1.msra.mxu0 0.0
    %3620 = vmatprep.subr.mxu0 0.0
    %3621 = vmatpush1.msra.mxu0 0.0
    %3622 = vmatprep.subr.mxu0 0.0
    %3623 = vmatpush1.msra.mxu0 0.0
    %3624 = vmatprep.subr.mxu0 0.0
    %3625 = vmatpush1.msra.mxu0 0.0
    %3626 = vmatprep.subr.mxu0 0.0
    %3627 = vmatpush1.msra.mxu0 0.0
    %3628 = vmatprep.subr.mxu0 0.0
    %3629 = vmatpush1.msra.mxu0 0.0
    %3630 = vmatprep.subr.mxu0 0.0
    %3631 = vmatpush1.msra.mxu0 0.0
    %3632 = vmatprep.subr.mxu0 0.0
    %3633 = vmatpush1.msra.mxu0 0.0
    %3634 = vmatprep.subr.mxu0 0.0
    %3635 = vmatpush1.msra.mxu0 0.0
    %3636 = vmatprep.subr.mxu0 0.0
    %3637 = vmatpush1.msra.mxu0 0.0
    %3638 = vmatprep.subr.mxu0 0.0
    %3639 = vmatpush1.msra.mxu0 0.0
    %3640 = vmatprep.subr.mxu0 0.0
    %3641 = vmatpush1.msra.mxu0 0.0
    %3642 = vmatprep.subr.mxu0 0.0
    %3643 = vmatpush1.msra.mxu0 0.0
    %3644 = vmatprep.subr.mxu0 0.0
    %3645 = vmatpush1.msra.mxu0 0.0
    %3646 = vmatprep.subr.mxu0 0.0
    %3647 = vmatpush1.msra.mxu0 0.0
    %3648 = vmatprep.mubr.f32.mxu0 0.0
    %3649 = vmatmul.mubr.f32.gmra.mrb[0].mxu0 %v3579
    %v3650 = vpop.f32.mrb[0].mxu0
    %v3651 = vadd.f32 %v3576, %v3650
    %v3652 = vpop.f32.mrb[0].mxu0
    %3653 = vmatprep.mubr.f32.mxu0 0.0
    %3654 = vmatmul.mubr.f32.gmra.mrb[0].mxu0 %v3582
    %v3655 = vpop.f32.mrb[0].mxu0
    %v3656 = vadd.f32 %v3576, %v3655
    %v3657 = vpop.f32.mrb[0].mxu0
    %3658 = vdwg.mxu0
    %v3659 = vadd.f32 %v3651, %v2117
    %v3660 = vadd.f32 %v3656, %v2118
    %s3661 = scalar_lea.vmem %s9, 1
    %v3662 = vld [vmem:[%s3661] sm:$0x1]
    %s3663 = scalar_lea.vmem %s10, 1
    %v3664 = vld [vmem:[%s3663] sm:$0x1]
    %v3665 = vsel %vm219, %v3659, 0.0
    %3666 = vadd.xlane.f32.xlu0 %v3665
    %v3667 = vpop.xlane.xlu0 %3666
    %v3668 = vsel %vm219, %v3660, 0.0
    %3669 = vadd.xlane.f32.xlu0 %v3668
    %v3670 = vpop.xlane.xlu0 %3669
    %v3671 = vmul.f32 %v3667, %v226
    %v3672 = vmul.f32 %v3670, %v226
    %v3673 = vsub.f32 %v3659, %v3671
    %v3674 = vsub.f32 %v3660, %v3672
    %v3675 = vmul.f32 %v3673, %v3673
    %v3676 = vmul.f32 %v3674, %v3674
    %v3677 = vsel %vm219, %v3675, 0.0
    %3678 = vadd.xlane.f32.xlu0 %v3677
    %v3679 = vpop.xlane.xlu0 %3678
    %v3680 = vsel %vm219, %v3676, 0.0
    %3681 = vadd.xlane.f32.xlu0 %v3680
    %v3682 = vpop.xlane.xlu0 %3681
    %v3683 = vmul.f32 %v3679, %v226
    %v3684 = vmul.f32 %v3682, %v226
    %v3685 = vadd.f32 %v3683, 1e-05
    %v3686 = vadd.f32 %v3684, 1e-05
    %v3687 = vrsqrt.pop %v3685
    %v3688 = vrsqrt.pop %v3686
    %v3689 = vmul.f32 %v3673, %v3687
    %v3690 = vmul.f32 %v3674, %v3688
    %v3692 = vlaneseq
    %v3693 = vshrl.u32 %v3692, 7
    %v3694 = vsub.s32 0, %v3693
    %v3695 = vrot.slane %v3662, %v3694
    %v3697 = vmul.f32 %v3689, %v3695
    %v3698 = vmul.f32 %v3690, %v3695
    %v3700 = vlaneseq
    %v3701 = vshrl.u32 %v3700, 7
    %v3702 = vsub.s32 0, %v3701
    %v3703 = vrot.slane %v3664, %v3702
    %v3705 = vadd.f32 %v3697, %v3703
    %v3706 = vadd.f32 %v3698, %v3703
    %s3707 = scalar_lea.vmem %s11, 32
    %v3708 = vld [vmem:[%s3707] sm:$0xff]
    %v3709 = vld [vmem:[%s3707 + $0x8] sm:$0xff]
    %v3710 = vld [vmem:[%s3707 + $0x10] sm:$0xff]
    %v3711 = vld [vmem:[%s3707 + $0x18] sm:$0xff]
    %s3712 = scalar_lea.vmem %s12, 1
    %v3713 = vld [vmem:[%s3712] sm:$0x1]
    %v3715 = vlaneseq
    %v3716 = vshrl.u32 %v3715, 7
    %v3717 = vsub.s32 0, %v3716
    %v3718 = vrot.slane %v3713, %v3717
    %v3721 = vsel %vm219, %v3705, 0
    %v3724 = vsel %vm219, %v3706, 0
    %3726 = vmatprep.subr.mxu0 0.0
    %3727 = vmatpush1.msra.mxu0 %v3708
    %3728 = vmatprep.subr.mxu0 0.0
    %3729 = vmatpush1.msra.mxu0 %v3709
    %3730 = vmatprep.subr.mxu0 0.0
    %3731 = vmatpush1.msra.mxu0 %v3710
    %3732 = vmatprep.subr.mxu0 0.0
    %3733 = vmatpush1.msra.mxu0 %v3711
    %3734 = vmatprep.subr.mxu0 0.0
    %3735 = vmatpush1.msra.mxu0 0.0
    %3736 = vmatprep.subr.mxu0 0.0
    %3737 = vmatpush1.msra.mxu0 0.0
    %3738 = vmatprep.subr.mxu0 0.0
    %3739 = vmatpush1.msra.mxu0 0.0
    %3740 = vmatprep.subr.mxu0 0.0
    %3741 = vmatpush1.msra.mxu0 0.0
    %3742 = vmatprep.subr.mxu0 0.0
    %3743 = vmatpush1.msra.mxu0 0.0
    %3744 = vmatprep.subr.mxu0 0.0
    %3745 = vmatpush1.msra.mxu0 0.0
    %3746 = vmatprep.subr.mxu0 0.0
    %3747 = vmatpush1.msra.mxu0 0.0
    %3748 = vmatprep.subr.mxu0 0.0
    %3749 = vmatpush1.msra.mxu0 0.0
    %3750 = vmatprep.subr.mxu0 0.0
    %3751 = vmatpush1.msra.mxu0 0.0
    %3752 = vmatprep.subr.mxu0 0.0
    %3753 = vmatpush1.msra.mxu0 0.0
    %3754 = vmatprep.subr.mxu0 0.0
    %3755 = vmatpush1.msra.mxu0 0.0
    %3756 = vmatprep.subr.mxu0 0.0
    %3757 = vmatpush1.msra.mxu0 0.0
    %3758 = vmatprep.subr.mxu0 0.0
    %3759 = vmatpush1.msra.mxu0 0.0
    %3760 = vmatprep.subr.mxu0 0.0
    %3761 = vmatpush1.msra.mxu0 0.0
    %3762 = vmatprep.subr.mxu0 0.0
    %3763 = vmatpush1.msra.mxu0 0.0
    %3764 = vmatprep.subr.mxu0 0.0
    %3765 = vmatpush1.msra.mxu0 0.0
    %3766 = vmatprep.subr.mxu0 0.0
    %3767 = vmatpush1.msra.mxu0 0.0
    %3768 = vmatprep.subr.mxu0 0.0
    %3769 = vmatpush1.msra.mxu0 0.0
    %3770 = vmatprep.subr.mxu0 0.0
    %3771 = vmatpush1.msra.mxu0 0.0
    %3772 = vmatprep.subr.mxu0 0.0
    %3773 = vmatpush1.msra.mxu0 0.0
    %3774 = vmatprep.subr.mxu0 0.0
    %3775 = vmatpush1.msra.mxu0 0.0
    %3776 = vmatprep.subr.mxu0 0.0
    %3777 = vmatpush1.msra.mxu0 0.0
    %3778 = vmatprep.subr.mxu0 0.0
    %3779 = vmatpush1.msra.mxu0 0.0
    %3780 = vmatprep.subr.mxu0 0.0
    %3781 = vmatpush1.msra.mxu0 0.0
    %3782 = vmatprep.subr.mxu0 0.0
    %3783 = vmatpush1.msra.mxu0 0.0
    %3784 = vmatprep.subr.mxu0 0.0
    %3785 = vmatpush1.msra.mxu0 0.0
    %3786 = vmatprep.subr.mxu0 0.0
    %3787 = vmatpush1.msra.mxu0 0.0
    %3788 = vmatprep.subr.mxu0 0.0
    %3789 = vmatpush1.msra.mxu0 0.0
    %3790 = vmatprep.mubr.f32.mxu0 0.0
    %3791 = vmatmul.mubr.f32.gmra.mrb[0].mxu0 %v3721
    %v3792 = vpop.f32.mrb[0].mxu0
    %v3793 = vadd.f32 %v3718, %v3792
    %v3794 = vpop.f32.mrb[0].mxu0
    %3795 = vmatprep.mubr.f32.mxu0 0.0
    %3796 = vmatmul.mubr.f32.gmra.mrb[0].mxu0 %v3724
    %v3797 = vpop.f32.mrb[0].mxu0
    %v3798 = vadd.f32 %v3718, %v3797
    %v3799 = vpop.f32.mrb[0].mxu0
    %3800 = vdwg.mxu0
    %v3801 = vmul.f32 %v3793, %v3793
    %v3802 = vmul.f32 %v3798, %v3798
    %v3803 = vmul.f32 %v3793, %v3801
    %v3804 = vmul.f32 %v3798, %v3802
    %v3805 = vmul.f32 %v3803, 0.044715
    %v3806 = vmul.f32 %v3804, 0.044715
    %v3807 = vadd.f32 %v3793, %v3805
    %v3808 = vadd.f32 %v3798, %v3806
    %v3809 = vmul.f32 %v3807, 0.7978846
    %v3810 = vmul.f32 %v3808, 0.7978846
    %v3811 = vtanh.pop %v3809
    %v3812 = vtanh.pop %v3810
    %v3813 = vadd.f32 %v3811, 1.0
    %v3814 = vadd.f32 %v3812, 1.0
    %v3815 = vmul.f32 %v3813, 0.5
    %v3816 = vmul.f32 %v3814, 0.5
    %v3817 = vmul.f32 %v3793, %v3815
    %v3818 = vmul.f32 %v3798, %v3816
    %s3819 = scalar_lea.vmem %s13, 64
    %v3820 = vld [vmem:[%s3819] sm:$0xff]
    %v3821 = vld [vmem:[%s3819 + $0x8] sm:$0xff]
    %v3822 = vld [vmem:[%s3819 + $0x10] sm:$0xff]
    %v3823 = vld [vmem:[%s3819 + $0x18] sm:$0xff]
    %v3824 = vld [vmem:[%s3819 + $0x20] sm:$0xff]
    %v3825 = vld [vmem:[%s3819 + $0x28] sm:$0xff]
    %v3826 = vld [vmem:[%s3819 + $0x30] sm:$0xff]
    %v3827 = vld [vmem:[%s3819 + $0x38] sm:$0xff]
    %s3828 = scalar_lea.vmem %s14, 1
    %v3829 = vld [vmem:[%s3828] sm:$0x1]
    %v3831 = vlaneseq
    %v3832 = vshrl.u32 %v3831, 7
    %v3833 = vsub.s32 0, %v3832
    %v3834 = vrot.slane %v3829, %v3833
    %v3837 = vsel %vm1991, %v3817, 0
    %v3840 = vsel %vm1991, %v3818, 0
    %3842 = vmatprep.subr.mxu0 0.0
    %3843 = vmatpush1.msra.mxu0 %v3820
    %3844 = vmatprep.subr.mxu0 0.0
    %3845 = vmatpush1.msra.mxu0 %v3821
    %3846 = vmatprep.subr.mxu0 0.0
    %3847 = vmatpush1.msra.mxu0 %v3822
    %3848 = vmatprep.subr.mxu0 0.0
    %3849 = vmatpush1.msra.mxu0 %v3823
    %3850 = vmatprep.subr.mxu0 0.0
    %3851 = vmatpush1.msra.mxu0 %v3824
    %3852 = vmatprep.subr.mxu0 0.0
    %3853 = vmatpush1.msra.mxu0 %v3825
    %3854 = vmatprep.subr.mxu0 0.0
    %3855 = vmatpush1.msra.mxu0 %v3826
    %3856 = vmatprep.subr.mxu0 0.0
    %3857 = vmatpush1.msra.mxu0 %v3827
    %3858 = vmatprep.subr.mxu0 0.0
    %3859 = vmatpush1.msra.mxu0 0.0
    %3860 = vmatprep.subr.mxu0 0.0
    %3861 = vmatpush1.msra.mxu0 0.0
    %3862 = vmatprep.subr.mxu0 0.0
    %3863 = vmatpush1.msra.mxu0 0.0
    %3864 = vmatprep.subr.mxu0 0.0
    %3865 = vmatpush1.msra.mxu0 0.0
    %3866 = vmatprep.subr.mxu0 0.0
    %3867 = vmatpush1.msra.mxu0 0.0
    %3868 = vmatprep.subr.mxu0 0.0
    %3869 = vmatpush1.msra.mxu0 0.0
    %3870 = vmatprep.subr.mxu0 0.0
    %3871 = vmatpush1.msra.mxu0 0.0
    %3872 = vmatprep.subr.mxu0 0.0
    %3873 = vmatpush1.msra.mxu0 0.0
    %3874 = vmatprep.subr.mxu0 0.0
    %3875 = vmatpush1.msra.mxu0 0.0
    %3876 = vmatprep.subr.mxu0 0.0
    %3877 = vmatpush1.msra.mxu0 0.0
    %3878 = vmatprep.subr.mxu0 0.0
    %3879 = vmatpush1.msra.mxu0 0.0
    %3880 = vmatprep.subr.mxu0 0.0
    %3881 = vmatpush1.msra.mxu0 0.0
    %3882 = vmatprep.subr.mxu0 0.0
    %3883 = vmatpush1.msra.mxu0 0.0
    %3884 = vmatprep.subr.mxu0 0.0
    %3885 = vmatpush1.msra.mxu0 0.0
    %3886 = vmatprep.subr.mxu0 0.0
    %3887 = vmatpush1.msra.mxu0 0.0
    %3888 = vmatprep.subr.mxu0 0.0
    %3889 = vmatpush1.msra.mxu0 0.0
    %3890 = vmatprep.subr.mxu0 0.0
    %3891 = vmatpush1.msra.mxu0 0.0
    %3892 = vmatprep.subr.mxu0 0.0
    %3893 = vmatpush1.msra.mxu0 0.0
    %3894 = vmatprep.subr.mxu0 0.0
    %3895 = vmatpush1.msra.mxu0 0.0
    %3896 = vmatprep.subr.mxu0 0.0
    %3897 = vmatpush1.msra.mxu0 0.0
    %3898 = vmatprep.subr.mxu0 0.0
    %3899 = vmatpush1.msra.mxu0 0.0
    %3900 = vmatprep.subr.mxu0 0.0
    %3901 = vmatpush1.msra.mxu0 0.0
    %3902 = vmatprep.subr.mxu0 0.0
    %3903 = vmatpush1.msra.mxu0 0.0
    %3904 = vmatprep.subr.mxu0 0.0
    %3905 = vmatpush1.msra.mxu0 0.0
    %3906 = vmatprep.mubr.f32.mxu0 0.0
    %3907 = vmatmul.mubr.f32.gmra.mrb[0].mxu0 %v3837
    %v3908 = vpop.f32.mrb[0].mxu0
    %v3909 = vadd.f32 %v3834, %v3908
    %v3910 = vpop.f32.mrb[0].mxu0
    %3911 = vmatprep.mubr.f32.mxu0 0.0
    %3912 = vmatmul.mubr.f32.gmra.mrb[0].mxu0 %v3840
    %v3913 = vpop.f32.mrb[0].mxu0
    %v3914 = vadd.f32 %v3834, %v3913
    %v3915 = vpop.f32.mrb[0].mxu0
    %3916 = vdwg.mxu0
    %v3917 = vadd.f32 %v3909, %v3705
    %v3918 = vadd.f32 %v3914, %v3706
    %s3919 = scalar_lea.vmem %s15, 1
    %v3920 = vld [vmem:[%s3919] sm:$0x1]
    %s3921 = scalar_lea.vmem %s16, 1
    %v3922 = vld [vmem:[%s3921] sm:$0x1]
    %v3923 = vsel %vm219, %v3917, 0.0
    %3924 = vadd.xlane.f32.xlu0 %v3923
    %v3925 = vpop.xlane.xlu0 %3924
    %v3926 = vsel %vm219, %v3918, 0.0
    %3927 = vadd.xlane.f32.xlu0 %v3926
    %v3928 = vpop.xlane.xlu0 %3927
    %v3929 = vmul.f32 %v3925, %v226
    %v3930 = vmul.f32 %v3928, %v226
    %v3931 = vsub.f32 %v3917, %v3929
    %v3932 = vsub.f32 %v3918, %v3930
    %v3933 = vmul.f32 %v3931, %v3931
    %v3934 = vmul.f32 %v3932, %v3932
    %v3935 = vsel %vm219, %v3933, 0.0
    %3936 = vadd.xlane.f32.xlu0 %v3935
    %v3937 = vpop.xlane.xlu0 %3936
    %v3938 = vsel %vm219, %v3934, 0.0
    %3939 = vadd.xlane.f32.xlu0 %v3938
    %v3940 = vpop.xlane.xlu0 %3939
    %v3941 = vmul.f32 %v3937, %v226
    %v3942 = vmul.f32 %v3940, %v226
    %v3943 = vadd.f32 %v3941, 1e-05
    %v3944 = vadd.f32 %v3942, 1e-05
    %v3945 = vrsqrt.pop %v3943
    %v3946 = vrsqrt.pop %v3944
    %v3947 = vmul.f32 %v3931, %v3945
    %v3948 = vmul.f32 %v3932, %v3946
    %v3950 = vlaneseq
    %v3951 = vshrl.u32 %v3950, 7
    %v3952 = vsub.s32 0, %v3951
    %v3953 = vrot.slane %v3920, %v3952
    %v3955 = vmul.f32 %v3947, %v3953
    %v3956 = vmul.f32 %v3948, %v3953
    %v3958 = vlaneseq
    %v3959 = vshrl.u32 %v3958, 7
    %v3960 = vsub.s32 0, %v3959
    %v3961 = vrot.slane %v3922, %v3960
    %v3963 = vadd.f32 %v3955, %v3961
    %v3964 = vadd.f32 %v3956, %v3961
    %v3965 = vld [vmem:[%s17] sm:$0xff]
    %v3966 = vld [vmem:[%s17 + $0x8] sm:$0xff]
    %v3967 = vld [vmem:[%s17 + $0x10] sm:$0xff]
    %v3968 = vld [vmem:[%s17 + $0x18] sm:$0xff]
    %v3969 = vld [vmem:[%s18] sm:$0x1]
    %v3972 = vrot.slane %v3964, 7
    %vm3973 = vcmask 1041409
    %v3974 = vsel %vm3973, %v3972, %v3963
    %v3976 = vcombine.low %v3969, %v3969
    %v3978 = vunpack.c.l.s4 1966171168
    %v3979 = vunpack.c.0.s8 %v3978
    %v3980 = vlaneseq
    %v3981 = vshrl.u32 %v3980, 7
    %v3982 = vsub.s32 %v3979, %v3981
    %v3983 = vrot.slane %v3976, %v3982
    %v3985 = vunpack.c.l.s4 1966171168
    %v3986 = vunpack.c.0.s8 %v3985
    %v3987 = vlaneseq
    %v3988 = vshrl.u32 %v3987, 7
    %v3989 = vsub.s32 %v3986, %v3988
    %v3990 = vrot.slane %v3983, %v3989
    %v3992 = vsel %vm219, %v3974, 0
    %3994 = vmatprep.subr.mxu0 0.0
    %3995 = vmatpush1.msra.mxu0 %v3965
    %3996 = vmatprep.subr.mxu0 0.0
    %3997 = vmatpush1.msra.mxu0 %v3966
    %3998 = vmatprep.subr.mxu0 0.0
    %3999 = vmatpush1.msra.mxu0 %v3967
    %4000 = vmatprep.subr.mxu0 0.0
    %4001 = vmatpush1.msra.mxu0 %v3968
    %4002 = vmatprep.subr.mxu0 0.0
    %4003 = vmatpush1.msra.mxu0 0.0
    %4004 = vmatprep.subr.mxu0 0.0
    %4005 = vmatpush1.msra.mxu0 0.0
    %4006 = vmatprep.subr.mxu0 0.0
    %4007 = vmatpush1.msra.mxu0 0.0
    %4008 = vmatprep.subr.mxu0 0.0
    %4009 = vmatpush1.msra.mxu0 0.0
    %4010 = vmatprep.subr.mxu0 0.0
    %4011 = vmatpush1.msra.mxu0 0.0
    %4012 = vmatprep.subr.mxu0 0.0
    %4013 = vmatpush1.msra.mxu0 0.0
    %4014 = vmatprep.subr.mxu0 0.0
    %4015 = vmatpush1.msra.mxu0 0.0
    %4016 = vmatprep.subr.mxu0 0.0
    %4017 = vmatpush1.msra.mxu0 0.0
    %4018 = vmatprep.subr.mxu0 0.0
    %4019 = vmatpush1.msra.mxu0 0.0
    %4020 = vmatprep.subr.mxu0 0.0
    %4021 = vmatpush1.msra.mxu0 0.0
    %4022 = vmatprep.subr.mxu0 0.0
    %4023 = vmatpush1.msra.mxu0 0.0
    %4024 = vmatprep.subr.mxu0 0.0
    %4025 = vmatpush1.msra.mxu0 0.0
    %4026 = vmatprep.subr.mxu0 0.0
    %4027 = vmatpush1.msra.mxu0 0.0
    %4028 = vmatprep.subr.mxu0 0.0
    %4029 = vmatpush1.msra.mxu0 0.0
    %4030 = vmatprep.subr.mxu0 0.0
    %4031 = vmatpush1.msra.mxu0 0.0
    %4032 = vmatprep.subr.mxu0 0.0
    %4033 = vmatpush1.msra.mxu0 0.0
    %4034 = vmatprep.subr.mxu0 0.0
    %4035 = vmatpush1.msra.mxu0 0.0
    %4036 = vmatprep.subr.mxu0 0.0
    %4037 = vmatpush1.msra.mxu0 0.0
    %4038 = vmatprep.subr.mxu0 0.0
    %4039 = vmatpush1.msra.mxu0 0.0
    %4040 = vmatprep.subr.mxu0 0.0
    %4041 = vmatpush1.msra.mxu0 0.0
    %4042 = vmatprep.subr.mxu0 0.0
    %4043 = vmatpush1.msra.mxu0 0.0
    %4044 = vmatprep.subr.mxu0 0.0
    %4045 = vmatpush1.msra.mxu0 0.0
    %4046 = vmatprep.subr.mxu0 0.0
    %4047 = vmatpush1.msra.mxu0 0.0
    %4048 = vmatprep.subr.mxu0 0.0
    %4049 = vmatpush1.msra.mxu0 0.0
    %4050 = vmatprep.subr.mxu0 0.0
    %4051 = vmatpush1.msra.mxu0 0.0
    %4052 = vmatprep.subr.mxu0 0.0
    %4053 = vmatpush1.msra.mxu0 0.0
    %4054 = vmatprep.subr.mxu0 0.0
    %4055 = vmatpush1.msra.mxu0 0.0
    %4056 = vmatprep.subr.mxu0 0.0
    %4057 = vmatpush1.msra.mxu0 0.0
    %4058 = vmatprep.mubr.f32.mxu0 0.0
    %4059 = vmatmul.mubr.f32.gmra.mrb[0].mxu0 %v3992
    %v4060 = vpop.f32.mrb[0].mxu0
    %v4061 = vadd.f32 %v3990, %v4060
    %v4062 = vpop.f32.mrb[0].mxu0
    %4063 = vdwg.mxu0
    %v4066 = vunpack.c.l.s4 1966171168
    %v4067 = vunpack.c.0.s8 %v4066
    %v4068 = vlaneseq
    %v4069 = vshrl.u32 %v4068, 7
    %v4070 = vsub.s32 %v4067, %v4069
    %v4071 = vrot.slane %v4061, %v4070
    %v4072 = vcombine.high %v4071, %v4071
    %v4074 = vunpack.c.l.s4 1966171168
    %v4075 = vunpack.c.0.s8 %v4074
    %v4076 = vlaneseq
    %v4077 = vshrl.u32 %v4076, 7
    %v4078 = vsub.s32 %v4075, %v4077
    %v4079 = vrot.slane %v4071, %v4078
    %v4081 = vunpack.c.l.s4 1966171168
    %v4082 = vunpack.c.0.s8 %v4081
    %v4083 = vlaneseq
    %v4084 = vshrl.u32 %v4083, 7
    %v4085 = vsub.s32 %v4082, %v4084
    %v4086 = vrot.slane %v4072, %v4085
    %v4089 = vtanh.pop %v4079
    %v4090 = vtanh.pop %v4086
    %vm4091 = vcmask 253952
    %4092 = vst.msk [vmem:[#allocation2] sm:$0x1] %vm4091, %v4089
    %4093 = vst.msk [vmem:[#allocation2 + $0x1] sm:$0x1] %vm4091, %v4090
    // Predicated region
    $region78: #{tpu_custom_call.1} parent=1 // pred_check
      _
    $region79: #{tpu_custom_call.1} parent=1 // pred_check_branch
      %4095 = sbr.rel (0) target = $region81
    $region80: #{tpu_custom_call.1} parent=1 // pred_region
      %s4097 = ssub.s32 32, 32
      %4098 = vsyncadd [#allocation3], %s4097
      %s4099 = sshll.u32 [#allocation2], 4
      %s4100 = int_to_ptr.vmem [resolvable:$true] %s4099
      %4105 = dma.vmem_to_hbm [thread:$0]  %s4100, 32, %s19, [#allocation3], 16, 16, 1
    $region81: #{tpu_custom_call.1} parent=1 // pred_fallthru
      _
    // Predicated region
    $region82: #{tpu_custom_call.1} parent=1 // pred_check
      _
    $region83: #{tpu_custom_call.1} parent=1 // pred_check_branch
      %4107 = sbr.rel (0) target = $region85
    $region84: #{tpu_custom_call.1} parent=1 // pred_region
      %4108 = dma.done [#allocation3], 32
    $region85: #{tpu_custom_call.1} parent=1 // pred_fallthru
      _
    %4109 = vsyncpa [#allocation3], 1

</llo_original>
